<compile_context>
chip_gen: v7x
topology: tpu7x:2x2x1
jax: 0.10.0
libtpu: 0.0.40
codegen_flags: <defaults>
</compile_context>

<pallas_src>
import math

import jax
import jax.numpy as jnp
from jax import lax
from jax.experimental import pallas as pl
from jax.experimental.pallas import tpu as pltpu

# ---------------- small ViT config (consistent with the forward pass) ----------------
B = 2            # batch
C = 3            # image channels (ViT expects RGB)
IMG = 16         # spatial size after feature extraction (stand-in for 224)
PATCH = 4        # patch size (stand-in for 16)
D = 32           # hidden size
NH = 2           # attention heads
DH = D // NH     # head dim
MLP = 64         # intermediate size
LAYERS = 2       # encoder layers
NUM_CLASSES = 4  # config.num_classes
LN_EPS = 1e-12   # HF ViT layer_norm_eps
N_PATCH = (IMG // PATCH) ** 2
SEQ = N_PATCH + 1            # +1 for CLS token
CPP = C * PATCH * PATCH      # flattened patch length
ATTN_SCALE = 1.0 / math.sqrt(DH)


# ---------------- in-kernel helpers (all f32 elementwise, bf16 MXU) ----------------
def _layernorm(x, g, b):
    mu = jnp.mean(x, axis=-1, keepdims=True)
    xc = x - mu
    var = jnp.mean(xc * xc, axis=-1, keepdims=True)
    return xc * lax.rsqrt(var + LN_EPS) * g + b


def _mm(a, b):
    """bf16 MXU matmul with f32 accumulation."""
    return jnp.dot(a.astype(jnp.bfloat16), b.astype(jnp.bfloat16),
                   preferred_element_type=jnp.float32)


# ---------------- the fused ViT kernel (one grid step == one image) ----------------
def _vit_kernel(patch_ref, pw_ref, add_ref,
                ln1g_ref, ln1b_ref, wqkv_ref, bqkv_ref, wo_ref, bo_ref,
                ln2g_ref, ln2b_ref, w1_ref, b1_ref, w2_ref, b2_ref,
                lnfg_ref, lnfb_ref, cw_ref, cb_ref, out_ref):
    # Patch embedding. Row 0 of the patch block is zeros (the CLS slot); the
    # (x - 0.5)/0.5 feature normalization and conv bias are folded into pw_ref /
    # add_ref, and add_ref also carries the CLS token + position embeddings.
    h = _mm(patch_ref[0], pw_ref[...]) + add_ref[...]            # (SEQ, D) f32

    for l in range(LAYERS):                                      # weights resident in VMEM
        # ---- pre-LN multi-head self-attention ----
        x1 = _layernorm(h, ln1g_ref[l], ln1b_ref[l])
        qkv = _mm(x1, wqkv_ref[l]) + bqkv_ref[l]                 # fused QKV: (SEQ, 3D)
        ctx_heads = []
        for hh in range(NH):
            q = qkv[:, hh * DH:(hh + 1) * DH]                    # (SEQ, DH)
            k = qkv[:, D + hh * DH:D + (hh + 1) * DH]
            v = qkv[:, 2 * D + hh * DH:2 * D + (hh + 1) * DH]
            s = lax.dot_general(q.astype(jnp.bfloat16), k.astype(jnp.bfloat16),
                                (((1,), (1,)), ((), ())),
                                preferred_element_type=jnp.float32) * ATTN_SCALE
            m = jnp.max(s, axis=-1, keepdims=True)
            e = jnp.exp(s - m)
            p = e * pl.reciprocal(jnp.sum(e, axis=-1, keepdims=True), approx=True)
            ctx_heads.append(_mm(p, v))                          # (SEQ, DH)
        ctx = jnp.concatenate(ctx_heads, axis=-1)                # merge heads: (SEQ, D)
        h = h + _mm(ctx, wo_ref[l]) + bo_ref[l]                  # residual add in-kernel

        # ---- pre-LN MLP block (GELU fused) ----
        x2 = _layernorm(h, ln2g_ref[l], ln2b_ref[l])
        # TODO(synk): HF ViT uses erf-GELU; tanh-approx GELU used here (numerically close).
        mid = jax.nn.gelu(_mm(x2, w1_ref[l]) + b1_ref[l], approximate=True)
        h = h + _mm(mid, w2_ref[l]) + b2_ref[l]

    # Final LN on the CLS row only (LN is row-wise), then classifier.
    # nn.Dropout(0.1) -> identity at inference.
    cls_row = _layernorm(h[0:1, :], lnfg_ref[...], lnfb_ref[...])   # (1, D)
    out_ref[0] = _mm(cls_row, cw_ref[...]) + cb_ref[...]            # (1, NUM_CLASSES)


# ---------------- parameters ----------------
def init_params(key):
    keys = iter(jax.random.split(key, 128))

    def nrm(shape, scale=0.02):
        return (scale * jax.random.normal(next(keys), shape)).astype(jnp.float32)

    params = {
        "patch_w": nrm((D, C, PATCH, PATCH)),            # conv(kernel=stride=PATCH)
        "patch_b": jnp.zeros((D,), jnp.float32),
        "cls": nrm((1, 1, D)),
        "pos": nrm((1, SEQ, D)),
        "ln_f_g": jnp.ones((D,), jnp.float32),
        "ln_f_b": jnp.zeros((D,), jnp.float32),
        "cls_w": nrm((D, NUM_CLASSES)),                  # self.classifier
        "cls_b": jnp.zeros((NUM_CLASSES,), jnp.float32),
        "layers": [],
    }
    for _ in range(LAYERS):
        params["layers"].append({
            "ln1_g": jnp.ones((D,), jnp.float32), "ln1_b": jnp.zeros((D,), jnp.float32),
            "wq": nrm((D, D)), "bq": jnp.zeros((D,), jnp.float32),
            "wk": nrm((D, D)), "bk": jnp.zeros((D,), jnp.float32),
            "wv": nrm((D, D)), "bv": jnp.zeros((D,), jnp.float32),
            "wo": nrm((D, D)), "bo": jnp.zeros((D,), jnp.float32),
            "ln2_g": jnp.ones((D,), jnp.float32), "ln2_b": jnp.zeros((D,), jnp.float32),
            "w1": nrm((D, MLP)), "b1": jnp.zeros((MLP,), jnp.float32),
            "w2": nrm((MLP, D)), "b2": jnp.zeros((D,), jnp.float32),
        })
    return params


def fuse_params(params):
    """One-time restructuring for the fused kernel: stack per-layer weights along a
    leading layer axis, concatenate Q/K/V into one (D, 3D) projection, and fold the
    (x-0.5)/0.5 normalization + patch bias + CLS token + position embedding into the
    patch-embed weight and a single additive (SEQ, D) tensor."""
    def stack(name):
        return jnp.stack([lp[name] for lp in params["layers"]])

    pw = params["patch_w"].reshape(D, CPP).T                 # (CPP, D): conv == matmul
    pw_fold = 2.0 * pw                                       # (x - 0.5)/0.5 == 2x - 1
    b_fold = params["patch_b"] - jnp.sum(pw, axis=0)         # absorbs the "- 1"
    pos = params["pos"][0]                                   # (SEQ, D)
    addend = jnp.concatenate(
        [params["cls"][0] + pos[0:1],                        # row 0: CLS + pos
         b_fold[None, :] + pos[1:]], axis=0)                 # rows 1..: bias + pos

    return {
        "patch_w": pw_fold,                                  # (CPP, D)
        "addend": addend,                                    # (SEQ, D)
        "ln1_g": stack("ln1_g")[:, None, :], "ln1_b": stack("ln1_b")[:, None, :],
        "wqkv": jnp.concatenate([stack("wq"), stack("wk"), stack("wv")], axis=-1),
        "bqkv": jnp.concatenate([stack("bq"), stack("bk"), stack("bv")], axis=-1)[:, None, :],
        "wo": stack("wo"), "bo": stack("bo")[:, None, :],
        "ln2_g": stack("ln2_g")[:, None, :], "ln2_b": stack("ln2_b")[:, None, :],
        "w1": stack("w1"), "b1": stack("b1")[:, None, :],
        "w2": stack("w2"), "b2": stack("b2")[:, None, :],
        "ln_f_g": params["ln_f_g"][None, :], "ln_f_b": params["ln_f_b"][None, :],
        "cls_w": params["cls_w"], "cls_b": params["cls_b"][None, :],
    }


# ---------------- forward pass ----------------
def _full_spec(arr):
    zeros = (0,) * arr.ndim
    return pl.BlockSpec(arr.shape, lambda b: zeros)          # whole array, fetched once


def vit_forward(fp, x_nchw):
    Bz, Cc, H, W = x_nchw.shape
    gh, gw = H // PATCH, W // PATCH

    # feature_extract(): the (x-0.5)/0.5 normalization is folded into the kernel weights.
    # TODO(synk): ViTFeatureExtractor's PIL bilinear resize has no Pallas equivalent;
    # the input is assumed to already be at model resolution.
    # Patch extraction is pure layout work (stays in XLA); prepend a zero row that
    # becomes the CLS slot inside the kernel.
    patches = x_nchw.reshape(Bz, Cc, gh, PATCH, gw, PATCH)
    patches = patches.transpose(0, 2, 4, 1, 3, 5).reshape(Bz, gh * gw, Cc * PATCH * PATCH)
    patches = jnp.pad(patches, ((0, 0), (1, 0), (0, 0)))     # (B, SEQ, CPP)

    weight_order = ["patch_w", "addend",
                    "ln1_g", "ln1_b", "wqkv", "bqkv", "wo", "bo",
                    "ln2_g", "ln2_b", "w1", "b1", "w2", "b2",
                    "ln_f_g", "ln_f_b", "cls_w", "cls_b"]
    weights = [fp[name] for name in weight_order]

    logits3 = pl.pallas_call(
        _vit_kernel,
        out_shape=jax.ShapeDtypeStruct((Bz, 1, NUM_CLASSES), jnp.float32),
        grid=(Bz,),
        in_specs=[pl.BlockSpec((1, SEQ, CPP), lambda b: (b, 0, 0))]
                 + [_full_spec(w) for w in weights],
        out_specs=pl.BlockSpec((1, 1, NUM_CLASSES), lambda b: (b, 0, 0)),
        compiler_params=pltpu.CompilerParams(
            dimension_semantics=("parallel",)),              # v7x: batch across both TCs
    )(patches, *weights)
    return logits3[:, 0, :]


if __name__ == "__main__":
    key = jax.random.PRNGKey(0)
    pkey, xkey = jax.random.split(key)
    params = init_params(pkey)
    fused = fuse_params(params)                              # one-time, outside jit
    x = jax.random.uniform(xkey, (B, C, IMG, IMG), dtype=jnp.float32)  # images in [0, 1]

    logits = jax.jit(vit_forward)(fused, x)
    jax.block_until_ready(logits)
    assert logits.shape == (B, NUM_CLASSES) and logits.dtype == jnp.float32
    print("KERNEL_OK")
</pallas_src>

<mosaic_0001>
module attributes {stable_mosaic.version = 11 : i64} {
  func.func @_vit_kernel(%arg0: i32, %arg1: memref<1x17x48xf32, #tpu.memory_space<vmem>>, %arg2: memref<48x32xf32, #tpu.memory_space<vmem>>, %arg3: memref<17x32xf32, #tpu.memory_space<vmem>>, %arg4: memref<2x1x32xf32, #tpu.memory_space<vmem>>, %arg5: memref<2x1x32xf32, #tpu.memory_space<vmem>>, %arg6: memref<2x32x96xf32, #tpu.memory_space<vmem>>, %arg7: memref<2x1x96xf32, #tpu.memory_space<vmem>>, %arg8: memref<2x32x32xf32, #tpu.memory_space<vmem>>, %arg9: memref<2x1x32xf32, #tpu.memory_space<vmem>>, %arg10: memref<2x1x32xf32, #tpu.memory_space<vmem>>, %arg11: memref<2x1x32xf32, #tpu.memory_space<vmem>>, %arg12: memref<2x32x64xf32, #tpu.memory_space<vmem>>, %arg13: memref<2x1x64xf32, #tpu.memory_space<vmem>>, %arg14: memref<2x64x32xf32, #tpu.memory_space<vmem>>, %arg15: memref<2x1x32xf32, #tpu.memory_space<vmem>>, %arg16: memref<1x32xf32, #tpu.memory_space<vmem>>, %arg17: memref<1x32xf32, #tpu.memory_space<vmem>>, %arg18: memref<32x4xf32, #tpu.memory_space<vmem>>, %arg19: memref<1x4xf32, #tpu.memory_space<vmem>>, %arg20: memref<1x1x4xf32, #tpu.memory_space<vmem>>) attributes {dimension_semantics = [#tpu.dimension_semantics<parallel>], iteration_bounds = array<i64: 2>, scalar_prefetch = 0 : i64, scratch_operands = 0 : i64, tpu.core_type = #tpu.core_type<tc>, window_params = [{transform_indices = @transform_0, window_bounds = array<i64: 1, 17, 48>}, {pipeline_mode = #tpu.pipeline_mode<synchronous>, transform_indices = @transform_1, window_bounds = array<i64: 48, 32>}, {pipeline_mode = #tpu.pipeline_mode<synchronous>, transform_indices = @transform_2, window_bounds = array<i64: 17, 32>}, {pipeline_mode = #tpu.pipeline_mode<synchronous>, transform_indices = @transform_3, window_bounds = array<i64: 2, 1, 32>}, {pipeline_mode = #tpu.pipeline_mode<synchronous>, transform_indices = @transform_4, window_bounds = array<i64: 2, 1, 32>}, {pipeline_mode = #tpu.pipeline_mode<synchronous>, transform_indices = @transform_5, window_bounds = array<i64: 2, 32, 96>}, {pipeline_mode = #tpu.pipeline_mode<synchronous>, transform_indices = @transform_6, window_bounds = array<i64: 2, 1, 96>}, {pipeline_mode = #tpu.pipeline_mode<synchronous>, transform_indices = @transform_7, window_bounds = array<i64: 2, 32, 32>}, {pipeline_mode = #tpu.pipeline_mode<synchronous>, transform_indices = @transform_8, window_bounds = array<i64: 2, 1, 32>}, {pipeline_mode = #tpu.pipeline_mode<synchronous>, transform_indices = @transform_9, window_bounds = array<i64: 2, 1, 32>}, {pipeline_mode = #tpu.pipeline_mode<synchronous>, transform_indices = @transform_10, window_bounds = array<i64: 2, 1, 32>}, {pipeline_mode = #tpu.pipeline_mode<synchronous>, transform_indices = @transform_11, window_bounds = array<i64: 2, 32, 64>}, {pipeline_mode = #tpu.pipeline_mode<synchronous>, transform_indices = @transform_12, window_bounds = array<i64: 2, 1, 64>}, {pipeline_mode = #tpu.pipeline_mode<synchronous>, transform_indices = @transform_13, window_bounds = array<i64: 2, 64, 32>}, {pipeline_mode = #tpu.pipeline_mode<synchronous>, transform_indices = @transform_14, window_bounds = array<i64: 2, 1, 32>}, {pipeline_mode = #tpu.pipeline_mode<synchronous>, transform_indices = @transform_15, window_bounds = array<i64: 1, 32>}, {pipeline_mode = #tpu.pipeline_mode<synchronous>, transform_indices = @transform_16, window_bounds = array<i64: 1, 32>}, {pipeline_mode = #tpu.pipeline_mode<synchronous>, transform_indices = @transform_17, window_bounds = array<i64: 32, 4>}, {pipeline_mode = #tpu.pipeline_mode<synchronous>, transform_indices = @transform_18, window_bounds = array<i64: 1, 4>}, {transform_indices = @transform_19, window_bounds = array<i64: 1, 1, 4>}]} {
    %c0 = arith.constant 0 : index
    %c0_0 = arith.constant 0 : index
    %c0_1 = arith.constant 0 : index
    %0 = vector.load %arg1[%c0, %c0_0, %c0_1] : memref<1x17x48xf32, #tpu.memory_space<vmem>>, vector<1x17x48xf32>
    %1 = vector.shape_cast %0 : vector<1x17x48xf32> to vector<17x48xf32>
    %c0_2 = arith.constant 0 : index
    %c0_3 = arith.constant 0 : index
    %2 = vector.load %arg2[%c0_2, %c0_3] : memref<48x32xf32, #tpu.memory_space<vmem>>, vector<48x32xf32>
    %3 = arith.truncf %1 : vector<17x48xf32> to vector<17x48xbf16>
    %4 = arith.truncf %2 : vector<48x32xf32> to vector<48x32xbf16>
    %cst = arith.constant dense<0.000000e+00> : vector<17x32xf32>
    %5 = tpu.matmul %3, %4, %cst {dimension_numbers = #tpu.dot_dimension_numbers<[1], [0], [0], [1], [0, 0, 1, 1], [], []>} : vector<17x48xbf16>, vector<48x32xbf16>, vector<17x32xf32> -> vector<17x32xf32>
    %c0_4 = arith.constant 0 : index
    %c0_5 = arith.constant 0 : index
    %6 = vector.load %arg3[%c0_4, %c0_5] : memref<17x32xf32, #tpu.memory_space<vmem>>, vector<17x32xf32>
    %7 = arith.addf %5, %6 : vector<17x32xf32>
    %c0_6 = arith.constant 0 : index
    %c0_7 = arith.constant 0 : index
    %c0_8 = arith.constant 0 : index
    %8 = vector.load %arg4[%c0_6, %c0_7, %c0_8] : memref<2x1x32xf32, #tpu.memory_space<vmem>>, vector<1x1x32xf32>
    %9 = vector.shape_cast %8 : vector<1x1x32xf32> to vector<1x32xf32>
    %c0_9 = arith.constant 0 : index
    %c0_10 = arith.constant 0 : index
    %c0_11 = arith.constant 0 : index
    %10 = vector.load %arg5[%c0_9, %c0_10, %c0_11] : memref<2x1x32xf32, #tpu.memory_space<vmem>>, vector<1x1x32xf32>
    %11 = vector.shape_cast %10 : vector<1x1x32xf32> to vector<1x32xf32>
    %cst_12 = arith.constant dense<0.000000e+00> : vector<17xf32>
    %12 = vector.multi_reduction <add>, %7, %cst_12 [1] : vector<17x32xf32> to vector<17xf32>
    %13 = vector.shape_cast %12 : vector<17xf32> to vector<17x1xf32>
    %cst_13 = arith.constant 3.200000e+01 : f32
    %14 = vector.broadcast %cst_13 : f32 to vector<17x1xf32>
    %15 = arith.divf %13, %14 : vector<17x1xf32>
    %16 = vector.broadcast %15 : vector<17x1xf32> to vector<17x32xf32>
    %17 = arith.subf %7, %16 : vector<17x32xf32>
    %18 = arith.mulf %17, %17 : vector<17x32xf32>
    %cst_14 = arith.constant dense<0.000000e+00> : vector<17xf32>
    %19 = vector.multi_reduction <add>, %18, %cst_14 [1] : vector<17x32xf32> to vector<17xf32>
    %20 = vector.shape_cast %19 : vector<17xf32> to vector<17x1xf32>
    %cst_15 = arith.constant 3.200000e+01 : f32
    %21 = vector.broadcast %cst_15 : f32 to vector<17x1xf32>
    %22 = arith.divf %20, %21 : vector<17x1xf32>
    %cst_16 = arith.constant 9.99999996E-13 : f32
    %23 = vector.broadcast %cst_16 : f32 to vector<17x1xf32>
    %24 = arith.addf %22, %23 : vector<17x1xf32>
    %25 = math.rsqrt %24 : vector<17x1xf32>
    %26 = vector.broadcast %25 : vector<17x1xf32> to vector<17x32xf32>
    %27 = arith.mulf %17, %26 : vector<17x32xf32>
    %28 = vector.broadcast %9 : vector<1x32xf32> to vector<17x32xf32>
    %29 = arith.mulf %27, %28 : vector<17x32xf32>
    %30 = vector.broadcast %11 : vector<1x32xf32> to vector<17x32xf32>
    %31 = arith.addf %29, %30 : vector<17x32xf32>
    %c0_17 = arith.constant 0 : index
    %c0_18 = arith.constant 0 : index
    %c0_19 = arith.constant 0 : index
    %32 = vector.load %arg6[%c0_17, %c0_18, %c0_19] : memref<2x32x96xf32, #tpu.memory_space<vmem>>, vector<1x32x96xf32>
    %33 = vector.shape_cast %32 : vector<1x32x96xf32> to vector<32x96xf32>
    %34 = arith.truncf %31 : vector<17x32xf32> to vector<17x32xbf16>
    %35 = arith.truncf %33 : vector<32x96xf32> to vector<32x96xbf16>
    %cst_20 = arith.constant dense<0.000000e+00> : vector<17x96xf32>
    %36 = tpu.matmul %34, %35, %cst_20 {dimension_numbers = #tpu.dot_dimension_numbers<[1], [0], [0], [1], [0, 0, 1, 1], [], []>} : vector<17x32xbf16>, vector<32x96xbf16>, vector<17x96xf32> -> vector<17x96xf32>
    %c0_21 = arith.constant 0 : index
    %c0_22 = arith.constant 0 : index
    %c0_23 = arith.constant 0 : index
    %37 = vector.load %arg7[%c0_21, %c0_22, %c0_23] : memref<2x1x96xf32, #tpu.memory_space<vmem>>, vector<1x1x96xf32>
    %38 = vector.shape_cast %37 : vector<1x1x96xf32> to vector<1x96xf32>
    %39 = vector.broadcast %38 : vector<1x96xf32> to vector<17x96xf32>
    %40 = arith.addf %36, %39 : vector<17x96xf32>
    %41 = vector.extract_strided_slice %40 {offsets = [0, 0], sizes = [17, 16], strides = [1, 1]} : vector<17x96xf32> to vector<17x16xf32>
    %42 = vector.extract_strided_slice %40 {offsets = [0, 32], sizes = [17, 16], strides = [1, 1]} : vector<17x96xf32> to vector<17x16xf32>
    %43 = vector.extract_strided_slice %40 {offsets = [0, 64], sizes = [17, 16], strides = [1, 1]} : vector<17x96xf32> to vector<17x16xf32>
    %44 = arith.truncf %41 : vector<17x16xf32> to vector<17x16xbf16>
    %45 = arith.truncf %42 : vector<17x16xf32> to vector<17x16xbf16>
    %cst_24 = arith.constant dense<0.000000e+00> : vector<17x17xf32>
    %46 = tpu.matmul %44, %45, %cst_24 {dimension_numbers = #tpu.dot_dimension_numbers<[1], [1], [0], [0], [0, 0, 1, 0], [], []>} : vector<17x16xbf16>, vector<17x16xbf16>, vector<17x17xf32> -> vector<17x17xf32>
    %cst_25 = arith.constant 2.500000e-01 : f32
    %47 = vector.broadcast %cst_25 : f32 to vector<17x17xf32>
    %48 = arith.mulf %46, %47 : vector<17x17xf32>
    %cst_26 = arith.constant dense<0xFF800000> : vector<17xf32>
    %49 = vector.multi_reduction <maximumf>, %48, %cst_26 [1] : vector<17x17xf32> to vector<17xf32>
    %50 = vector.shape_cast %49 : vector<17xf32> to vector<17x1xf32>
    %51 = vector.broadcast %50 : vector<17x1xf32> to vector<17x17xf32>
    %52 = arith.subf %48, %51 : vector<17x17xf32>
    %53 = math.exp %52 : vector<17x17xf32>
    %cst_27 = arith.constant dense<0.000000e+00> : vector<17xf32>
    %54 = vector.multi_reduction <add>, %53, %cst_27 [1] : vector<17x17xf32> to vector<17xf32>
    %55 = vector.shape_cast %54 : vector<17xf32> to vector<17x1xf32>
    %56 = tpu.reciprocal %55 {approx = true} : vector<17x1xf32> -> vector<17x1xf32>
    %57 = vector.broadcast %56 : vector<17x1xf32> to vector<17x17xf32>
    %58 = arith.mulf %53, %57 : vector<17x17xf32>
    %59 = arith.truncf %58 : vector<17x17xf32> to vector<17x17xbf16>
    %60 = arith.truncf %43 : vector<17x16xf32> to vector<17x16xbf16>
    %cst_28 = arith.constant dense<0.000000e+00> : vector<17x16xf32>
    %61 = tpu.matmul %59, %60, %cst_28 {dimension_numbers = #tpu.dot_dimension_numbers<[1], [0], [0], [1], [0, 0, 1, 1], [], []>} : vector<17x17xbf16>, vector<17x16xbf16>, vector<17x16xf32> -> vector<17x16xf32>
    %62 = vector.extract_strided_slice %40 {offsets = [0, 16], sizes = [17, 16], strides = [1, 1]} : vector<17x96xf32> to vector<17x16xf32>
    %63 = vector.extract_strided_slice %40 {offsets = [0, 48], sizes = [17, 16], strides = [1, 1]} : vector<17x96xf32> to vector<17x16xf32>
    %64 = vector.extract_strided_slice %40 {offsets = [0, 80], sizes = [17, 16], strides = [1, 1]} : vector<17x96xf32> to vector<17x16xf32>
    %65 = arith.truncf %62 : vector<17x16xf32> to vector<17x16xbf16>
    %66 = arith.truncf %63 : vector<17x16xf32> to vector<17x16xbf16>
    %cst_29 = arith.constant dense<0.000000e+00> : vector<17x17xf32>
    %67 = tpu.matmul %65, %66, %cst_29 {dimension_numbers = #tpu.dot_dimension_numbers<[1], [1], [0], [0], [0, 0, 1, 0], [], []>} : vector<17x16xbf16>, vector<17x16xbf16>, vector<17x17xf32> -> vector<17x17xf32>
    %cst_30 = arith.constant 2.500000e-01 : f32
    %68 = vector.broadcast %cst_30 : f32 to vector<17x17xf32>
    %69 = arith.mulf %67, %68 : vector<17x17xf32>
    %cst_31 = arith.constant dense<0xFF800000> : vector<17xf32>
    %70 = vector.multi_reduction <maximumf>, %69, %cst_31 [1] : vector<17x17xf32> to vector<17xf32>
    %71 = vector.shape_cast %70 : vector<17xf32> to vector<17x1xf32>
    %72 = vector.broadcast %71 : vector<17x1xf32> to vector<17x17xf32>
    %73 = arith.subf %69, %72 : vector<17x17xf32>
    %74 = math.exp %73 : vector<17x17xf32>
    %cst_32 = arith.constant dense<0.000000e+00> : vector<17xf32>
    %75 = vector.multi_reduction <add>, %74, %cst_32 [1] : vector<17x17xf32> to vector<17xf32>
    %76 = vector.shape_cast %75 : vector<17xf32> to vector<17x1xf32>
    %77 = tpu.reciprocal %76 {approx = true} : vector<17x1xf32> -> vector<17x1xf32>
    %78 = vector.broadcast %77 : vector<17x1xf32> to vector<17x17xf32>
    %79 = arith.mulf %74, %78 : vector<17x17xf32>
    %80 = arith.truncf %79 : vector<17x17xf32> to vector<17x17xbf16>
    %81 = arith.truncf %64 : vector<17x16xf32> to vector<17x16xbf16>
    %cst_33 = arith.constant dense<0.000000e+00> : vector<17x16xf32>
    %82 = tpu.matmul %80, %81, %cst_33 {dimension_numbers = #tpu.dot_dimension_numbers<[1], [0], [0], [1], [0, 0, 1, 1], [], []>} : vector<17x17xbf16>, vector<17x16xbf16>, vector<17x16xf32> -> vector<17x16xf32>
    %83 = tpu.concatenate %61, %82 in 1 : vector<17x16xf32>, vector<17x16xf32> -> vector<17x32xf32>
    %c0_34 = arith.constant 0 : index
    %c0_35 = arith.constant 0 : index
    %c0_36 = arith.constant 0 : index
    %84 = vector.load %arg8[%c0_34, %c0_35, %c0_36] : memref<2x32x32xf32, #tpu.memory_space<vmem>>, vector<1x32x32xf32>
    %85 = vector.shape_cast %84 : vector<1x32x32xf32> to vector<32x32xf32>
    %86 = arith.truncf %83 : vector<17x32xf32> to vector<17x32xbf16>
    %87 = arith.truncf %85 : vector<32x32xf32> to vector<32x32xbf16>
    %cst_37 = arith.constant dense<0.000000e+00> : vector<17x32xf32>
    %88 = tpu.matmul %86, %87, %cst_37 {dimension_numbers = #tpu.dot_dimension_numbers<[1], [0], [0], [1], [0, 0, 1, 1], [], []>} : vector<17x32xbf16>, vector<32x32xbf16>, vector<17x32xf32> -> vector<17x32xf32>
    %89 = arith.addf %7, %88 : vector<17x32xf32>
    %c0_38 = arith.constant 0 : index
    %c0_39 = arith.constant 0 : index
    %c0_40 = arith.constant 0 : index
    %90 = vector.load %arg9[%c0_38, %c0_39, %c0_40] : memref<2x1x32xf32, #tpu.memory_space<vmem>>, vector<1x1x32xf32>
    %91 = vector.shape_cast %90 : vector<1x1x32xf32> to vector<1x32xf32>
    %92 = vector.broadcast %91 : vector<1x32xf32> to vector<17x32xf32>
    %93 = arith.addf %89, %92 : vector<17x32xf32>
    %c0_41 = arith.constant 0 : index
    %c0_42 = arith.constant 0 : index
    %c0_43 = arith.constant 0 : index
    %94 = vector.load %arg10[%c0_41, %c0_42, %c0_43] : memref<2x1x32xf32, #tpu.memory_space<vmem>>, vector<1x1x32xf32>
    %95 = vector.shape_cast %94 : vector<1x1x32xf32> to vector<1x32xf32>
    %c0_44 = arith.constant 0 : index
    %c0_45 = arith.constant 0 : index
    %c0_46 = arith.constant 0 : index
    %96 = vector.load %arg11[%c0_44, %c0_45, %c0_46] : memref<2x1x32xf32, #tpu.memory_space<vmem>>, vector<1x1x32xf32>
    %97 = vector.shape_cast %96 : vector<1x1x32xf32> to vector<1x32xf32>
    %cst_47 = arith.constant dense<0.000000e+00> : vector<17xf32>
    %98 = vector.multi_reduction <add>, %93, %cst_47 [1] : vector<17x32xf32> to vector<17xf32>
    %99 = vector.shape_cast %98 : vector<17xf32> to vector<17x1xf32>
    %cst_48 = arith.constant 3.200000e+01 : f32
    %100 = vector.broadcast %cst_48 : f32 to vector<17x1xf32>
    %101 = arith.divf %99, %100 : vector<17x1xf32>
    %102 = vector.broadcast %101 : vector<17x1xf32> to vector<17x32xf32>
    %103 = arith.subf %93, %102 : vector<17x32xf32>
    %104 = arith.mulf %103, %103 : vector<17x32xf32>
    %cst_49 = arith.constant dense<0.000000e+00> : vector<17xf32>
    %105 = vector.multi_reduction <add>, %104, %cst_49 [1] : vector<17x32xf32> to vector<17xf32>
    %106 = vector.shape_cast %105 : vector<17xf32> to vector<17x1xf32>
    %cst_50 = arith.constant 3.200000e+01 : f32
    %107 = vector.broadcast %cst_50 : f32 to vector<17x1xf32>
    %108 = arith.divf %106, %107 : vector<17x1xf32>
    %cst_51 = arith.constant 9.99999996E-13 : f32
    %109 = vector.broadcast %cst_51 : f32 to vector<17x1xf32>
    %110 = arith.addf %108, %109 : vector<17x1xf32>
    %111 = math.rsqrt %110 : vector<17x1xf32>
    %112 = vector.broadcast %111 : vector<17x1xf32> to vector<17x32xf32>
    %113 = arith.mulf %103, %112 : vector<17x32xf32>
    %114 = vector.broadcast %95 : vector<1x32xf32> to vector<17x32xf32>
    %115 = arith.mulf %113, %114 : vector<17x32xf32>
    %116 = vector.broadcast %97 : vector<1x32xf32> to vector<17x32xf32>
    %117 = arith.addf %115, %116 : vector<17x32xf32>
    %c0_52 = arith.constant 0 : index
    %c0_53 = arith.constant 0 : index
    %c0_54 = arith.constant 0 : index
    %118 = vector.load %arg12[%c0_52, %c0_53, %c0_54] : memref<2x32x64xf32, #tpu.memory_space<vmem>>, vector<1x32x64xf32>
    %119 = vector.shape_cast %118 : vector<1x32x64xf32> to vector<32x64xf32>
    %120 = arith.truncf %117 : vector<17x32xf32> to vector<17x32xbf16>
    %121 = arith.truncf %119 : vector<32x64xf32> to vector<32x64xbf16>
    %cst_55 = arith.constant dense<0.000000e+00> : vector<17x64xf32>
    %122 = tpu.matmul %120, %121, %cst_55 {dimension_numbers = #tpu.dot_dimension_numbers<[1], [0], [0], [1], [0, 0, 1, 1], [], []>} : vector<17x32xbf16>, vector<32x64xbf16>, vector<17x64xf32> -> vector<17x64xf32>
    %c0_56 = arith.constant 0 : index
    %c0_57 = arith.constant 0 : index
    %c0_58 = arith.constant 0 : index
    %123 = vector.load %arg13[%c0_56, %c0_57, %c0_58] : memref<2x1x64xf32, #tpu.memory_space<vmem>>, vector<1x1x64xf32>
    %124 = vector.shape_cast %123 : vector<1x1x64xf32> to vector<1x64xf32>
    %125 = vector.broadcast %124 : vector<1x64xf32> to vector<17x64xf32>
    %126 = arith.addf %122, %125 : vector<17x64xf32>
    %127 = arith.mulf %126, %126 : vector<17x64xf32>
    %128 = arith.mulf %126, %127 : vector<17x64xf32>
    %cst_59 = arith.constant 4.471500e-02 : f32
    %129 = vector.broadcast %cst_59 : f32 to vector<17x64xf32>
    %130 = arith.mulf %129, %128 : vector<17x64xf32>
    %131 = arith.addf %126, %130 : vector<17x64xf32>
    %cst_60 = arith.constant 0.797884583 : f32
    %132 = vector.broadcast %cst_60 : f32 to vector<17x64xf32>
    %133 = arith.mulf %132, %131 : vector<17x64xf32>
    %134 = math.tanh %133 : vector<17x64xf32>
    %cst_61 = arith.constant 1.000000e+00 : f32
    %135 = vector.broadcast %cst_61 : f32 to vector<17x64xf32>
    %136 = arith.addf %135, %134 : vector<17x64xf32>
    %cst_62 = arith.constant 5.000000e-01 : f32
    %137 = vector.broadcast %cst_62 : f32 to vector<17x64xf32>
    %138 = arith.mulf %137, %136 : vector<17x64xf32>
    %139 = arith.mulf %126, %138 : vector<17x64xf32>
    %c0_63 = arith.constant 0 : index
    %c0_64 = arith.constant 0 : index
    %c0_65 = arith.constant 0 : index
    %140 = vector.load %arg14[%c0_63, %c0_64, %c0_65] : memref<2x64x32xf32, #tpu.memory_space<vmem>>, vector<1x64x32xf32>
    %141 = vector.shape_cast %140 : vector<1x64x32xf32> to vector<64x32xf32>
    %142 = arith.truncf %139 : vector<17x64xf32> to vector<17x64xbf16>
    %143 = arith.truncf %141 : vector<64x32xf32> to vector<64x32xbf16>
    %cst_66 = arith.constant dense<0.000000e+00> : vector<17x32xf32>
    %144 = tpu.matmul %142, %143, %cst_66 {dimension_numbers = #tpu.dot_dimension_numbers<[1], [0], [0], [1], [0, 0, 1, 1], [], []>} : vector<17x64xbf16>, vector<64x32xbf16>, vector<17x32xf32> -> vector<17x32xf32>
    %145 = arith.addf %93, %144 : vector<17x32xf32>
    %c0_67 = arith.constant 0 : index
    %c0_68 = arith.constant 0 : index
    %c0_69 = arith.constant 0 : index
    %146 = vector.load %arg15[%c0_67, %c0_68, %c0_69] : memref<2x1x32xf32, #tpu.memory_space<vmem>>, vector<1x1x32xf32>
    %147 = vector.shape_cast %146 : vector<1x1x32xf32> to vector<1x32xf32>
    %148 = vector.broadcast %147 : vector<1x32xf32> to vector<17x32xf32>
    %149 = arith.addf %145, %148 : vector<17x32xf32>
    %c1 = arith.constant 1 : index
    %c0_70 = arith.constant 0 : index
    %c0_71 = arith.constant 0 : index
    %150 = vector.load %arg4[%c1, %c0_70, %c0_71] : memref<2x1x32xf32, #tpu.memory_space<vmem>>, vector<1x1x32xf32>
    %151 = vector.shape_cast %150 : vector<1x1x32xf32> to vector<1x32xf32>
    %c1_72 = arith.constant 1 : index
    %c0_73 = arith.constant 0 : index
    %c0_74 = arith.constant 0 : index
    %152 = vector.load %arg5[%c1_72, %c0_73, %c0_74] : memref<2x1x32xf32, #tpu.memory_space<vmem>>, vector<1x1x32xf32>
    %153 = vector.shape_cast %152 : vector<1x1x32xf32> to vector<1x32xf32>
    %cst_75 = arith.constant dense<0.000000e+00> : vector<17xf32>
    %154 = vector.multi_reduction <add>, %149, %cst_75 [1] : vector<17x32xf32> to vector<17xf32>
    %155 = vector.shape_cast %154 : vector<17xf32> to vector<17x1xf32>
    %cst_76 = arith.constant 3.200000e+01 : f32
    %156 = vector.broadcast %cst_76 : f32 to vector<17x1xf32>
    %157 = arith.divf %155, %156 : vector<17x1xf32>
    %158 = vector.broadcast %157 : vector<17x1xf32> to vector<17x32xf32>
    %159 = arith.subf %149, %158 : vector<17x32xf32>
    %160 = arith.mulf %159, %159 : vector<17x32xf32>
    %cst_77 = arith.constant dense<0.000000e+00> : vector<17xf32>
    %161 = vector.multi_reduction <add>, %160, %cst_77 [1] : vector<17x32xf32> to vector<17xf32>
    %162 = vector.shape_cast %161 : vector<17xf32> to vector<17x1xf32>
    %cst_78 = arith.constant 3.200000e+01 : f32
    %163 = vector.broadcast %cst_78 : f32 to vector<17x1xf32>
    %164 = arith.divf %162, %163 : vector<17x1xf32>
    %cst_79 = arith.constant 9.99999996E-13 : f32
    %165 = vector.broadcast %cst_79 : f32 to vector<17x1xf32>
    %166 = arith.addf %164, %165 : vector<17x1xf32>
    %167 = math.rsqrt %166 : vector<17x1xf32>
    %168 = vector.broadcast %167 : vector<17x1xf32> to vector<17x32xf32>
    %169 = arith.mulf %159, %168 : vector<17x32xf32>
    %170 = vector.broadcast %151 : vector<1x32xf32> to vector<17x32xf32>
    %171 = arith.mulf %169, %170 : vector<17x32xf32>
    %172 = vector.broadcast %153 : vector<1x32xf32> to vector<17x32xf32>
    %173 = arith.addf %171, %172 : vector<17x32xf32>
    %c1_80 = arith.constant 1 : index
    %c0_81 = arith.constant 0 : index
    %c0_82 = arith.constant 0 : index
    %174 = vector.load %arg6[%c1_80, %c0_81, %c0_82] : memref<2x32x96xf32, #tpu.memory_space<vmem>>, vector<1x32x96xf32>
    %175 = vector.shape_cast %174 : vector<1x32x96xf32> to vector<32x96xf32>
    %176 = arith.truncf %173 : vector<17x32xf32> to vector<17x32xbf16>
    %177 = arith.truncf %175 : vector<32x96xf32> to vector<32x96xbf16>
    %cst_83 = arith.constant dense<0.000000e+00> : vector<17x96xf32>
    %178 = tpu.matmul %176, %177, %cst_83 {dimension_numbers = #tpu.dot_dimension_numbers<[1], [0], [0], [1], [0, 0, 1, 1], [], []>} : vector<17x32xbf16>, vector<32x96xbf16>, vector<17x96xf32> -> vector<17x96xf32>
    %c1_84 = arith.constant 1 : index
    %c0_85 = arith.constant 0 : index
    %c0_86 = arith.constant 0 : index
    %179 = vector.load %arg7[%c1_84, %c0_85, %c0_86] : memref<2x1x96xf32, #tpu.memory_space<vmem>>, vector<1x1x96xf32>
    %180 = vector.shape_cast %179 : vector<1x1x96xf32> to vector<1x96xf32>
    %181 = vector.broadcast %180 : vector<1x96xf32> to vector<17x96xf32>
    %182 = arith.addf %178, %181 : vector<17x96xf32>
    %183 = vector.extract_strided_slice %182 {offsets = [0, 0], sizes = [17, 16], strides = [1, 1]} : vector<17x96xf32> to vector<17x16xf32>
    %184 = vector.extract_strided_slice %182 {offsets = [0, 32], sizes = [17, 16], strides = [1, 1]} : vector<17x96xf32> to vector<17x16xf32>
    %185 = vector.extract_strided_slice %182 {offsets = [0, 64], sizes = [17, 16], strides = [1, 1]} : vector<17x96xf32> to vector<17x16xf32>
    %186 = arith.truncf %183 : vector<17x16xf32> to vector<17x16xbf16>
    %187 = arith.truncf %184 : vector<17x16xf32> to vector<17x16xbf16>
    %cst_87 = arith.constant dense<0.000000e+00> : vector<17x17xf32>
    %188 = tpu.matmul %186, %187, %cst_87 {dimension_numbers = #tpu.dot_dimension_numbers<[1], [1], [0], [0], [0, 0, 1, 0], [], []>} : vector<17x16xbf16>, vector<17x16xbf16>, vector<17x17xf32> -> vector<17x17xf32>
    %cst_88 = arith.constant 2.500000e-01 : f32
    %189 = vector.broadcast %cst_88 : f32 to vector<17x17xf32>
    %190 = arith.mulf %188, %189 : vector<17x17xf32>
    %cst_89 = arith.constant dense<0xFF800000> : vector<17xf32>
    %191 = vector.multi_reduction <maximumf>, %190, %cst_89 [1] : vector<17x17xf32> to vector<17xf32>
    %192 = vector.shape_cast %191 : vector<17xf32> to vector<17x1xf32>
    %193 = vector.broadcast %192 : vector<17x1xf32> to vector<17x17xf32>
    %194 = arith.subf %190, %193 : vector<17x17xf32>
    %195 = math.exp %194 : vector<17x17xf32>
    %cst_90 = arith.constant dense<0.000000e+00> : vector<17xf32>
    %196 = vector.multi_reduction <add>, %195, %cst_90 [1] : vector<17x17xf32> to vector<17xf32>
    %197 = vector.shape_cast %196 : vector<17xf32> to vector<17x1xf32>
    %198 = tpu.reciprocal %197 {approx = true} : vector<17x1xf32> -> vector<17x1xf32>
    %199 = vector.broadcast %198 : vector<17x1xf32> to vector<17x17xf32>
    %200 = arith.mulf %195, %199 : vector<17x17xf32>
    %201 = arith.truncf %200 : vector<17x17xf32> to vector<17x17xbf16>
    %202 = arith.truncf %185 : vector<17x16xf32> to vector<17x16xbf16>
    %cst_91 = arith.constant dense<0.000000e+00> : vector<17x16xf32>
    %203 = tpu.matmul %201, %202, %cst_91 {dimension_numbers = #tpu.dot_dimension_numbers<[1], [0], [0], [1], [0, 0, 1, 1], [], []>} : vector<17x17xbf16>, vector<17x16xbf16>, vector<17x16xf32> -> vector<17x16xf32>
    %204 = vector.extract_strided_slice %182 {offsets = [0, 16], sizes = [17, 16], strides = [1, 1]} : vector<17x96xf32> to vector<17x16xf32>
    %205 = vector.extract_strided_slice %182 {offsets = [0, 48], sizes = [17, 16], strides = [1, 1]} : vector<17x96xf32> to vector<17x16xf32>
    %206 = vector.extract_strided_slice %182 {offsets = [0, 80], sizes = [17, 16], strides = [1, 1]} : vector<17x96xf32> to vector<17x16xf32>
    %207 = arith.truncf %204 : vector<17x16xf32> to vector<17x16xbf16>
    %208 = arith.truncf %205 : vector<17x16xf32> to vector<17x16xbf16>
    %cst_92 = arith.constant dense<0.000000e+00> : vector<17x17xf32>
    %209 = tpu.matmul %207, %208, %cst_92 {dimension_numbers = #tpu.dot_dimension_numbers<[1], [1], [0], [0], [0, 0, 1, 0], [], []>} : vector<17x16xbf16>, vector<17x16xbf16>, vector<17x17xf32> -> vector<17x17xf32>
    %cst_93 = arith.constant 2.500000e-01 : f32
    %210 = vector.broadcast %cst_93 : f32 to vector<17x17xf32>
    %211 = arith.mulf %209, %210 : vector<17x17xf32>
    %cst_94 = arith.constant dense<0xFF800000> : vector<17xf32>
    %212 = vector.multi_reduction <maximumf>, %211, %cst_94 [1] : vector<17x17xf32> to vector<17xf32>
    %213 = vector.shape_cast %212 : vector<17xf32> to vector<17x1xf32>
    %214 = vector.broadcast %213 : vector<17x1xf32> to vector<17x17xf32>
    %215 = arith.subf %211, %214 : vector<17x17xf32>
    %216 = math.exp %215 : vector<17x17xf32>
    %cst_95 = arith.constant dense<0.000000e+00> : vector<17xf32>
    %217 = vector.multi_reduction <add>, %216, %cst_95 [1] : vector<17x17xf32> to vector<17xf32>
    %218 = vector.shape_cast %217 : vector<17xf32> to vector<17x1xf32>
    %219 = tpu.reciprocal %218 {approx = true} : vector<17x1xf32> -> vector<17x1xf32>
    %220 = vector.broadcast %219 : vector<17x1xf32> to vector<17x17xf32>
    %221 = arith.mulf %216, %220 : vector<17x17xf32>
    %222 = arith.truncf %221 : vector<17x17xf32> to vector<17x17xbf16>
    %223 = arith.truncf %206 : vector<17x16xf32> to vector<17x16xbf16>
    %cst_96 = arith.constant dense<0.000000e+00> : vector<17x16xf32>
    %224 = tpu.matmul %222, %223, %cst_96 {dimension_numbers = #tpu.dot_dimension_numbers<[1], [0], [0], [1], [0, 0, 1, 1], [], []>} : vector<17x17xbf16>, vector<17x16xbf16>, vector<17x16xf32> -> vector<17x16xf32>
    %225 = tpu.concatenate %203, %224 in 1 : vector<17x16xf32>, vector<17x16xf32> -> vector<17x32xf32>
    %c1_97 = arith.constant 1 : index
    %c0_98 = arith.constant 0 : index
    %c0_99 = arith.constant 0 : index
    %226 = vector.load %arg8[%c1_97, %c0_98, %c0_99] : memref<2x32x32xf32, #tpu.memory_space<vmem>>, vector<1x32x32xf32>
    %227 = vector.shape_cast %226 : vector<1x32x32xf32> to vector<32x32xf32>
    %228 = arith.truncf %225 : vector<17x32xf32> to vector<17x32xbf16>
    %229 = arith.truncf %227 : vector<32x32xf32> to vector<32x32xbf16>
    %cst_100 = arith.constant dense<0.000000e+00> : vector<17x32xf32>
    %230 = tpu.matmul %228, %229, %cst_100 {dimension_numbers = #tpu.dot_dimension_numbers<[1], [0], [0], [1], [0, 0, 1, 1], [], []>} : vector<17x32xbf16>, vector<32x32xbf16>, vector<17x32xf32> -> vector<17x32xf32>
    %231 = arith.addf %149, %230 : vector<17x32xf32>
    %c1_101 = arith.constant 1 : index
    %c0_102 = arith.constant 0 : index
    %c0_103 = arith.constant 0 : index
    %232 = vector.load %arg9[%c1_101, %c0_102, %c0_103] : memref<2x1x32xf32, #tpu.memory_space<vmem>>, vector<1x1x32xf32>
    %233 = vector.shape_cast %232 : vector<1x1x32xf32> to vector<1x32xf32>
    %234 = vector.broadcast %233 : vector<1x32xf32> to vector<17x32xf32>
    %235 = arith.addf %231, %234 : vector<17x32xf32>
    %c1_104 = arith.constant 1 : index
    %c0_105 = arith.constant 0 : index
    %c0_106 = arith.constant 0 : index
    %236 = vector.load %arg10[%c1_104, %c0_105, %c0_106] : memref<2x1x32xf32, #tpu.memory_space<vmem>>, vector<1x1x32xf32>
    %237 = vector.shape_cast %236 : vector<1x1x32xf32> to vector<1x32xf32>
    %c1_107 = arith.constant 1 : index
    %c0_108 = arith.constant 0 : index
    %c0_109 = arith.constant 0 : index
    %238 = vector.load %arg11[%c1_107, %c0_108, %c0_109] : memref<2x1x32xf32, #tpu.memory_space<vmem>>, vector<1x1x32xf32>
    %239 = vector.shape_cast %238 : vector<1x1x32xf32> to vector<1x32xf32>
    %cst_110 = arith.constant dense<0.000000e+00> : vector<17xf32>
    %240 = vector.multi_reduction <add>, %235, %cst_110 [1] : vector<17x32xf32> to vector<17xf32>
    %241 = vector.shape_cast %240 : vector<17xf32> to vector<17x1xf32>
    %cst_111 = arith.constant 3.200000e+01 : f32
    %242 = vector.broadcast %cst_111 : f32 to vector<17x1xf32>
    %243 = arith.divf %241, %242 : vector<17x1xf32>
    %244 = vector.broadcast %243 : vector<17x1xf32> to vector<17x32xf32>
    %245 = arith.subf %235, %244 : vector<17x32xf32>
    %246 = arith.mulf %245, %245 : vector<17x32xf32>
    %cst_112 = arith.constant dense<0.000000e+00> : vector<17xf32>
    %247 = vector.multi_reduction <add>, %246, %cst_112 [1] : vector<17x32xf32> to vector<17xf32>
    %248 = vector.shape_cast %247 : vector<17xf32> to vector<17x1xf32>
    %cst_113 = arith.constant 3.200000e+01 : f32
    %249 = vector.broadcast %cst_113 : f32 to vector<17x1xf32>
    %250 = arith.divf %248, %249 : vector<17x1xf32>
    %cst_114 = arith.constant 9.99999996E-13 : f32
    %251 = vector.broadcast %cst_114 : f32 to vector<17x1xf32>
    %252 = arith.addf %250, %251 : vector<17x1xf32>
    %253 = math.rsqrt %252 : vector<17x1xf32>
    %254 = vector.broadcast %253 : vector<17x1xf32> to vector<17x32xf32>
    %255 = arith.mulf %245, %254 : vector<17x32xf32>
    %256 = vector.broadcast %237 : vector<1x32xf32> to vector<17x32xf32>
    %257 = arith.mulf %255, %256 : vector<17x32xf32>
    %258 = vector.broadcast %239 : vector<1x32xf32> to vector<17x32xf32>
    %259 = arith.addf %257, %258 : vector<17x32xf32>
    %c1_115 = arith.constant 1 : index
    %c0_116 = arith.constant 0 : index
    %c0_117 = arith.constant 0 : index
    %260 = vector.load %arg12[%c1_115, %c0_116, %c0_117] : memref<2x32x64xf32, #tpu.memory_space<vmem>>, vector<1x32x64xf32>
    %261 = vector.shape_cast %260 : vector<1x32x64xf32> to vector<32x64xf32>
    %262 = arith.truncf %259 : vector<17x32xf32> to vector<17x32xbf16>
    %263 = arith.truncf %261 : vector<32x64xf32> to vector<32x64xbf16>
    %cst_118 = arith.constant dense<0.000000e+00> : vector<17x64xf32>
    %264 = tpu.matmul %262, %263, %cst_118 {dimension_numbers = #tpu.dot_dimension_numbers<[1], [0], [0], [1], [0, 0, 1, 1], [], []>} : vector<17x32xbf16>, vector<32x64xbf16>, vector<17x64xf32> -> vector<17x64xf32>
    %c1_119 = arith.constant 1 : index
    %c0_120 = arith.constant 0 : index
    %c0_121 = arith.constant 0 : index
    %265 = vector.load %arg13[%c1_119, %c0_120, %c0_121] : memref<2x1x64xf32, #tpu.memory_space<vmem>>, vector<1x1x64xf32>
    %266 = vector.shape_cast %265 : vector<1x1x64xf32> to vector<1x64xf32>
    %267 = vector.broadcast %266 : vector<1x64xf32> to vector<17x64xf32>
    %268 = arith.addf %264, %267 : vector<17x64xf32>
    %269 = arith.mulf %268, %268 : vector<17x64xf32>
    %270 = arith.mulf %268, %269 : vector<17x64xf32>
    %cst_122 = arith.constant 4.471500e-02 : f32
    %271 = vector.broadcast %cst_122 : f32 to vector<17x64xf32>
    %272 = arith.mulf %271, %270 : vector<17x64xf32>
    %273 = arith.addf %268, %272 : vector<17x64xf32>
    %cst_123 = arith.constant 0.797884583 : f32
    %274 = vector.broadcast %cst_123 : f32 to vector<17x64xf32>
    %275 = arith.mulf %274, %273 : vector<17x64xf32>
    %276 = math.tanh %275 : vector<17x64xf32>
    %cst_124 = arith.constant 1.000000e+00 : f32
    %277 = vector.broadcast %cst_124 : f32 to vector<17x64xf32>
    %278 = arith.addf %277, %276 : vector<17x64xf32>
    %cst_125 = arith.constant 5.000000e-01 : f32
    %279 = vector.broadcast %cst_125 : f32 to vector<17x64xf32>
    %280 = arith.mulf %279, %278 : vector<17x64xf32>
    %281 = arith.mulf %268, %280 : vector<17x64xf32>
    %c1_126 = arith.constant 1 : index
    %c0_127 = arith.constant 0 : index
    %c0_128 = arith.constant 0 : index
    %282 = vector.load %arg14[%c1_126, %c0_127, %c0_128] : memref<2x64x32xf32, #tpu.memory_space<vmem>>, vector<1x64x32xf32>
    %283 = vector.shape_cast %282 : vector<1x64x32xf32> to vector<64x32xf32>
    %284 = arith.truncf %281 : vector<17x64xf32> to vector<17x64xbf16>
    %285 = arith.truncf %283 : vector<64x32xf32> to vector<64x32xbf16>
    %cst_129 = arith.constant dense<0.000000e+00> : vector<17x32xf32>
    %286 = tpu.matmul %284, %285, %cst_129 {dimension_numbers = #tpu.dot_dimension_numbers<[1], [0], [0], [1], [0, 0, 1, 1], [], []>} : vector<17x64xbf16>, vector<64x32xbf16>, vector<17x32xf32> -> vector<17x32xf32>
    %287 = arith.addf %235, %286 : vector<17x32xf32>
    %c1_130 = arith.constant 1 : index
    %c0_131 = arith.constant 0 : index
    %c0_132 = arith.constant 0 : index
    %288 = vector.load %arg15[%c1_130, %c0_131, %c0_132] : memref<2x1x32xf32, #tpu.memory_space<vmem>>, vector<1x1x32xf32>
    %289 = vector.shape_cast %288 : vector<1x1x32xf32> to vector<1x32xf32>
    %290 = vector.broadcast %289 : vector<1x32xf32> to vector<17x32xf32>
    %291 = arith.addf %287, %290 : vector<17x32xf32>
    %292 = vector.extract_strided_slice %291 {offsets = [0, 0], sizes = [1, 32], strides = [1, 1]} : vector<17x32xf32> to vector<1x32xf32>
    %c0_133 = arith.constant 0 : index
    %c0_134 = arith.constant 0 : index
    %293 = vector.load %arg16[%c0_133, %c0_134] : memref<1x32xf32, #tpu.memory_space<vmem>>, vector<1x32xf32>
    %c0_135 = arith.constant 0 : index
    %c0_136 = arith.constant 0 : index
    %294 = vector.load %arg17[%c0_135, %c0_136] : memref<1x32xf32, #tpu.memory_space<vmem>>, vector<1x32xf32>
    %cst_137 = arith.constant dense<0.000000e+00> : vector<1xf32>
    %295 = vector.multi_reduction <add>, %292, %cst_137 [1] : vector<1x32xf32> to vector<1xf32>
    %296 = vector.shape_cast %295 : vector<1xf32> to vector<1x1xf32>
    %cst_138 = arith.constant 3.200000e+01 : f32
    %297 = vector.broadcast %cst_138 : f32 to vector<1x1xf32>
    %298 = arith.divf %296, %297 : vector<1x1xf32>
    %299 = vector.broadcast %298 : vector<1x1xf32> to vector<1x32xf32>
    %300 = arith.subf %292, %299 : vector<1x32xf32>
    %301 = arith.mulf %300, %300 : vector<1x32xf32>
    %cst_139 = arith.constant dense<0.000000e+00> : vector<1xf32>
    %302 = vector.multi_reduction <add>, %301, %cst_139 [1] : vector<1x32xf32> to vector<1xf32>
    %303 = vector.shape_cast %302 : vector<1xf32> to vector<1x1xf32>
    %cst_140 = arith.constant 3.200000e+01 : f32
    %304 = vector.broadcast %cst_140 : f32 to vector<1x1xf32>
    %305 = arith.divf %303, %304 : vector<1x1xf32>
    %cst_141 = arith.constant 9.99999996E-13 : f32
    %306 = vector.broadcast %cst_141 : f32 to vector<1x1xf32>
    %307 = arith.addf %305, %306 : vector<1x1xf32>
    %308 = math.rsqrt %307 : vector<1x1xf32>
    %309 = vector.broadcast %308 : vector<1x1xf32> to vector<1x32xf32>
    %310 = arith.mulf %300, %309 : vector<1x32xf32>
    %311 = arith.mulf %310, %293 : vector<1x32xf32>
    %312 = arith.addf %311, %294 : vector<1x32xf32>
    %c0_142 = arith.constant 0 : index
    %c0_143 = arith.constant 0 : index
    %313 = vector.load %arg18[%c0_142, %c0_143] : memref<32x4xf32, #tpu.memory_space<vmem>>, vector<32x4xf32>
    %314 = arith.truncf %312 : vector<1x32xf32> to vector<1x32xbf16>
    %315 = arith.truncf %313 : vector<32x4xf32> to vector<32x4xbf16>
    %cst_144 = arith.constant dense<0.000000e+00> : vector<1x4xf32>
    %316 = tpu.matmul %314, %315, %cst_144 {dimension_numbers = #tpu.dot_dimension_numbers<[1], [0], [0], [1], [0, 0, 1, 1], [], []>} : vector<1x32xbf16>, vector<32x4xbf16>, vector<1x4xf32> -> vector<1x4xf32>
    %c0_145 = arith.constant 0 : index
    %c0_146 = arith.constant 0 : index
    %317 = vector.load %arg19[%c0_145, %c0_146] : memref<1x4xf32, #tpu.memory_space<vmem>>, vector<1x4xf32>
    %318 = arith.addf %316, %317 : vector<1x4xf32>
    %c0_147 = arith.constant 0 : index
    %c0_148 = arith.constant 0 : index
    %c0_149 = arith.constant 0 : index
    %319 = vector.load %arg20[%c0_147, %c0_148, %c0_149] : memref<1x1x4xf32, #tpu.memory_space<vmem>>, vector<1x1x4xf32>
    %320 = vector.shape_cast %319 : vector<1x1x4xf32> to vector<1x4xf32>
    %321 = vector.shape_cast %318 : vector<1x4xf32> to vector<1x1x4xf32>
    tpu.vector_store %arg20[%c0_147, %c0_148, %c0_149], %321 {strides = array<i32>} : memref<1x1x4xf32, #tpu.memory_space<vmem>>, vector<1x1x4xf32>,
    return
  }
  func.func @transform_0(%arg0: i32) -> (i32, i32, i32) {
    %c0_i32 = arith.constant 0 : i32
    %c0_i32_0 = arith.constant 0 : i32
    %c0_i32_1 = arith.constant 0 : i32
    return %arg0, %c0_i32, %c0_i32_0 : i32, i32, i32
  }
  func.func @transform_1(%arg0: i32) -> (i32, i32) {
    %c0_i32 = arith.constant 0 : i32
    %c0_i32_0 = arith.constant 0 : i32
    %c0_i32_1 = arith.constant 0 : i32
    return %c0_i32, %c0_i32_0 : i32, i32
  }
  func.func @transform_2(%arg0: i32) -> (i32, i32) {
    %c0_i32 = arith.constant 0 : i32
    %c0_i32_0 = arith.constant 0 : i32
    %c0_i32_1 = arith.constant 0 : i32
    return %c0_i32, %c0_i32_0 : i32, i32
  }
  func.func @transform_3(%arg0: i32) -> (i32, i32, i32) {
    %c0_i32 = arith.constant 0 : i32
    %c0_i32_0 = arith.constant 0 : i32
    %c0_i32_1 = arith.constant 0 : i32
    %c0_i32_2 = arith.constant 0 : i32
    return %c0_i32, %c0_i32_0, %c0_i32_1 : i32, i32, i32
  }
  func.func @transform_4(%arg0: i32) -> (i32, i32, i32) {
    %c0_i32 = arith.constant 0 : i32
    %c0_i32_0 = arith.constant 0 : i32
    %c0_i32_1 = arith.constant 0 : i32
    %c0_i32_2 = arith.constant 0 : i32
    return %c0_i32, %c0_i32_0, %c0_i32_1 : i32, i32, i32
  }
  func.func @transform_5(%arg0: i32) -> (i32, i32, i32) {
    %c0_i32 = arith.constant 0 : i32
    %c0_i32_0 = arith.constant 0 : i32
    %c0_i32_1 = arith.constant 0 : i32
    %c0_i32_2 = arith.constant 0 : i32
    return %c0_i32, %c0_i32_0, %c0_i32_1 : i32, i32, i32
  }
  func.func @transform_6(%arg0: i32) -> (i32, i32, i32) {
    %c0_i32 = arith.constant 0 : i32
    %c0_i32_0 = arith.constant 0 : i32
    %c0_i32_1 = arith.constant 0 : i32
    %c0_i32_2 = arith.constant 0 : i32
    return %c0_i32, %c0_i32_0, %c0_i32_1 : i32, i32, i32
  }
  func.func @transform_7(%arg0: i32) -> (i32, i32, i32) {
    %c0_i32 = arith.constant 0 : i32
    %c0_i32_0 = arith.constant 0 : i32
    %c0_i32_1 = arith.constant 0 : i32
    %c0_i32_2 = arith.constant 0 : i32
    return %c0_i32, %c0_i32_0, %c0_i32_1 : i32, i32, i32
  }
  func.func @transform_8(%arg0: i32) -> (i32, i32, i32) {
    %c0_i32 = arith.constant 0 : i32
    %c0_i32_0 = arith.constant 0 : i32
    %c0_i32_1 = arith.constant 0 : i32
    %c0_i32_2 = arith.constant 0 : i32
    return %c0_i32, %c0_i32_0, %c0_i32_1 : i32, i32, i32
  }
  func.func @transform_9(%arg0: i32) -> (i32, i32, i32) {
    %c0_i32 = arith.constant 0 : i32
    %c0_i32_0 = arith.constant 0 : i32
    %c0_i32_1 = arith.constant 0 : i32
    %c0_i32_2 = arith.constant 0 : i32
    return %c0_i32, %c0_i32_0, %c0_i32_1 : i32, i32, i32
  }
  func.func @transform_10(%arg0: i32) -> (i32, i32, i32) {
    %c0_i32 = arith.constant 0 : i32
    %c0_i32_0 = arith.constant 0 : i32
    %c0_i32_1 = arith.constant 0 : i32
    %c0_i32_2 = arith.constant 0 : i32
    return %c0_i32, %c0_i32_0, %c0_i32_1 : i32, i32, i32
  }
  func.func @transform_11(%arg0: i32) -> (i32, i32, i32) {
    %c0_i32 = arith.constant 0 : i32
    %c0_i32_0 = arith.constant 0 : i32
    %c0_i32_1 = arith.constant 0 : i32
    %c0_i32_2 = arith.constant 0 : i32
    return %c0_i32, %c0_i32_0, %c0_i32_1 : i32, i32, i32
  }
  func.func @transform_12(%arg0: i32) -> (i32, i32, i32) {
    %c0_i32 = arith.constant 0 : i32
    %c0_i32_0 = arith.constant 0 : i32
    %c0_i32_1 = arith.constant 0 : i32
    %c0_i32_2 = arith.constant 0 : i32
    return %c0_i32, %c0_i32_0, %c0_i32_1 : i32, i32, i32
  }
  func.func @transform_13(%arg0: i32) -> (i32, i32, i32) {
    %c0_i32 = arith.constant 0 : i32
    %c0_i32_0 = arith.constant 0 : i32
    %c0_i32_1 = arith.constant 0 : i32
    %c0_i32_2 = arith.constant 0 : i32
    return %c0_i32, %c0_i32_0, %c0_i32_1 : i32, i32, i32
  }
  func.func @transform_14(%arg0: i32) -> (i32, i32, i32) {
    %c0_i32 = arith.constant 0 : i32
    %c0_i32_0 = arith.constant 0 : i32
    %c0_i32_1 = arith.constant 0 : i32
    %c0_i32_2 = arith.constant 0 : i32
    return %c0_i32, %c0_i32_0, %c0_i32_1 : i32, i32, i32
  }
  func.func @transform_15(%arg0: i32) -> (i32, i32) {
    %c0_i32 = arith.constant 0 : i32
    %c0_i32_0 = arith.constant 0 : i32
    %c0_i32_1 = arith.constant 0 : i32
    return %c0_i32, %c0_i32_0 : i32, i32
  }
  func.func @transform_16(%arg0: i32) -> (i32, i32) {
    %c0_i32 = arith.constant 0 : i32
    %c0_i32_0 = arith.constant 0 : i32
    %c0_i32_1 = arith.constant 0 : i32
    return %c0_i32, %c0_i32_0 : i32, i32
  }
  func.func @transform_17(%arg0: i32) -> (i32, i32) {
    %c0_i32 = arith.constant 0 : i32
    %c0_i32_0 = arith.constant 0 : i32
    %c0_i32_1 = arith.constant 0 : i32
    return %c0_i32, %c0_i32_0 : i32, i32
  }
  func.func @transform_18(%arg0: i32) -> (i32, i32) {
    %c0_i32 = arith.constant 0 : i32
    %c0_i32_0 = arith.constant 0 : i32
    %c0_i32_1 = arith.constant 0 : i32
    return %c0_i32, %c0_i32_0 : i32, i32
  }
  func.func @transform_19(%arg0: i32) -> (i32, i32, i32) {
    %c0_i32 = arith.constant 0 : i32
    %c0_i32_0 = arith.constant 0 : i32
    %c0_i32_1 = arith.constant 0 : i32
    return %arg0, %c0_i32, %c0_i32_0 : i32, i32, i32
  }
}

</mosaic_0001>

<llo_original>
// kernel: vit_forward.1
$region0: #{vit_forward.1}
  #allocation0 [shape = 'u32[]', space=smem, size = 0x4, offset = 0x4, fixed_abs, tag = 'smem constant byte address 0x4 - core index']
  #allocation1 [shape = 'u32[144,128]{1,0:T(1,128)}', space=vmem, size = 0x12000, scoped, tag = 'internal scratch']
  %s0 = inlined_call_operand.vmem [shape: f32[2,17,48], index: 0, kind: input, shape index: {}]
  %s1 = inlined_call_operand.vmem [shape: f32[48,32], index: 1, kind: input, shape index: {}]
  %s2 = inlined_call_operand.vmem [shape: f32[17,32], index: 2, kind: input, shape index: {}]
  %s3 = inlined_call_operand.vmem [shape: f32[2,1,32], index: 3, kind: input, shape index: {}]
  %s4 = inlined_call_operand.vmem [shape: f32[2,1,32], index: 4, kind: input, shape index: {}]
  %s5 = inlined_call_operand.vmem [shape: f32[2,32,96], index: 5, kind: input, shape index: {}]
  %s6 = inlined_call_operand.vmem [shape: f32[2,1,96], index: 6, kind: input, shape index: {}]
  %s7 = inlined_call_operand.vmem [shape: f32[2,32,32], index: 7, kind: input, shape index: {}]
  %s8 = inlined_call_operand.vmem [shape: f32[2,1,32], index: 8, kind: input, shape index: {}]
  %s9 = inlined_call_operand.vmem [shape: f32[2,1,32], index: 9, kind: input, shape index: {}]
  %s10 = inlined_call_operand.vmem [shape: f32[2,1,32], index: 10, kind: input, shape index: {}]
  %s11 = inlined_call_operand.vmem [shape: f32[2,32,64], index: 11, kind: input, shape index: {}]
  %s12 = inlined_call_operand.vmem [shape: f32[2,1,64], index: 12, kind: input, shape index: {}]
  %s13 = inlined_call_operand.vmem [shape: f32[2,64,32], index: 13, kind: input, shape index: {}]
  %s14 = inlined_call_operand.vmem [shape: f32[2,1,32], index: 14, kind: input, shape index: {}]
  %s15 = inlined_call_operand.vmem [shape: f32[1,32], index: 15, kind: input, shape index: {}]
  %s16 = inlined_call_operand.vmem [shape: f32[1,32], index: 16, kind: input, shape index: {}]
  %s17 = inlined_call_operand.vmem [shape: f32[32,4], index: 17, kind: input, shape index: {}]
  %s18 = inlined_call_operand.vmem [shape: f32[1,4], index: 18, kind: input, shape index: {}]
  %s19 = inlined_call_operand.hbm [shape: f32[2,1,4], index: 19, kind: output, shape index: {}]
  %s20 = sld [smem:[#allocation0]]
  $region109: #{vit_forward.1} parent=0
    _
  %s22 = ssub.s32 1, %s20
  %s23 = scalar_select 0, %s22, %s20
  $region1: #{vit_forward.1} parent=0
    #allocation2 [shape = 'u8[1024]{0}', space=vmem, size = 0x400, scoped, tag = 'output window, operand 0']
    #allocation3 [shape = 's32[2]{0}', space=sflag, size = 0x8, scoped, tag = 'scoped memory for vit_forward.1']
    %24 = vsyncpa [#allocation3], 0
    %s25 = scalar_lea.sflag [#allocation3], 1
    %26 = vsyncpa %s25, 0
    loop: start=0, step=1, limit=4
    $region2: #{vit_forward.1} parent=1 // loop_pre_header
      _
    $region3: #{vit_forward.1} parent=1 // loop_header
      %s28 = sphi 0, %s32
      %p29 = scmp.ge.s32.totalorder %s28, 4
      %s38 = sphi 0, %s40
      %s41 = sphi 0, %s38
      %s42 = sphi 0, %s41
      %s58 = sphi 0, %s42
      %s62 = sphi 0, %s62
      %s64 = sphi 0, %s62
      %s65 = sphi 0, %s64
      %s79 = sphi 0, %s65
      %s83 = sphi 0, %s83
      %s85 = sphi 0, %s83
      %s86 = sphi 0, %s85
      %s100 = sphi 0, %s86
      %s104 = sphi 0, %s104
      %s106 = sphi 0, %s104
      %s107 = sphi 0, %s106
      %s121 = sphi 0, %s107
      %s125 = sphi 0, %s125
      %s127 = sphi 0, %s125
      %s128 = sphi 0, %s127
      %s142 = sphi 0, %s128
      %s146 = sphi 0, %s146
      %s148 = sphi 0, %s146
      %s149 = sphi 0, %s148
      %s163 = sphi 0, %s149
      %s167 = sphi 0, %s167
      %s169 = sphi 0, %s167
      %s170 = sphi 0, %s169
      %s184 = sphi 0, %s170
      %s188 = sphi 0, %s188
      %s190 = sphi 0, %s188
      %s191 = sphi 0, %s190
      %s205 = sphi 0, %s191
      %s209 = sphi 0, %s209
      %s211 = sphi 0, %s209
      %s212 = sphi 0, %s211
      %s226 = sphi 0, %s212
      %s230 = sphi 0, %s230
      %s232 = sphi 0, %s230
      %s233 = sphi 0, %s232
      %s247 = sphi 0, %s233
      %s251 = sphi 0, %s251
      %s253 = sphi 0, %s251
      %s254 = sphi 0, %s253
      %s268 = sphi 0, %s254
      %s272 = sphi 0, %s272
      %s274 = sphi 0, %s272
      %s275 = sphi 0, %s274
      %s289 = sphi 0, %s275
      %s293 = sphi 0, %s293
      %s295 = sphi 0, %s293
      %s296 = sphi 0, %s295
      %s310 = sphi 0, %s296
      %s314 = sphi 0, %s314
      %s316 = sphi 0, %s314
      %s317 = sphi 0, %s316
      %s331 = sphi 0, %s317
      %s335 = sphi 0, %s335
      %s337 = sphi 0, %s335
      %s338 = sphi 0, %s337
      %s352 = sphi 0, %s338
      %s356 = sphi 0, %s356
      %s358 = sphi 0, %s356
      %s359 = sphi 0, %s358
      %s373 = sphi 0, %s359
      %s377 = sphi 0, %s377
      %s379 = sphi 0, %s377
      %s380 = sphi 0, %s379
      %s394 = sphi 0, %s380
      %s398 = sphi 0, %s398
      %s400 = sphi 0, %s398
      %s401 = sphi 0, %s400
      %s415 = sphi 0, %s401
      %s419 = sphi 0, %s419
      %s421 = sphi 0, %s419
      %s422 = sphi 0, %s421
      %s436 = sphi 0, %s422
      %s442 = sphi 0, %s444
      %s445 = sphi 0, %s442
      %s446 = sphi 0, %s445
      %s462 = sphi 0, %s446
    $region4: #{vit_forward.1} parent=1 // loop_header_branch
      %31 = sbr.rel (%p29) target = $region8
    $region5: #{vit_forward.1} parent=1 // loop_body
      %s33 = ssub.s32 %s28, 1
      %s34 = ssub.s32 %s28, 2
      %s35 = sadd.s32 %s28, 1
      %s36 = ssub.s32 %s28, %s35
      %p37 = scmp.eq.s32.totalorder %s36, 0
      %s39 = sadd.s32 %s38, 1
      %s40 = scalar_select %p37, %s38, %s39
      %p43 = pneg %p37
      %p44 = scmp.eq.s32.totalorder %s28, 1
      %p45 = por %p43, %p44
      %p46 = scmp.ne.s32.totalorder %s38, %s41
      %p47 = scmp.eq.s32.totalorder %s28, 0
      %p48 = por %p46, %p47
      %p49 = scmp.ne.s32.totalorder %s38, %s41
      %p50 = scmp.eq.s32.totalorder %s33, 1
      %p51 = por %p49, %p50
      %p52 = scmp.ne.s32.totalorder %s41, %s42
      %p53 = scmp.eq.s32.totalorder %s33, 0
      %p54 = por %p52, %p53
      %p55 = scmp.ne.s32.totalorder %s41, %s42
      %p56 = scmp.eq.s32.totalorder %s34, 1
      %p57 = por %p55, %p56
      %p59 = scmp.ne.s32.totalorder %s42, %s58
      %p60 = scmp.eq.s32.totalorder %s34, 0
      %p61 = por %p59, %p60
      %s63 = sadd.s32 %s62, 1
      %p66 = scmp.eq.s32.totalorder %s28, 1
      %p67 = scmp.ne.s32.totalorder %s62, %s64
      %p68 = scmp.eq.s32.totalorder %s28, 0
      %p69 = por %p67, %p68
      %p70 = scmp.ne.s32.totalorder %s62, %s64
      %p71 = scmp.eq.s32.totalorder %s33, 1
      %p72 = por %p70, %p71
      %p73 = scmp.ne.s32.totalorder %s64, %s65
      %p74 = scmp.eq.s32.totalorder %s33, 0
      %p75 = por %p73, %p74
      %p76 = scmp.ne.s32.totalorder %s64, %s65
      %p77 = scmp.eq.s32.totalorder %s34, 1
      %p78 = por %p76, %p77
      %p80 = scmp.ne.s32.totalorder %s65, %s79
      %p81 = scmp.eq.s32.totalorder %s34, 0
      %p82 = por %p80, %p81
      %s84 = sadd.s32 %s83, 1
      %p87 = scmp.eq.s32.totalorder %s28, 1
      %p88 = scmp.ne.s32.totalorder %s83, %s85
      %p89 = scmp.eq.s32.totalorder %s28, 0
      %p90 = por %p88, %p89
      %p91 = scmp.ne.s32.totalorder %s83, %s85
      %p92 = scmp.eq.s32.totalorder %s33, 1
      %p93 = por %p91, %p92
      %p94 = scmp.ne.s32.totalorder %s85, %s86
      %p95 = scmp.eq.s32.totalorder %s33, 0
      %p96 = por %p94, %p95
      %p97 = scmp.ne.s32.totalorder %s85, %s86
      %p98 = scmp.eq.s32.totalorder %s34, 1
      %p99 = por %p97, %p98
      %p101 = scmp.ne.s32.totalorder %s86, %s100
      %p102 = scmp.eq.s32.totalorder %s34, 0
      %p103 = por %p101, %p102
      %s105 = sadd.s32 %s104, 1
      %p108 = scmp.eq.s32.totalorder %s28, 1
      %p109 = scmp.ne.s32.totalorder %s104, %s106
      %p110 = scmp.eq.s32.totalorder %s28, 0
      %p111 = por %p109, %p110
      %p112 = scmp.ne.s32.totalorder %s104, %s106
      %p113 = scmp.eq.s32.totalorder %s33, 1
      %p114 = por %p112, %p113
      %p115 = scmp.ne.s32.totalorder %s106, %s107
      %p116 = scmp.eq.s32.totalorder %s33, 0
      %p117 = por %p115, %p116
      %p118 = scmp.ne.s32.totalorder %s106, %s107
      %p119 = scmp.eq.s32.totalorder %s34, 1
      %p120 = por %p118, %p119
      %p122 = scmp.ne.s32.totalorder %s107, %s121
      %p123 = scmp.eq.s32.totalorder %s34, 0
      %p124 = por %p122, %p123
      %s126 = sadd.s32 %s125, 1
      %p129 = scmp.eq.s32.totalorder %s28, 1
      %p130 = scmp.ne.s32.totalorder %s125, %s127
      %p131 = scmp.eq.s32.totalorder %s28, 0
      %p132 = por %p130, %p131
      %p133 = scmp.ne.s32.totalorder %s125, %s127
      %p134 = scmp.eq.s32.totalorder %s33, 1
      %p135 = por %p133, %p134
      %p136 = scmp.ne.s32.totalorder %s127, %s128
      %p137 = scmp.eq.s32.totalorder %s33, 0
      %p138 = por %p136, %p137
      %p139 = scmp.ne.s32.totalorder %s127, %s128
      %p140 = scmp.eq.s32.totalorder %s34, 1
      %p141 = por %p139, %p140
      %p143 = scmp.ne.s32.totalorder %s128, %s142
      %p144 = scmp.eq.s32.totalorder %s34, 0
      %p145 = por %p143, %p144
      %s147 = sadd.s32 %s146, 1
      %p150 = scmp.eq.s32.totalorder %s28, 1
      %p151 = scmp.ne.s32.totalorder %s146, %s148
      %p152 = scmp.eq.s32.totalorder %s28, 0
      %p153 = por %p151, %p152
      %p154 = scmp.ne.s32.totalorder %s146, %s148
      %p155 = scmp.eq.s32.totalorder %s33, 1
      %p156 = por %p154, %p155
      %p157 = scmp.ne.s32.totalorder %s148, %s149
      %p158 = scmp.eq.s32.totalorder %s33, 0
      %p159 = por %p157, %p158
      %p160 = scmp.ne.s32.totalorder %s148, %s149
      %p161 = scmp.eq.s32.totalorder %s34, 1
      %p162 = por %p160, %p161
      %p164 = scmp.ne.s32.totalorder %s149, %s163
      %p165 = scmp.eq.s32.totalorder %s34, 0
      %p166 = por %p164, %p165
      %s168 = sadd.s32 %s167, 1
      %p171 = scmp.eq.s32.totalorder %s28, 1
      %p172 = scmp.ne.s32.totalorder %s167, %s169
      %p173 = scmp.eq.s32.totalorder %s28, 0
      %p174 = por %p172, %p173
      %p175 = scmp.ne.s32.totalorder %s167, %s169
      %p176 = scmp.eq.s32.totalorder %s33, 1
      %p177 = por %p175, %p176
      %p178 = scmp.ne.s32.totalorder %s169, %s170
      %p179 = scmp.eq.s32.totalorder %s33, 0
      %p180 = por %p178, %p179
      %p181 = scmp.ne.s32.totalorder %s169, %s170
      %p182 = scmp.eq.s32.totalorder %s34, 1
      %p183 = por %p181, %p182
      %p185 = scmp.ne.s32.totalorder %s170, %s184
      %p186 = scmp.eq.s32.totalorder %s34, 0
      %p187 = por %p185, %p186
      %s189 = sadd.s32 %s188, 1
      %p192 = scmp.eq.s32.totalorder %s28, 1
      %p193 = scmp.ne.s32.totalorder %s188, %s190
      %p194 = scmp.eq.s32.totalorder %s28, 0
      %p195 = por %p193, %p194
      %p196 = scmp.ne.s32.totalorder %s188, %s190
      %p197 = scmp.eq.s32.totalorder %s33, 1
      %p198 = por %p196, %p197
      %p199 = scmp.ne.s32.totalorder %s190, %s191
      %p200 = scmp.eq.s32.totalorder %s33, 0
      %p201 = por %p199, %p200
      %p202 = scmp.ne.s32.totalorder %s190, %s191
      %p203 = scmp.eq.s32.totalorder %s34, 1
      %p204 = por %p202, %p203
      %p206 = scmp.ne.s32.totalorder %s191, %s205
      %p207 = scmp.eq.s32.totalorder %s34, 0
      %p208 = por %p206, %p207
      %s210 = sadd.s32 %s209, 1
      %p213 = scmp.eq.s32.totalorder %s28, 1
      %p214 = scmp.ne.s32.totalorder %s209, %s211
      %p215 = scmp.eq.s32.totalorder %s28, 0
      %p216 = por %p214, %p215
      %p217 = scmp.ne.s32.totalorder %s209, %s211
      %p218 = scmp.eq.s32.totalorder %s33, 1
      %p219 = por %p217, %p218
      %p220 = scmp.ne.s32.totalorder %s211, %s212
      %p221 = scmp.eq.s32.totalorder %s33, 0
      %p222 = por %p220, %p221
      %p223 = scmp.ne.s32.totalorder %s211, %s212
      %p224 = scmp.eq.s32.totalorder %s34, 1
      %p225 = por %p223, %p224
      %p227 = scmp.ne.s32.totalorder %s212, %s226
      %p228 = scmp.eq.s32.totalorder %s34, 0
      %p229 = por %p227, %p228
      %s231 = sadd.s32 %s230, 1
      %p234 = scmp.eq.s32.totalorder %s28, 1
      %p235 = scmp.ne.s32.totalorder %s230, %s232
      %p236 = scmp.eq.s32.totalorder %s28, 0
      %p237 = por %p235, %p236
      %p238 = scmp.ne.s32.totalorder %s230, %s232
      %p239 = scmp.eq.s32.totalorder %s33, 1
      %p240 = por %p238, %p239
      %p241 = scmp.ne.s32.totalorder %s232, %s233
      %p242 = scmp.eq.s32.totalorder %s33, 0
      %p243 = por %p241, %p242
      %p244 = scmp.ne.s32.totalorder %s232, %s233
      %p245 = scmp.eq.s32.totalorder %s34, 1
      %p246 = por %p244, %p245
      %p248 = scmp.ne.s32.totalorder %s233, %s247
      %p249 = scmp.eq.s32.totalorder %s34, 0
      %p250 = por %p248, %p249
      %s252 = sadd.s32 %s251, 1
      %p255 = scmp.eq.s32.totalorder %s28, 1
      %p256 = scmp.ne.s32.totalorder %s251, %s253
      %p257 = scmp.eq.s32.totalorder %s28, 0
      %p258 = por %p256, %p257
      %p259 = scmp.ne.s32.totalorder %s251, %s253
      %p260 = scmp.eq.s32.totalorder %s33, 1
      %p261 = por %p259, %p260
      %p262 = scmp.ne.s32.totalorder %s253, %s254
      %p263 = scmp.eq.s32.totalorder %s33, 0
      %p264 = por %p262, %p263
      %p265 = scmp.ne.s32.totalorder %s253, %s254
      %p266 = scmp.eq.s32.totalorder %s34, 1
      %p267 = por %p265, %p266
      %p269 = scmp.ne.s32.totalorder %s254, %s268
      %p270 = scmp.eq.s32.totalorder %s34, 0
      %p271 = por %p269, %p270
      %s273 = sadd.s32 %s272, 1
      %p276 = scmp.eq.s32.totalorder %s28, 1
      %p277 = scmp.ne.s32.totalorder %s272, %s274
      %p278 = scmp.eq.s32.totalorder %s28, 0
      %p279 = por %p277, %p278
      %p280 = scmp.ne.s32.totalorder %s272, %s274
      %p281 = scmp.eq.s32.totalorder %s33, 1
      %p282 = por %p280, %p281
      %p283 = scmp.ne.s32.totalorder %s274, %s275
      %p284 = scmp.eq.s32.totalorder %s33, 0
      %p285 = por %p283, %p284
      %p286 = scmp.ne.s32.totalorder %s274, %s275
      %p287 = scmp.eq.s32.totalorder %s34, 1
      %p288 = por %p286, %p287
      %p290 = scmp.ne.s32.totalorder %s275, %s289
      %p291 = scmp.eq.s32.totalorder %s34, 0
      %p292 = por %p290, %p291
      %s294 = sadd.s32 %s293, 1
      %p297 = scmp.eq.s32.totalorder %s28, 1
      %p298 = scmp.ne.s32.totalorder %s293, %s295
      %p299 = scmp.eq.s32.totalorder %s28, 0
      %p300 = por %p298, %p299
      %p301 = scmp.ne.s32.totalorder %s293, %s295
      %p302 = scmp.eq.s32.totalorder %s33, 1
      %p303 = por %p301, %p302
      %p304 = scmp.ne.s32.totalorder %s295, %s296
      %p305 = scmp.eq.s32.totalorder %s33, 0
      %p306 = por %p304, %p305
      %p307 = scmp.ne.s32.totalorder %s295, %s296
      %p308 = scmp.eq.s32.totalorder %s34, 1
      %p309 = por %p307, %p308
      %p311 = scmp.ne.s32.totalorder %s296, %s310
      %p312 = scmp.eq.s32.totalorder %s34, 0
      %p313 = por %p311, %p312
      %s315 = sadd.s32 %s314, 1
      %p318 = scmp.eq.s32.totalorder %s28, 1
      %p319 = scmp.ne.s32.totalorder %s314, %s316
      %p320 = scmp.eq.s32.totalorder %s28, 0
      %p321 = por %p319, %p320
      %p322 = scmp.ne.s32.totalorder %s314, %s316
      %p323 = scmp.eq.s32.totalorder %s33, 1
      %p324 = por %p322, %p323
      %p325 = scmp.ne.s32.totalorder %s316, %s317
      %p326 = scmp.eq.s32.totalorder %s33, 0
      %p327 = por %p325, %p326
      %p328 = scmp.ne.s32.totalorder %s316, %s317
      %p329 = scmp.eq.s32.totalorder %s34, 1
      %p330 = por %p328, %p329
      %p332 = scmp.ne.s32.totalorder %s317, %s331
      %p333 = scmp.eq.s32.totalorder %s34, 0
      %p334 = por %p332, %p333
      %s336 = sadd.s32 %s335, 1
      %p339 = scmp.eq.s32.totalorder %s28, 1
      %p340 = scmp.ne.s32.totalorder %s335, %s337
      %p341 = scmp.eq.s32.totalorder %s28, 0
      %p342 = por %p340, %p341
      %p343 = scmp.ne.s32.totalorder %s335, %s337
      %p344 = scmp.eq.s32.totalorder %s33, 1
      %p345 = por %p343, %p344
      %p346 = scmp.ne.s32.totalorder %s337, %s338
      %p347 = scmp.eq.s32.totalorder %s33, 0
      %p348 = por %p346, %p347
      %p349 = scmp.ne.s32.totalorder %s337, %s338
      %p350 = scmp.eq.s32.totalorder %s34, 1
      %p351 = por %p349, %p350
      %p353 = scmp.ne.s32.totalorder %s338, %s352
      %p354 = scmp.eq.s32.totalorder %s34, 0
      %p355 = por %p353, %p354
      %s357 = sadd.s32 %s356, 1
      %p360 = scmp.eq.s32.totalorder %s28, 1
      %p361 = scmp.ne.s32.totalorder %s356, %s358
      %p362 = scmp.eq.s32.totalorder %s28, 0
      %p363 = por %p361, %p362
      %p364 = scmp.ne.s32.totalorder %s356, %s358
      %p365 = scmp.eq.s32.totalorder %s33, 1
      %p366 = por %p364, %p365
      %p367 = scmp.ne.s32.totalorder %s358, %s359
      %p368 = scmp.eq.s32.totalorder %s33, 0
      %p369 = por %p367, %p368
      %p370 = scmp.ne.s32.totalorder %s358, %s359
      %p371 = scmp.eq.s32.totalorder %s34, 1
      %p372 = por %p370, %p371
      %p374 = scmp.ne.s32.totalorder %s359, %s373
      %p375 = scmp.eq.s32.totalorder %s34, 0
      %p376 = por %p374, %p375
      %s378 = sadd.s32 %s377, 1
      %p381 = scmp.eq.s32.totalorder %s28, 1
      %p382 = scmp.ne.s32.totalorder %s377, %s379
      %p383 = scmp.eq.s32.totalorder %s28, 0
      %p384 = por %p382, %p383
      %p385 = scmp.ne.s32.totalorder %s377, %s379
      %p386 = scmp.eq.s32.totalorder %s33, 1
      %p387 = por %p385, %p386
      %p388 = scmp.ne.s32.totalorder %s379, %s380
      %p389 = scmp.eq.s32.totalorder %s33, 0
      %p390 = por %p388, %p389
      %p391 = scmp.ne.s32.totalorder %s379, %s380
      %p392 = scmp.eq.s32.totalorder %s34, 1
      %p393 = por %p391, %p392
      %p395 = scmp.ne.s32.totalorder %s380, %s394
      %p396 = scmp.eq.s32.totalorder %s34, 0
      %p397 = por %p395, %p396
      %s399 = sadd.s32 %s398, 1
      %p402 = scmp.eq.s32.totalorder %s28, 1
      %p403 = scmp.ne.s32.totalorder %s398, %s400
      %p404 = scmp.eq.s32.totalorder %s28, 0
      %p405 = por %p403, %p404
      %p406 = scmp.ne.s32.totalorder %s398, %s400
      %p407 = scmp.eq.s32.totalorder %s33, 1
      %p408 = por %p406, %p407
      %p409 = scmp.ne.s32.totalorder %s400, %s401
      %p410 = scmp.eq.s32.totalorder %s33, 0
      %p411 = por %p409, %p410
      %p412 = scmp.ne.s32.totalorder %s400, %s401
      %p413 = scmp.eq.s32.totalorder %s34, 1
      %p414 = por %p412, %p413
      %p416 = scmp.ne.s32.totalorder %s401, %s415
      %p417 = scmp.eq.s32.totalorder %s34, 0
      %p418 = por %p416, %p417
      %s420 = sadd.s32 %s419, 1
      %p423 = scmp.eq.s32.totalorder %s28, 1
      %p424 = scmp.ne.s32.totalorder %s419, %s421
      %p425 = scmp.eq.s32.totalorder %s28, 0
      %p426 = por %p424, %p425
      %p427 = scmp.ne.s32.totalorder %s419, %s421
      %p428 = scmp.eq.s32.totalorder %s33, 1
      %p429 = por %p427, %p428
      %p430 = scmp.ne.s32.totalorder %s421, %s422
      %p431 = scmp.eq.s32.totalorder %s33, 0
      %p432 = por %p430, %p431
      %p433 = scmp.ne.s32.totalorder %s421, %s422
      %p434 = scmp.eq.s32.totalorder %s34, 1
      %p435 = por %p433, %p434
      %p437 = scmp.ne.s32.totalorder %s422, %s436
      %p438 = scmp.eq.s32.totalorder %s34, 0
      %p439 = por %p437, %p438
      %s440 = ssub.s32 %s28, %s35
      %p441 = scmp.eq.s32.totalorder %s440, 0
      %s443 = sadd.s32 %s442, 1
      %s444 = scalar_select %p441, %s442, %s443
      %p447 = pneg %p441
      %p448 = scmp.eq.s32.totalorder %s28, 1
      %p449 = por %p447, %p448
      %p450 = scmp.ne.s32.totalorder %s442, %s445
      %p451 = scmp.eq.s32.totalorder %s28, 0
      %p452 = por %p450, %p451
      %p453 = scmp.ne.s32.totalorder %s442, %s445
      %p454 = scmp.eq.s32.totalorder %s33, 1
      %p455 = por %p453, %p454
      %p456 = scmp.ne.s32.totalorder %s445, %s446
      %p457 = scmp.eq.s32.totalorder %s33, 0
      %p458 = por %p456, %p457
      %p459 = scmp.ne.s32.totalorder %s445, %s446
      %p460 = scmp.eq.s32.totalorder %s34, 1
      %p461 = por %p459, %p460
      %p463 = scmp.ne.s32.totalorder %s446, %s462
      %p464 = scmp.eq.s32.totalorder %s34, 0
      %p465 = por %p463, %p464
      %p466 = scmp.le.s32.totalorder 1, %s28
      %p467 = scmp.lt.s32.totalorder %s28, 3
      %p468 = pnand %p466, %p467
      %p469 = pneg %p468
      // Predicated region
      $region9: #{vit_forward.1} parent=5 // pred_check
        _
      $region10: #{vit_forward.1} parent=5 // pred_check_branch
        %471 = sbr.rel (%p468) target = $region12
      $region11: #{vit_forward.1} parent=5 // pred_region
        %s472 = ssub.s32 %s28, 1
        // Predicated region
        $region13: #{vit_forward.1} parent=11 // pred_check
          %p473 = pneg %p75
        $region14: #{vit_forward.1} parent=11 // pred_check_branch
          %475 = sbr.rel (%p473) target = $region16
        $region15: #{vit_forward.1} parent=11 // pred_region
          _
        $region16: #{vit_forward.1} parent=11 // pred_fallthru
          _
        // Predicated region
        $region17: #{vit_forward.1} parent=11 // pred_check
          %p476 = pneg %p96
        $region18: #{vit_forward.1} parent=11 // pred_check_branch
          %478 = sbr.rel (%p476) target = $region20
        $region19: #{vit_forward.1} parent=11 // pred_region
          _
        $region20: #{vit_forward.1} parent=11 // pred_fallthru
          _
        // Predicated region
        $region21: #{vit_forward.1} parent=11 // pred_check
          %p479 = pneg %p117
        $region22: #{vit_forward.1} parent=11 // pred_check_branch
          %481 = sbr.rel (%p479) target = $region24
        $region23: #{vit_forward.1} parent=11 // pred_region
          _
        $region24: #{vit_forward.1} parent=11 // pred_fallthru
          _
        // Predicated region
        $region25: #{vit_forward.1} parent=11 // pred_check
          %p482 = pneg %p138
        $region26: #{vit_forward.1} parent=11 // pred_check_branch
          %484 = sbr.rel (%p482) target = $region28
        $region27: #{vit_forward.1} parent=11 // pred_region
          _
        $region28: #{vit_forward.1} parent=11 // pred_fallthru
          _
        // Predicated region
        $region29: #{vit_forward.1} parent=11 // pred_check
          %p485 = pneg %p159
        $region30: #{vit_forward.1} parent=11 // pred_check_branch
          %487 = sbr.rel (%p485) target = $region32
        $region31: #{vit_forward.1} parent=11 // pred_region
          _
        $region32: #{vit_forward.1} parent=11 // pred_fallthru
          _
        // Predicated region
        $region33: #{vit_forward.1} parent=11 // pred_check
          %p488 = pneg %p180
        $region34: #{vit_forward.1} parent=11 // pred_check_branch
          %490 = sbr.rel (%p488) target = $region36
        $region35: #{vit_forward.1} parent=11 // pred_region
          _
        $region36: #{vit_forward.1} parent=11 // pred_fallthru
          _
        // Predicated region
        $region37: #{vit_forward.1} parent=11 // pred_check
          %p491 = pneg %p201
        $region38: #{vit_forward.1} parent=11 // pred_check_branch
          %493 = sbr.rel (%p491) target = $region40
        $region39: #{vit_forward.1} parent=11 // pred_region
          _
        $region40: #{vit_forward.1} parent=11 // pred_fallthru
          _
        // Predicated region
        $region41: #{vit_forward.1} parent=11 // pred_check
          %p494 = pneg %p222
        $region42: #{vit_forward.1} parent=11 // pred_check_branch
          %496 = sbr.rel (%p494) target = $region44
        $region43: #{vit_forward.1} parent=11 // pred_region
          _
        $region44: #{vit_forward.1} parent=11 // pred_fallthru
          _
        // Predicated region
        $region45: #{vit_forward.1} parent=11 // pred_check
          %p497 = pneg %p243
        $region46: #{vit_forward.1} parent=11 // pred_check_branch
          %499 = sbr.rel (%p497) target = $region48
        $region47: #{vit_forward.1} parent=11 // pred_region
          _
        $region48: #{vit_forward.1} parent=11 // pred_fallthru
          _
        // Predicated region
        $region49: #{vit_forward.1} parent=11 // pred_check
          %p500 = pneg %p264
        $region50: #{vit_forward.1} parent=11 // pred_check_branch
          %502 = sbr.rel (%p500) target = $region52
        $region51: #{vit_forward.1} parent=11 // pred_region
          _
        $region52: #{vit_forward.1} parent=11 // pred_fallthru
          _
        // Predicated region
        $region53: #{vit_forward.1} parent=11 // pred_check
          %p503 = pneg %p285
        $region54: #{vit_forward.1} parent=11 // pred_check_branch
          %505 = sbr.rel (%p503) target = $region56
        $region55: #{vit_forward.1} parent=11 // pred_region
          _
        $region56: #{vit_forward.1} parent=11 // pred_fallthru
          _
        // Predicated region
        $region57: #{vit_forward.1} parent=11 // pred_check
          %p506 = pneg %p306
        $region58: #{vit_forward.1} parent=11 // pred_check_branch
          %508 = sbr.rel (%p506) target = $region60
        $region59: #{vit_forward.1} parent=11 // pred_region
          _
        $region60: #{vit_forward.1} parent=11 // pred_fallthru
          _
        // Predicated region
        $region61: #{vit_forward.1} parent=11 // pred_check
          %p509 = pneg %p327
        $region62: #{vit_forward.1} parent=11 // pred_check_branch
          %511 = sbr.rel (%p509) target = $region64
        $region63: #{vit_forward.1} parent=11 // pred_region
          _
        $region64: #{vit_forward.1} parent=11 // pred_fallthru
          _
        // Predicated region
        $region65: #{vit_forward.1} parent=11 // pred_check
          %p512 = pneg %p348
        $region66: #{vit_forward.1} parent=11 // pred_check_branch
          %514 = sbr.rel (%p512) target = $region68
        $region67: #{vit_forward.1} parent=11 // pred_region
          _
        $region68: #{vit_forward.1} parent=11 // pred_fallthru
          _
        // Predicated region
        $region69: #{vit_forward.1} parent=11 // pred_check
          %p515 = pneg %p369
        $region70: #{vit_forward.1} parent=11 // pred_check_branch
          %517 = sbr.rel (%p515) target = $region72
        $region71: #{vit_forward.1} parent=11 // pred_region
          _
        $region72: #{vit_forward.1} parent=11 // pred_fallthru
          _
        // Predicated region
        $region73: #{vit_forward.1} parent=11 // pred_check
          %p518 = pneg %p390
        $region74: #{vit_forward.1} parent=11 // pred_check_branch
          %520 = sbr.rel (%p518) target = $region76
        $region75: #{vit_forward.1} parent=11 // pred_region
          _
        $region76: #{vit_forward.1} parent=11 // pred_fallthru
          _
        // Predicated region
        $region77: #{vit_forward.1} parent=11 // pred_check
          %p521 = pneg %p411
        $region78: #{vit_forward.1} parent=11 // pred_check_branch
          %523 = sbr.rel (%p521) target = $region80
        $region79: #{vit_forward.1} parent=11 // pred_region
          _
        $region80: #{vit_forward.1} parent=11 // pred_fallthru
          _
        // Predicated region
        $region81: #{vit_forward.1} parent=11 // pred_check
          %p524 = pneg %p432
        $region82: #{vit_forward.1} parent=11 // pred_check_branch
          %526 = sbr.rel (%p524) target = $region84
        $region83: #{vit_forward.1} parent=11 // pred_region
          _
        $region84: #{vit_forward.1} parent=11 // pred_fallthru
          _
      $region12: #{vit_forward.1} parent=5 // pred_fallthru
        _
      %p527 = scmp.lt.s32.totalorder %s28, 2
      // Predicated region
      $region85: #{vit_forward.1} parent=5 // pred_check
        %p528 = pneg %p527
      $region86: #{vit_forward.1} parent=5 // pred_check_branch
        %530 = sbr.rel (%p528) target = $region88
      $region87: #{vit_forward.1} parent=5 // pred_region
        // Predicated region
        $region89: #{vit_forward.1} parent=87 // pred_check
          %p531 = pneg %p48
        $region90: #{vit_forward.1} parent=87 // pred_check_branch
          %533 = sbr.rel (%p531) target = $region92
        $region91: #{vit_forward.1} parent=87 // pred_region
          %p534 = scmp.lt.s32.totalorder %s28, 1
          %s535 = scalar_select %p534, %s28, 1
          %s536 = smul.addr %s535, 3
          %s537 = smul.addr %s536, 8
          %s538 = scalar_lea.vmem %s0, %s537
        $region92: #{vit_forward.1} parent=87 // pred_fallthru
          _
      $region88: #{vit_forward.1} parent=5 // pred_fallthru
        _
      %p539 = scmp.le.s32.totalorder 1, %s28
      %p540 = scmp.lt.s32.totalorder %s28, 3
      %p541 = pnand %p539, %p540
      %p542 = pneg %p541
      // Predicated region
      $region93: #{vit_forward.1} parent=5 // pred_check
        _
      $region94: #{vit_forward.1} parent=5 // pred_check_branch
        %544 = sbr.rel (%p541) target = $region96
      $region95: #{vit_forward.1} parent=5 // pred_region
        %s545 = ssub.s32 %s28, 1
        %p546 = scmp.lt.s32.totalorder %s33, 1
        %s547 = scalar_select %p546, %s33, 1
        %s548 = smul.addr %s547, 3
        %s549 = smul.addr %s548, 8
        %s550 = scalar_lea.vmem %s0, %s549
        %p551 = pneg %p54
        %p552 = pneg %p51
        %p553 = pneg %p75
        %p554 = pneg %p72
        %p555 = pneg %p96
        %p556 = pneg %p93
        %p557 = pneg %p117
        %p558 = pneg %p114
        %p559 = pneg %p138
        %p560 = pneg %p135
        %p561 = pneg %p159
        %p562 = pneg %p156
        %p563 = pneg %p180
        %p564 = pneg %p177
        %p565 = pneg %p201
        %p566 = pneg %p198
        %p567 = pneg %p222
        %p568 = pneg %p219
        %p569 = pneg %p243
        %p570 = pneg %p240
        %p571 = pneg %p264
        %p572 = pneg %p261
        %p573 = pneg %p285
        %p574 = pneg %p282
        %p575 = pneg %p306
        %p576 = pneg %p303
        %p577 = pneg %p327
        %p578 = pneg %p324
        %p579 = pneg %p348
        %p580 = pneg %p345
        %p581 = pneg %p369
        %p582 = pneg %p366
        %p583 = pneg %p390
        %p584 = pneg %p387
        %p585 = pneg %p411
        %p586 = pneg %p408
        %p587 = pneg %p432
        %p588 = pneg %p429
        %p589 = pneg %p458
        %p590 = pneg %p455
        %s591 = sand.u32 %s445, 1
        %s592 = scalar_lea.sflag [#allocation3], %s591
        %s593 = sand.u32 %s445, 1
        %s594 = scalar_lea.vmem [#allocation2], %s593
        %p595 = scmp.lt.s32.totalorder %s33, 1
        %s596 = scalar_select %p595, %s33, 1
        %s597 = smul.addr %s596, 3
        %s598 = smul.addr %s597, 8
        %s599 = scalar_lea.vmem %s0, %s598
        %v601 = vld [vmem:[%s599] sm:$0xff]
        %v602 = vld [vmem:[%s599 + $0x8] sm:$0xff]
        %v603 = vld [vmem:[%s599 + $0x10] sm:$0x1]
        %v604 = vld [vmem:[%s1] sm:$0xff]
        %v605 = vld [vmem:[%s1 + $0x8] sm:$0xff]
        %v606 = vld [vmem:[%s1 + $0x10] sm:$0xff]
        %v607 = vld [vmem:[%s1 + $0x18] sm:$0xff]
        %v608 = vld [vmem:[%s1 + $0x20] sm:$0xff]
        %v609 = vld [vmem:[%s1 + $0x28] sm:$0xff]
        %v610 = vpack.c.bf16 %v602, %v601
        %v611 = vpack.c.bf16 %v603, %v603
        %v612 = vpack.c.bf16 %v605, %v604
        %v613 = vpack.c.bf16 %v607, %v606
        %v614 = vpack.c.bf16 %v609, %v608
        %v615 = vld [vmem:[%s2] sm:$0xff]
        %v616 = vld [vmem:[%s2 + $0x8] sm:$0xff]
        %v617 = vld [vmem:[%s2 + $0x10] sm:$0x1]
        %vm618 = vcmask 392192
        %v620 = vsel %vm618, %v610, 0
        %v623 = vsel %vm618, %v611, 0
        %625 = vmatprep.subr.bf16.mxu0 0
        %626 = vmatpush1.bf16.msra.mxu0 %v612
        %627 = vmatprep.subr.bf16.mxu0 0
        %628 = vmatpush1.bf16.msra.mxu0 %v613
        %629 = vmatprep.subr.bf16.mxu0 0
        %630 = vmatpush1.bf16.msra.mxu0 %v614
        %631 = vmatprep.subr.bf16.mxu0 0
        %632 = vmatpush1.bf16.msra.mxu0 0
        %633 = vmatprep.subr.bf16.mxu0 0
        %634 = vmatpush1.bf16.msra.mxu0 0
        %635 = vmatprep.subr.bf16.mxu0 0
        %636 = vmatpush1.bf16.msra.mxu0 0
        %637 = vmatprep.subr.bf16.mxu0 0
        %638 = vmatpush1.bf16.msra.mxu0 0
        %639 = vmatprep.subr.bf16.mxu0 0
        %640 = vmatpush1.bf16.msra.mxu0 0
        %641 = vmatprep.subr.bf16.mxu0 0
        %642 = vmatpush1.bf16.msra.mxu0 0
        %643 = vmatprep.subr.bf16.mxu0 0
        %644 = vmatpush1.bf16.msra.mxu0 0
        %645 = vmatprep.subr.bf16.mxu0 0
        %646 = vmatpush1.bf16.msra.mxu0 0
        %647 = vmatprep.subr.bf16.mxu0 0
        %648 = vmatpush1.bf16.msra.mxu0 0
        %649 = vmatprep.subr.bf16.mxu0 0
        %650 = vmatpush1.bf16.msra.mxu0 0
        %651 = vmatprep.subr.bf16.mxu0 0
        %652 = vmatpush1.bf16.msra.mxu0 0
        %653 = vmatprep.subr.bf16.mxu0 0
        %654 = vmatpush1.bf16.msra.mxu0 0
        %655 = vmatprep.subr.bf16.mxu0 0
        %656 = vmatpush1.bf16.msra.mxu0 0
        %657 = vmatprep.mubr.bf16.mxu0 0
        %658 = vmatmul.mubr.bf16.gmra.mrb[0].mxu0 %v620
        %v659 = vpop.f32.mrb[0].mxu0
        %v660 = vadd.f32 %v615, %v659
        %v661 = vpop.f32.mrb[0].mxu0
        %v662 = vpop.f32.mrb[0].mxu0
        %v663 = vadd.f32 %v616, %v662
        %v664 = vpop.f32.mrb[0].mxu0
        %665 = vmatprep.mubr.bf16.mxu0 0
        %666 = vmatmul.mubr.bf16.gmra.mrb[0].mxu0 %v623
        %v667 = vpop.f32.mrb[0].mxu0
        %v668 = vadd.f32 %v617, %v667
        %v669 = vpop.f32.mrb[0].mxu0
        %v670 = vpop.f32.mrb[0].mxu0
        %v671 = vpop.f32.mrb[0].mxu0
        %672 = vdwg.mxu0
        %v673 = vld [vmem:[%s3] sm:$0x1]
        %v674 = vld [vmem:[%s4] sm:$0x1]
        %vm675 = vcmask 261120
        %v676 = vsel %vm675, %v660, 0.0
        %677 = vadd.xlane.f32.xlu0 %v676
        %v678 = vpop.xlane.xlu0 %677
        %v679 = vsel %vm675, %v663, 0.0
        %680 = vadd.xlane.f32.xlu0 %v679
        %v681 = vpop.xlane.xlu0 %680
        %vm682 = vcmask 253952
        %v683 = vsel %vm682, %v668, 0.0
        %684 = vadd.xlane.f32.xlu0 %v683
        %v685 = vpop.xlane.xlu0 %684
        %v686 = vrcp.pop 32.0
        %v687 = vmul.f32 %v678, %v686
        %v688 = vmul.f32 %v681, %v686
        %v689 = vmul.f32 %v685, %v686
        %v690 = vsub.f32 %v660, %v687
        %v691 = vsub.f32 %v663, %v688
        %v692 = vsub.f32 %v668, %v689
        %v693 = vmul.f32 %v690, %v690
        %v694 = vmul.f32 %v691, %v691
        %v695 = vmul.f32 %v692, %v692
        %v696 = vsel %vm675, %v693, 0.0
        %697 = vadd.xlane.f32.xlu0 %v696
        %v698 = vpop.xlane.xlu0 %697
        %v699 = vsel %vm675, %v694, 0.0
        %700 = vadd.xlane.f32.xlu0 %v699
        %v701 = vpop.xlane.xlu0 %700
        %v702 = vsel %vm682, %v695, 0.0
        %703 = vadd.xlane.f32.xlu0 %v702
        %v704 = vpop.xlane.xlu0 %703
        %v705 = vmul.f32 %v698, %v686
        %v706 = vmul.f32 %v701, %v686
        %v707 = vmul.f32 %v704, %v686
        %v708 = vadd.f32 %v705, 1e-12
        %v709 = vadd.f32 %v706, 1e-12
        %v710 = vadd.f32 %v707, 1e-12
        %v711 = vrsqrt.pop %v708
        %v712 = vrsqrt.pop %v709
        %v713 = vrsqrt.pop %v710
        %v714 = vmul.f32 %v690, %v711
        %v715 = vmul.f32 %v691, %v712
        %v716 = vmul.f32 %v692, %v713
        %v718 = vlaneseq
        %v719 = vshrl.u32 %v718, 7
        %v720 = vsub.s32 0, %v719
        %v721 = vrot.slane %v673, %v720
        %v723 = vmul.f32 %v714, %v721
        %v724 = vmul.f32 %v715, %v721
        %v725 = vmul.f32 %v716, %v721
        %v727 = vlaneseq
        %v728 = vshrl.u32 %v727, 7
        %v729 = vsub.s32 0, %v728
        %v730 = vrot.slane %v674, %v729
        %v732 = vadd.f32 %v723, %v730
        %v733 = vadd.f32 %v724, %v730
        %v734 = vadd.f32 %v725, %v730
        %v735 = vld [vmem:[%s5] sm:$0xff]
        %v736 = vld [vmem:[%s5 + $0x8] sm:$0xff]
        %v737 = vld [vmem:[%s5 + $0x10] sm:$0xff]
        %v738 = vld [vmem:[%s5 + $0x18] sm:$0xff]
        %v739 = vpack.c.bf16 %v733, %v732
        %v740 = vpack.c.bf16 %v734, %v734
        %v741 = vpack.c.bf16 %v736, %v735
        %v742 = vpack.c.bf16 %v738, %v737
        %v743 = vld [vmem:[%s6] sm:$0x1]
        %v745 = vlaneseq
        %v746 = vshrl.u32 %v745, 7
        %v747 = vsub.s32 0, %v746
        %v748 = vrot.slane %v743, %v747
        %v751 = vsel %vm675, %v739, 0
        %v754 = vsel %vm675, %v740, 0
        %756 = vmatprep.subr.bf16.mxu0 0
        %757 = vmatpush1.bf16.msra.mxu0 %v741
        %758 = vmatprep.subr.bf16.mxu0 0
        %759 = vmatpush1.bf16.msra.mxu0 %v742
        %760 = vmatprep.subr.bf16.mxu0 0
        %761 = vmatpush1.bf16.msra.mxu0 0
        %762 = vmatprep.subr.bf16.mxu0 0
        %763 = vmatpush1.bf16.msra.mxu0 0
        %764 = vmatprep.subr.bf16.mxu0 0
        %765 = vmatpush1.bf16.msra.mxu0 0
        %766 = vmatprep.subr.bf16.mxu0 0
        %767 = vmatpush1.bf16.msra.mxu0 0
        %768 = vmatprep.subr.bf16.mxu0 0
        %769 = vmatpush1.bf16.msra.mxu0 0
        %770 = vmatprep.subr.bf16.mxu0 0
        %771 = vmatpush1.bf16.msra.mxu0 0
        %772 = vmatprep.subr.bf16.mxu0 0
        %773 = vmatpush1.bf16.msra.mxu0 0
        %774 = vmatprep.subr.bf16.mxu0 0
        %775 = vmatpush1.bf16.msra.mxu0 0
        %776 = vmatprep.subr.bf16.mxu0 0
        %777 = vmatpush1.bf16.msra.mxu0 0
        %778 = vmatprep.subr.bf16.mxu0 0
        %779 = vmatpush1.bf16.msra.mxu0 0
        %780 = vmatprep.subr.bf16.mxu0 0
        %781 = vmatpush1.bf16.msra.mxu0 0
        %782 = vmatprep.subr.bf16.mxu0 0
        %783 = vmatpush1.bf16.msra.mxu0 0
        %784 = vmatprep.subr.bf16.mxu0 0
        %785 = vmatpush1.bf16.msra.mxu0 0
        %786 = vmatprep.subr.bf16.mxu0 0
        %787 = vmatpush1.bf16.msra.mxu0 0
        %788 = vmatprep.mubr.bf16.mxu0 0
        %789 = vmatmul.mubr.bf16.gmra.mrb[0].mxu0 %v751
        %v790 = vpop.f32.mrb[0].mxu0
        %v791 = vadd.f32 %v748, %v790
        %v792 = vpop.f32.mrb[0].mxu0
        %v793 = vpop.f32.mrb[0].mxu0
        %v794 = vadd.f32 %v748, %v793
        %v795 = vpop.f32.mrb[0].mxu0
        %796 = vmatprep.mubr.bf16.mxu0 0
        %797 = vmatmul.mubr.bf16.gmra.mrb[0].mxu0 %v754
        %v798 = vpop.f32.mrb[0].mxu0
        %v799 = vadd.f32 %v748, %v798
        %v800 = vpop.f32.mrb[0].mxu0
        %v801 = vpop.f32.mrb[0].mxu0
        %v802 = vpop.f32.mrb[0].mxu0
        %803 = vdwg.mxu0
        %v804 = vpack.c.bf16 %v794, %v791
        %v805 = vpack.c.bf16 %v799, %v799
        %808 = vrot.lane.b32.xlu0 %v804, 96
        %v809 = vpop.permute.xlu0 %808
        %810 = vrot.lane.b32.xlu0 %v805, 96
        %v811 = vpop.permute.xlu0 %810
        %vm812 = vcmask 130048
        %v814 = vsel %vm812, %v804, 0
        %v817 = vsel %vm812, %v805, 0
        %v820 = vsel %vm812, %v809, 0
        %v823 = vsel %vm812, %v811, 0
        %825 = vmatprep.subr.bf16.mxu0 0
        %826 = vmatpush1.bf16.xpose.msra.mxu0 %v820
        %827 = vmatprep.subr.bf16.mxu0 0
        %828 = vmatpush1.bf16.xpose.msra.mxu0 %v823
        %829 = vmatprep.subr.bf16.mxu0 0
        %830 = vmatpush1.bf16.xpose.msra.mxu0 0
        %831 = vmatprep.subr.bf16.mxu0 0
        %832 = vmatpush1.bf16.xpose.msra.mxu0 0
        %833 = vmatprep.subr.bf16.mxu0 0
        %834 = vmatpush1.bf16.xpose.msra.mxu0 0
        %835 = vmatprep.subr.bf16.mxu0 0
        %836 = vmatpush1.bf16.xpose.msra.mxu0 0
        %837 = vmatprep.subr.bf16.mxu0 0
        %838 = vmatpush1.bf16.xpose.msra.mxu0 0
        %839 = vmatprep.subr.bf16.mxu0 0
        %840 = vmatpush1.bf16.xpose.msra.mxu0 0
        %841 = vmatprep.subr.bf16.mxu0 0
        %842 = vmatpush1.bf16.xpose.msra.mxu0 0
        %843 = vmatprep.subr.bf16.mxu0 0
        %844 = vmatpush1.bf16.xpose.msra.mxu0 0
        %845 = vmatprep.subr.bf16.mxu0 0
        %846 = vmatpush1.bf16.xpose.msra.mxu0 0
        %847 = vmatprep.subr.bf16.mxu0 0
        %848 = vmatpush1.bf16.xpose.msra.mxu0 0
        %849 = vmatprep.subr.bf16.mxu0 0
        %850 = vmatpush1.bf16.xpose.msra.mxu0 0
        %851 = vmatprep.subr.bf16.mxu0 0
        %852 = vmatpush1.bf16.xpose.msra.mxu0 0
        %853 = vmatprep.subr.bf16.mxu0 0
        %854 = vmatpush1.bf16.xpose.msra.mxu0 0
        %855 = vmatprep.subr.bf16.mxu0 0
        %856 = vmatpush1.bf16.xpose.msra.mxu0 0
        %857 = vmatprep.mubr.bf16.mxu0 0
        %858 = vmatmul.mubr.bf16.gmra.mrb[0].mxu0 %v814
        %v859 = vpop.f32.mrb[0].mxu0
        %v860 = vadd.f32 0.0, %v859
        %v861 = vpop.f32.mrb[0].mxu0
        %v862 = vpop.f32.mrb[0].mxu0
        %v863 = vadd.f32 0.0, %v862
        %v864 = vpop.f32.mrb[0].mxu0
        %865 = vmatprep.mubr.bf16.mxu0 0
        %866 = vmatmul.mubr.bf16.gmra.mrb[0].mxu0 %v817
        %v867 = vpop.f32.mrb[0].mxu0
        %v868 = vadd.f32 0.0, %v867
        %v869 = vpop.f32.mrb[0].mxu0
        %v870 = vpop.f32.mrb[0].mxu0
        %v871 = vpop.f32.mrb[0].mxu0
        %872 = vdwg.mxu0
        %v873 = vmul.f32 %v860, 0.25
        %v874 = vmul.f32 %v863, 0.25
        %v875 = vmul.f32 %v868, 0.25
        %vm876 = vcmask 138240
        %v877 = vsel %vm876, %v873, -inf
        %878 = vmax.xlane.f32.xlu0 %v877
        %v879 = vpop.xlane.xlu0 %878
        %v880 = vsel %vm876, %v874, -inf
        %881 = vmax.xlane.f32.xlu0 %v880
        %v882 = vpop.xlane.xlu0 %881
        %vm883 = vcmask 131072
        %v884 = vsel %vm883, %v875, -inf
        %885 = vmax.xlane.f32.xlu0 %v884
        %v886 = vpop.xlane.xlu0 %885
        %v887 = vsub.f32 %v873, %v879
        %v888 = vsub.f32 %v874, %v882
        %v889 = vsub.f32 %v875, %v886
        %v890 = vmul.f32 %v887, 1.442695
        %v891 = vpow.pop %v890
        %v892 = vmul.f32 %v888, 1.442695
        %v893 = vpow.pop %v892
        %v894 = vmul.f32 %v889, 1.442695
        %v895 = vpow.pop %v894
        %v896 = vsel %vm876, %v891, 0.0
        %897 = vadd.xlane.f32.xlu0 %v896
        %v898 = vpop.xlane.xlu0 %897
        %v899 = vsel %vm876, %v893, 0.0
        %900 = vadd.xlane.f32.xlu0 %v899
        %v901 = vpop.xlane.xlu0 %900
        %v902 = vsel %vm883, %v895, 0.0
        %903 = vadd.xlane.f32.xlu0 %v902
        %v904 = vpop.xlane.xlu0 %903
        %v905 = vrcp.pop %v898
        %v906 = vrcp.pop %v901
        %v907 = vrcp.pop %v904
        %v908 = vmul.f32 %v891, %v905
        %v909 = vmul.f32 %v893, %v906
        %v910 = vmul.f32 %v895, %v907
        %v911 = vpack.c.bf16 %v909, %v908
        %v912 = vpack.c.bf16 %v910, %v910
        %913 = vrot.lane.b32.xlu0 %v804, 64
        %v914 = vpop.permute.xlu0 %913
        %915 = vrot.lane.b32.xlu0 %v805, 64
        %v916 = vpop.permute.xlu0 %915
        %v919 = vsel %vm876, %v911, 0
        %v922 = vsel %vm876, %v912, 0
        %vm924 = vcmask 1040384
        %v925 = vsel 0, 4294967295, 65535
        %v926 = vsel %vm924, %v925, 0
        %v928 = vand.u32 %v916, %v926
        %930 = vmatprep.subr.bf16.mxu0 0
        %931 = vmatpush1.bf16.msra.mxu0 %v914
        %932 = vmatprep.subr.bf16.mxu0 0
        %933 = vmatpush1.bf16.msra.mxu0 %v928
        %934 = vmatprep.subr.bf16.mxu0 0
        %935 = vmatpush1.bf16.msra.mxu0 0
        %936 = vmatprep.subr.bf16.mxu0 0
        %937 = vmatpush1.bf16.msra.mxu0 0
        %938 = vmatprep.subr.bf16.mxu0 0
        %939 = vmatpush1.bf16.msra.mxu0 0
        %940 = vmatprep.subr.bf16.mxu0 0
        %941 = vmatpush1.bf16.msra.mxu0 0
        %942 = vmatprep.subr.bf16.mxu0 0
        %943 = vmatpush1.bf16.msra.mxu0 0
        %944 = vmatprep.subr.bf16.mxu0 0
        %945 = vmatpush1.bf16.msra.mxu0 0
        %946 = vmatprep.subr.bf16.mxu0 0
        %947 = vmatpush1.bf16.msra.mxu0 0
        %948 = vmatprep.subr.bf16.mxu0 0
        %949 = vmatpush1.bf16.msra.mxu0 0
        %950 = vmatprep.subr.bf16.mxu0 0
        %951 = vmatpush1.bf16.msra.mxu0 0
        %952 = vmatprep.subr.bf16.mxu0 0
        %953 = vmatpush1.bf16.msra.mxu0 0
        %954 = vmatprep.subr.bf16.mxu0 0
        %955 = vmatpush1.bf16.msra.mxu0 0
        %956 = vmatprep.subr.bf16.mxu0 0
        %957 = vmatpush1.bf16.msra.mxu0 0
        %958 = vmatprep.subr.bf16.mxu0 0
        %959 = vmatpush1.bf16.msra.mxu0 0
        %960 = vmatprep.subr.bf16.mxu0 0
        %961 = vmatpush1.bf16.msra.mxu0 0
        %962 = vmatprep.mubr.bf16.mxu0 0
        %963 = vmatmul.mubr.bf16.gmra.mrb[0].mxu0 %v919
        %v964 = vpop.f32.mrb[0].mxu0
        %v965 = vadd.f32 0.0, %v964
        %v966 = vpop.f32.mrb[0].mxu0
        %v967 = vpop.f32.mrb[0].mxu0
        %v968 = vadd.f32 0.0, %v967
        %v969 = vpop.f32.mrb[0].mxu0
        %970 = vmatprep.mubr.bf16.mxu0 0
        %971 = vmatmul.mubr.bf16.gmra.mrb[0].mxu0 %v922
        %v972 = vpop.f32.mrb[0].mxu0
        %v973 = vadd.f32 0.0, %v972
        %v974 = vpop.f32.mrb[0].mxu0
        %v975 = vpop.f32.mrb[0].mxu0
        %v976 = vpop.f32.mrb[0].mxu0
        %977 = vdwg.mxu0
        %978 = vrot.lane.b32.xlu0 %v804, 112
        %v979 = vpop.permute.xlu0 %978
        %980 = vrot.lane.b32.xlu0 %v805, 112
        %v981 = vpop.permute.xlu0 %980
        %982 = vrot.lane.b32.xlu0 %v804, 80
        %v983 = vpop.permute.xlu0 %982
        %984 = vrot.lane.b32.xlu0 %v805, 80
        %v985 = vpop.permute.xlu0 %984
        %v987 = vsel %vm812, %v979, 0
        %v990 = vsel %vm812, %v981, 0
        %v993 = vsel %vm812, %v983, 0
        %v996 = vsel %vm812, %v985, 0
        %998 = vmatprep.subr.bf16.mxu0 0
        %999 = vmatpush1.bf16.xpose.msra.mxu0 %v993
        %1000 = vmatprep.subr.bf16.mxu0 0
        %1001 = vmatpush1.bf16.xpose.msra.mxu0 %v996
        %1002 = vmatprep.subr.bf16.mxu0 0
        %1003 = vmatpush1.bf16.xpose.msra.mxu0 0
        %1004 = vmatprep.subr.bf16.mxu0 0
        %1005 = vmatpush1.bf16.xpose.msra.mxu0 0
        %1006 = vmatprep.subr.bf16.mxu0 0
        %1007 = vmatpush1.bf16.xpose.msra.mxu0 0
        %1008 = vmatprep.subr.bf16.mxu0 0
        %1009 = vmatpush1.bf16.xpose.msra.mxu0 0
        %1010 = vmatprep.subr.bf16.mxu0 0
        %1011 = vmatpush1.bf16.xpose.msra.mxu0 0
        %1012 = vmatprep.subr.bf16.mxu0 0
        %1013 = vmatpush1.bf16.xpose.msra.mxu0 0
        %1014 = vmatprep.subr.bf16.mxu0 0
        %1015 = vmatpush1.bf16.xpose.msra.mxu0 0
        %1016 = vmatprep.subr.bf16.mxu0 0
        %1017 = vmatpush1.bf16.xpose.msra.mxu0 0
        %1018 = vmatprep.subr.bf16.mxu0 0
        %1019 = vmatpush1.bf16.xpose.msra.mxu0 0
        %1020 = vmatprep.subr.bf16.mxu0 0
        %1021 = vmatpush1.bf16.xpose.msra.mxu0 0
        %1022 = vmatprep.subr.bf16.mxu0 0
        %1023 = vmatpush1.bf16.xpose.msra.mxu0 0
        %1024 = vmatprep.subr.bf16.mxu0 0
        %1025 = vmatpush1.bf16.xpose.msra.mxu0 0
        %1026 = vmatprep.subr.bf16.mxu0 0
        %1027 = vmatpush1.bf16.xpose.msra.mxu0 0
        %1028 = vmatprep.subr.bf16.mxu0 0
        %1029 = vmatpush1.bf16.xpose.msra.mxu0 0
        %1030 = vmatprep.mubr.bf16.mxu0 0
        %1031 = vmatmul.mubr.bf16.gmra.mrb[0].mxu0 %v987
        %v1032 = vpop.f32.mrb[0].mxu0
        %v1033 = vadd.f32 0.0, %v1032
        %v1034 = vpop.f32.mrb[0].mxu0
        %v1035 = vpop.f32.mrb[0].mxu0
        %v1036 = vadd.f32 0.0, %v1035
        %v1037 = vpop.f32.mrb[0].mxu0
        %1038 = vmatprep.mubr.bf16.mxu0 0
        %1039 = vmatmul.mubr.bf16.gmra.mrb[0].mxu0 %v990
        %v1040 = vpop.f32.mrb[0].mxu0
        %v1041 = vadd.f32 0.0, %v1040
        %v1042 = vpop.f32.mrb[0].mxu0
        %v1043 = vpop.f32.mrb[0].mxu0
        %v1044 = vpop.f32.mrb[0].mxu0
        %1045 = vdwg.mxu0
        %v1046 = vmul.f32 %v1033, 0.25
        %v1047 = vmul.f32 %v1036, 0.25
        %v1048 = vmul.f32 %v1041, 0.25
        %v1049 = vsel %vm876, %v1046, -inf
        %1050 = vmax.xlane.f32.xlu0 %v1049
        %v1051 = vpop.xlane.xlu0 %1050
        %v1052 = vsel %vm876, %v1047, -inf
        %1053 = vmax.xlane.f32.xlu0 %v1052
        %v1054 = vpop.xlane.xlu0 %1053
        %v1055 = vsel %vm883, %v1048, -inf
        %1056 = vmax.xlane.f32.xlu0 %v1055
        %v1057 = vpop.xlane.xlu0 %1056
        %v1058 = vsub.f32 %v1046, %v1051
        %v1059 = vsub.f32 %v1047, %v1054
        %v1060 = vsub.f32 %v1048, %v1057
        %v1061 = vmul.f32 %v1058, 1.442695
        %v1062 = vpow.pop %v1061
        %v1063 = vmul.f32 %v1059, 1.442695
        %v1064 = vpow.pop %v1063
        %v1065 = vmul.f32 %v1060, 1.442695
        %v1066 = vpow.pop %v1065
        %v1067 = vsel %vm876, %v1062, 0.0
        %1068 = vadd.xlane.f32.xlu0 %v1067
        %v1069 = vpop.xlane.xlu0 %1068
        %v1070 = vsel %vm876, %v1064, 0.0
        %1071 = vadd.xlane.f32.xlu0 %v1070
        %v1072 = vpop.xlane.xlu0 %1071
        %v1073 = vsel %vm883, %v1066, 0.0
        %1074 = vadd.xlane.f32.xlu0 %v1073
        %v1075 = vpop.xlane.xlu0 %1074
        %v1076 = vrcp.pop %v1069
        %v1077 = vrcp.pop %v1072
        %v1078 = vrcp.pop %v1075
        %v1079 = vmul.f32 %v1062, %v1076
        %v1080 = vmul.f32 %v1064, %v1077
        %v1081 = vmul.f32 %v1066, %v1078
        %v1082 = vpack.c.bf16 %v1080, %v1079
        %v1083 = vpack.c.bf16 %v1081, %v1081
        %1084 = vrot.lane.b32.xlu0 %v804, 48
        %v1085 = vpop.permute.xlu0 %1084
        %1086 = vrot.lane.b32.xlu0 %v805, 48
        %v1087 = vpop.permute.xlu0 %1086
        %v1090 = vsel %vm876, %v1082, 0
        %v1093 = vsel %vm876, %v1083, 0
        %v1096 = vand.u32 %v1087, %v926
        %1098 = vmatprep.subr.bf16.mxu0 0
        %1099 = vmatpush1.bf16.msra.mxu0 %v1085
        %1100 = vmatprep.subr.bf16.mxu0 0
        %1101 = vmatpush1.bf16.msra.mxu0 %v1096
        %1102 = vmatprep.subr.bf16.mxu0 0
        %1103 = vmatpush1.bf16.msra.mxu0 0
        %1104 = vmatprep.subr.bf16.mxu0 0
        %1105 = vmatpush1.bf16.msra.mxu0 0
        %1106 = vmatprep.subr.bf16.mxu0 0
        %1107 = vmatpush1.bf16.msra.mxu0 0
        %1108 = vmatprep.subr.bf16.mxu0 0
        %1109 = vmatpush1.bf16.msra.mxu0 0
        %1110 = vmatprep.subr.bf16.mxu0 0
        %1111 = vmatpush1.bf16.msra.mxu0 0
        %1112 = vmatprep.subr.bf16.mxu0 0
        %1113 = vmatpush1.bf16.msra.mxu0 0
        %1114 = vmatprep.subr.bf16.mxu0 0
        %1115 = vmatpush1.bf16.msra.mxu0 0
        %1116 = vmatprep.subr.bf16.mxu0 0
        %1117 = vmatpush1.bf16.msra.mxu0 0
        %1118 = vmatprep.subr.bf16.mxu0 0
        %1119 = vmatpush1.bf16.msra.mxu0 0
        %1120 = vmatprep.subr.bf16.mxu0 0
        %1121 = vmatpush1.bf16.msra.mxu0 0
        %1122 = vmatprep.subr.bf16.mxu0 0
        %1123 = vmatpush1.bf16.msra.mxu0 0
        %1124 = vmatprep.subr.bf16.mxu0 0
        %1125 = vmatpush1.bf16.msra.mxu0 0
        %1126 = vmatprep.subr.bf16.mxu0 0
        %1127 = vmatpush1.bf16.msra.mxu0 0
        %1128 = vmatprep.subr.bf16.mxu0 0
        %1129 = vmatpush1.bf16.msra.mxu0 0
        %1130 = vmatprep.mubr.bf16.mxu0 0
        %1131 = vmatmul.mubr.bf16.gmra.mrb[0].mxu0 %v1090
        %v1132 = vpop.f32.mrb[0].mxu0
        %v1133 = vadd.f32 0.0, %v1132
        %v1134 = vpop.f32.mrb[0].mxu0
        %v1135 = vpop.f32.mrb[0].mxu0
        %v1136 = vadd.f32 0.0, %v1135
        %v1137 = vpop.f32.mrb[0].mxu0
        %1138 = vmatprep.mubr.bf16.mxu0 0
        %1139 = vmatmul.mubr.bf16.gmra.mrb[0].mxu0 %v1093
        %v1140 = vpop.f32.mrb[0].mxu0
        %v1141 = vadd.f32 0.0, %v1140
        %v1142 = vpop.f32.mrb[0].mxu0
        %v1143 = vpop.f32.mrb[0].mxu0
        %v1144 = vpop.f32.mrb[0].mxu0
        %1145 = vdwg.mxu0
        %1149 = vrot.lane.b32.xlu0 %v1133, 16
        %v1150 = vpop.permute.xlu0 %1149
        %1151 = vrot.lane.b32.xlu0 %v1136, 16
        %v1152 = vpop.permute.xlu0 %1151
        %1153 = vrot.lane.b32.xlu0 %v1141, 16
        %v1154 = vpop.permute.xlu0 %1153
        %v1158 = vsel %vm812, %v965, %v1150
        %v1159 = vsel %vm812, %v968, %v1152
        %v1160 = vsel %vm812, %v973, %v1154
        %v1161 = vld [vmem:[%s7] sm:$0xff]
        %v1162 = vld [vmem:[%s7 + $0x8] sm:$0xff]
        %v1163 = vld [vmem:[%s7 + $0x10] sm:$0xff]
        %v1164 = vld [vmem:[%s7 + $0x18] sm:$0xff]
        %v1165 = vpack.c.bf16 %v1159, %v1158
        %v1166 = vpack.c.bf16 %v1160, %v1160
        %v1167 = vpack.c.bf16 %v1162, %v1161
        %v1168 = vpack.c.bf16 %v1164, %v1163
        %v1170 = vsel %vm675, %v1165, 0
        %v1173 = vsel %vm675, %v1166, 0
        %1175 = vmatprep.subr.bf16.mxu0 0
        %1176 = vmatpush1.bf16.msra.mxu0 %v1167
        %1177 = vmatprep.subr.bf16.mxu0 0
        %1178 = vmatpush1.bf16.msra.mxu0 %v1168
        %1179 = vmatprep.subr.bf16.mxu0 0
        %1180 = vmatpush1.bf16.msra.mxu0 0
        %1181 = vmatprep.subr.bf16.mxu0 0
        %1182 = vmatpush1.bf16.msra.mxu0 0
        %1183 = vmatprep.subr.bf16.mxu0 0
        %1184 = vmatpush1.bf16.msra.mxu0 0
        %1185 = vmatprep.subr.bf16.mxu0 0
        %1186 = vmatpush1.bf16.msra.mxu0 0
        %1187 = vmatprep.subr.bf16.mxu0 0
        %1188 = vmatpush1.bf16.msra.mxu0 0
        %1189 = vmatprep.subr.bf16.mxu0 0
        %1190 = vmatpush1.bf16.msra.mxu0 0
        %1191 = vmatprep.subr.bf16.mxu0 0
        %1192 = vmatpush1.bf16.msra.mxu0 0
        %1193 = vmatprep.subr.bf16.mxu0 0
        %1194 = vmatpush1.bf16.msra.mxu0 0
        %1195 = vmatprep.subr.bf16.mxu0 0
        %1196 = vmatpush1.bf16.msra.mxu0 0
        %1197 = vmatprep.subr.bf16.mxu0 0
        %1198 = vmatpush1.bf16.msra.mxu0 0
        %1199 = vmatprep.subr.bf16.mxu0 0
        %1200 = vmatpush1.bf16.msra.mxu0 0
        %1201 = vmatprep.subr.bf16.mxu0 0
        %1202 = vmatpush1.bf16.msra.mxu0 0
        %1203 = vmatprep.subr.bf16.mxu0 0
        %1204 = vmatpush1.bf16.msra.mxu0 0
        %1205 = vmatprep.subr.bf16.mxu0 0
        %1206 = vmatpush1.bf16.msra.mxu0 0
        %1207 = vmatprep.mubr.bf16.mxu0 0
        %1208 = vmatmul.mubr.bf16.gmra.mrb[0].mxu0 %v1170
        %v1209 = vpop.f32.mrb[0].mxu0
        %v1210 = vadd.f32 0.0, %v1209
        %v1211 = vpop.f32.mrb[0].mxu0
        %v1212 = vpop.f32.mrb[0].mxu0
        %v1213 = vadd.f32 0.0, %v1212
        %v1214 = vpop.f32.mrb[0].mxu0
        %1215 = vmatprep.mubr.bf16.mxu0 0
        %1216 = vmatmul.mubr.bf16.gmra.mrb[0].mxu0 %v1173
        %v1217 = vpop.f32.mrb[0].mxu0
        %v1218 = vadd.f32 0.0, %v1217
        %v1219 = vpop.f32.mrb[0].mxu0
        %v1220 = vpop.f32.mrb[0].mxu0
        %v1221 = vpop.f32.mrb[0].mxu0
        %1222 = vdwg.mxu0
        %v1223 = vadd.f32 %v660, %v1210
        %v1224 = vadd.f32 %v663, %v1213
        %v1225 = vadd.f32 %v668, %v1218
        %v1226 = vld [vmem:[%s8] sm:$0x1]
        %v1228 = vlaneseq
        %v1229 = vshrl.u32 %v1228, 7
        %v1230 = vsub.s32 0, %v1229
        %v1231 = vrot.slane %v1226, %v1230
        %v1233 = vadd.f32 %v1223, %v1231
        %v1234 = vadd.f32 %v1224, %v1231
        %v1235 = vadd.f32 %v1225, %v1231
        %v1236 = vld [vmem:[%s9] sm:$0x1]
        %v1237 = vld [vmem:[%s10] sm:$0x1]
        %v1238 = vsel %vm675, %v1233, 0.0
        %1239 = vadd.xlane.f32.xlu0 %v1238
        %v1240 = vpop.xlane.xlu0 %1239
        %v1241 = vsel %vm675, %v1234, 0.0
        %1242 = vadd.xlane.f32.xlu0 %v1241
        %v1243 = vpop.xlane.xlu0 %1242
        %v1244 = vsel %vm682, %v1235, 0.0
        %1245 = vadd.xlane.f32.xlu0 %v1244
        %v1246 = vpop.xlane.xlu0 %1245
        %v1247 = vmul.f32 %v1240, %v686
        %v1248 = vmul.f32 %v1243, %v686
        %v1249 = vmul.f32 %v1246, %v686
        %v1250 = vsub.f32 %v1233, %v1247
        %v1251 = vsub.f32 %v1234, %v1248
        %v1252 = vsub.f32 %v1235, %v1249
        %v1253 = vmul.f32 %v1250, %v1250
        %v1254 = vmul.f32 %v1251, %v1251
        %v1255 = vmul.f32 %v1252, %v1252
        %v1256 = vsel %vm675, %v1253, 0.0
        %1257 = vadd.xlane.f32.xlu0 %v1256
        %v1258 = vpop.xlane.xlu0 %1257
        %v1259 = vsel %vm675, %v1254, 0.0
        %1260 = vadd.xlane.f32.xlu0 %v1259
        %v1261 = vpop.xlane.xlu0 %1260
        %v1262 = vsel %vm682, %v1255, 0.0
        %1263 = vadd.xlane.f32.xlu0 %v1262
        %v1264 = vpop.xlane.xlu0 %1263
        %v1265 = vmul.f32 %v1258, %v686
        %v1266 = vmul.f32 %v1261, %v686
        %v1267 = vmul.f32 %v1264, %v686
        %v1268 = vadd.f32 %v1265, 1e-12
        %v1269 = vadd.f32 %v1266, 1e-12
        %v1270 = vadd.f32 %v1267, 1e-12
        %v1271 = vrsqrt.pop %v1268
        %v1272 = vrsqrt.pop %v1269
        %v1273 = vrsqrt.pop %v1270
        %v1274 = vmul.f32 %v1250, %v1271
        %v1275 = vmul.f32 %v1251, %v1272
        %v1276 = vmul.f32 %v1252, %v1273
        %v1278 = vlaneseq
        %v1279 = vshrl.u32 %v1278, 7
        %v1280 = vsub.s32 0, %v1279
        %v1281 = vrot.slane %v1236, %v1280
        %v1283 = vmul.f32 %v1274, %v1281
        %v1284 = vmul.f32 %v1275, %v1281
        %v1285 = vmul.f32 %v1276, %v1281
        %v1287 = vlaneseq
        %v1288 = vshrl.u32 %v1287, 7
        %v1289 = vsub.s32 0, %v1288
        %v1290 = vrot.slane %v1237, %v1289
        %v1292 = vadd.f32 %v1283, %v1290
        %v1293 = vadd.f32 %v1284, %v1290
        %v1294 = vadd.f32 %v1285, %v1290
        %v1295 = vld [vmem:[%s11] sm:$0xff]
        %v1296 = vld [vmem:[%s11 + $0x8] sm:$0xff]
        %v1297 = vld [vmem:[%s11 + $0x10] sm:$0xff]
        %v1298 = vld [vmem:[%s11 + $0x18] sm:$0xff]
        %v1299 = vpack.c.bf16 %v1293, %v1292
        %v1300 = vpack.c.bf16 %v1294, %v1294
        %v1301 = vpack.c.bf16 %v1296, %v1295
        %v1302 = vpack.c.bf16 %v1298, %v1297
        %v1303 = vld [vmem:[%s12] sm:$0x1]
        %v1305 = vlaneseq
        %v1306 = vshrl.u32 %v1305, 7
        %v1307 = vsub.s32 0, %v1306
        %v1308 = vrot.slane %v1303, %v1307
        %v1311 = vsel %vm675, %v1299, 0
        %v1314 = vsel %vm675, %v1300, 0
        %1316 = vmatprep.subr.bf16.mxu0 0
        %1317 = vmatpush1.bf16.msra.mxu0 %v1301
        %1318 = vmatprep.subr.bf16.mxu0 0
        %1319 = vmatpush1.bf16.msra.mxu0 %v1302
        %1320 = vmatprep.subr.bf16.mxu0 0
        %1321 = vmatpush1.bf16.msra.mxu0 0
        %1322 = vmatprep.subr.bf16.mxu0 0
        %1323 = vmatpush1.bf16.msra.mxu0 0
        %1324 = vmatprep.subr.bf16.mxu0 0
        %1325 = vmatpush1.bf16.msra.mxu0 0
        %1326 = vmatprep.subr.bf16.mxu0 0
        %1327 = vmatpush1.bf16.msra.mxu0 0
        %1328 = vmatprep.subr.bf16.mxu0 0
        %1329 = vmatpush1.bf16.msra.mxu0 0
        %1330 = vmatprep.subr.bf16.mxu0 0
        %1331 = vmatpush1.bf16.msra.mxu0 0
        %1332 = vmatprep.subr.bf16.mxu0 0
        %1333 = vmatpush1.bf16.msra.mxu0 0
        %1334 = vmatprep.subr.bf16.mxu0 0
        %1335 = vmatpush1.bf16.msra.mxu0 0
        %1336 = vmatprep.subr.bf16.mxu0 0
        %1337 = vmatpush1.bf16.msra.mxu0 0
        %1338 = vmatprep.subr.bf16.mxu0 0
        %1339 = vmatpush1.bf16.msra.mxu0 0
        %1340 = vmatprep.subr.bf16.mxu0 0
        %1341 = vmatpush1.bf16.msra.mxu0 0
        %1342 = vmatprep.subr.bf16.mxu0 0
        %1343 = vmatpush1.bf16.msra.mxu0 0
        %1344 = vmatprep.subr.bf16.mxu0 0
        %1345 = vmatpush1.bf16.msra.mxu0 0
        %1346 = vmatprep.subr.bf16.mxu0 0
        %1347 = vmatpush1.bf16.msra.mxu0 0
        %1348 = vmatprep.mubr.bf16.mxu0 0
        %1349 = vmatmul.mubr.bf16.gmra.mrb[0].mxu0 %v1311
        %v1350 = vpop.f32.mrb[0].mxu0
        %v1351 = vadd.f32 %v1308, %v1350
        %v1352 = vpop.f32.mrb[0].mxu0
        %v1353 = vpop.f32.mrb[0].mxu0
        %v1354 = vadd.f32 %v1308, %v1353
        %v1355 = vpop.f32.mrb[0].mxu0
        %1356 = vmatprep.mubr.bf16.mxu0 0
        %1357 = vmatmul.mubr.bf16.gmra.mrb[0].mxu0 %v1314
        %v1358 = vpop.f32.mrb[0].mxu0
        %v1359 = vadd.f32 %v1308, %v1358
        %v1360 = vpop.f32.mrb[0].mxu0
        %v1361 = vpop.f32.mrb[0].mxu0
        %v1362 = vpop.f32.mrb[0].mxu0
        %1363 = vdwg.mxu0
        %v1364 = vmul.f32 %v1351, %v1351
        %v1365 = vmul.f32 %v1354, %v1354
        %v1366 = vmul.f32 %v1359, %v1359
        %v1367 = vmul.f32 %v1351, %v1364
        %v1368 = vmul.f32 %v1354, %v1365
        %v1369 = vmul.f32 %v1359, %v1366
        %v1370 = vmul.f32 %v1367, 0.044715
        %v1371 = vmul.f32 %v1368, 0.044715
        %v1372 = vmul.f32 %v1369, 0.044715
        %v1373 = vadd.f32 %v1351, %v1370
        %v1374 = vadd.f32 %v1354, %v1371
        %v1375 = vadd.f32 %v1359, %v1372
        %v1376 = vmul.f32 %v1373, 0.7978846
        %v1377 = vmul.f32 %v1374, 0.7978846
        %v1378 = vmul.f32 %v1375, 0.7978846
        %v1379 = vtanh.pop %v1376
        %v1380 = vtanh.pop %v1377
        %v1381 = vtanh.pop %v1378
        %v1382 = vadd.f32 %v1379, 1.0
        %v1383 = vadd.f32 %v1380, 1.0
        %v1384 = vadd.f32 %v1381, 1.0
        %v1385 = vmul.f32 %v1382, 0.5
        %v1386 = vmul.f32 %v1383, 0.5
        %v1387 = vmul.f32 %v1384, 0.5
        %v1388 = vmul.f32 %v1351, %v1385
        %v1389 = vmul.f32 %v1354, %v1386
        %v1390 = vmul.f32 %v1359, %v1387
        %v1391 = vld [vmem:[%s13] sm:$0xff]
        %v1392 = vld [vmem:[%s13 + $0x8] sm:$0xff]
        %v1393 = vld [vmem:[%s13 + $0x10] sm:$0xff]
        %v1394 = vld [vmem:[%s13 + $0x18] sm:$0xff]
        %v1395 = vld [vmem:[%s13 + $0x20] sm:$0xff]
        %v1396 = vld [vmem:[%s13 + $0x28] sm:$0xff]
        %v1397 = vld [vmem:[%s13 + $0x30] sm:$0xff]
        %v1398 = vld [vmem:[%s13 + $0x38] sm:$0xff]
        %v1399 = vpack.c.bf16 %v1389, %v1388
        %v1400 = vpack.c.bf16 %v1390, %v1390
        %v1401 = vpack.c.bf16 %v1392, %v1391
        %v1402 = vpack.c.bf16 %v1394, %v1393
        %v1403 = vpack.c.bf16 %v1396, %v1395
        %v1404 = vpack.c.bf16 %v1398, %v1397
        %vm1405 = vcmask 523264
        %v1407 = vsel %vm1405, %v1399, 0
        %v1410 = vsel %vm1405, %v1400, 0
        %1412 = vmatprep.subr.bf16.mxu0 0
        %1413 = vmatpush1.bf16.msra.mxu0 %v1401
        %1414 = vmatprep.subr.bf16.mxu0 0
        %1415 = vmatpush1.bf16.msra.mxu0 %v1402
        %1416 = vmatprep.subr.bf16.mxu0 0
        %1417 = vmatpush1.bf16.msra.mxu0 %v1403
        %1418 = vmatprep.subr.bf16.mxu0 0
        %1419 = vmatpush1.bf16.msra.mxu0 %v1404
        %1420 = vmatprep.subr.bf16.mxu0 0
        %1421 = vmatpush1.bf16.msra.mxu0 0
        %1422 = vmatprep.subr.bf16.mxu0 0
        %1423 = vmatpush1.bf16.msra.mxu0 0
        %1424 = vmatprep.subr.bf16.mxu0 0
        %1425 = vmatpush1.bf16.msra.mxu0 0
        %1426 = vmatprep.subr.bf16.mxu0 0
        %1427 = vmatpush1.bf16.msra.mxu0 0
        %1428 = vmatprep.subr.bf16.mxu0 0
        %1429 = vmatpush1.bf16.msra.mxu0 0
        %1430 = vmatprep.subr.bf16.mxu0 0
        %1431 = vmatpush1.bf16.msra.mxu0 0
        %1432 = vmatprep.subr.bf16.mxu0 0
        %1433 = vmatpush1.bf16.msra.mxu0 0
        %1434 = vmatprep.subr.bf16.mxu0 0
        %1435 = vmatpush1.bf16.msra.mxu0 0
        %1436 = vmatprep.subr.bf16.mxu0 0
        %1437 = vmatpush1.bf16.msra.mxu0 0
        %1438 = vmatprep.subr.bf16.mxu0 0
        %1439 = vmatpush1.bf16.msra.mxu0 0
        %1440 = vmatprep.subr.bf16.mxu0 0
        %1441 = vmatpush1.bf16.msra.mxu0 0
        %1442 = vmatprep.subr.bf16.mxu0 0
        %1443 = vmatpush1.bf16.msra.mxu0 0
        %1444 = vmatprep.mubr.bf16.mxu0 0
        %1445 = vmatmul.mubr.bf16.gmra.mrb[0].mxu0 %v1407
        %v1446 = vpop.f32.mrb[0].mxu0
        %v1447 = vadd.f32 0.0, %v1446
        %v1448 = vpop.f32.mrb[0].mxu0
        %v1449 = vpop.f32.mrb[0].mxu0
        %v1450 = vadd.f32 0.0, %v1449
        %v1451 = vpop.f32.mrb[0].mxu0
        %1452 = vmatprep.mubr.bf16.mxu0 0
        %1453 = vmatmul.mubr.bf16.gmra.mrb[0].mxu0 %v1410
        %v1454 = vpop.f32.mrb[0].mxu0
        %v1455 = vadd.f32 0.0, %v1454
        %v1456 = vpop.f32.mrb[0].mxu0
        %v1457 = vpop.f32.mrb[0].mxu0
        %v1458 = vpop.f32.mrb[0].mxu0
        %1459 = vdwg.mxu0
        %v1460 = vadd.f32 %v1233, %v1447
        %v1461 = vadd.f32 %v1234, %v1450
        %v1462 = vadd.f32 %v1235, %v1455
        %v1463 = vld [vmem:[%s14] sm:$0x1]
        %v1465 = vlaneseq
        %v1466 = vshrl.u32 %v1465, 7
        %v1467 = vsub.s32 0, %v1466
        %v1468 = vrot.slane %v1463, %v1467
        %v1470 = vadd.f32 %v1460, %v1468
        %v1471 = vadd.f32 %v1461, %v1468
        %v1472 = vadd.f32 %v1462, %v1468
        %s1473 = scalar_lea.vmem %s3, 1
        %v1474 = vld [vmem:[%s1473] sm:$0x1]
        %s1475 = scalar_lea.vmem %s4, 1
        %v1476 = vld [vmem:[%s1475] sm:$0x1]
        %v1477 = vsel %vm675, %v1470, 0.0
        %1478 = vadd.xlane.f32.xlu0 %v1477
        %v1479 = vpop.xlane.xlu0 %1478
        %v1480 = vsel %vm675, %v1471, 0.0
        %1481 = vadd.xlane.f32.xlu0 %v1480
        %v1482 = vpop.xlane.xlu0 %1481
        %v1483 = vsel %vm682, %v1472, 0.0
        %1484 = vadd.xlane.f32.xlu0 %v1483
        %v1485 = vpop.xlane.xlu0 %1484
        %v1486 = vmul.f32 %v1479, %v686
        %v1487 = vmul.f32 %v1482, %v686
        %v1488 = vmul.f32 %v1485, %v686
        %v1489 = vsub.f32 %v1470, %v1486
        %v1490 = vsub.f32 %v1471, %v1487
        %v1491 = vsub.f32 %v1472, %v1488
        %v1492 = vmul.f32 %v1489, %v1489
        %v1493 = vmul.f32 %v1490, %v1490
        %v1494 = vmul.f32 %v1491, %v1491
        %v1495 = vsel %vm675, %v1492, 0.0
        %1496 = vadd.xlane.f32.xlu0 %v1495
        %v1497 = vpop.xlane.xlu0 %1496
        %v1498 = vsel %vm675, %v1493, 0.0
        %1499 = vadd.xlane.f32.xlu0 %v1498
        %v1500 = vpop.xlane.xlu0 %1499
        %v1501 = vsel %vm682, %v1494, 0.0
        %1502 = vadd.xlane.f32.xlu0 %v1501
        %v1503 = vpop.xlane.xlu0 %1502
        %v1504 = vmul.f32 %v1497, %v686
        %v1505 = vmul.f32 %v1500, %v686
        %v1506 = vmul.f32 %v1503, %v686
        %v1507 = vadd.f32 %v1504, 1e-12
        %v1508 = vadd.f32 %v1505, 1e-12
        %v1509 = vadd.f32 %v1506, 1e-12
        %v1510 = vrsqrt.pop %v1507
        %v1511 = vrsqrt.pop %v1508
        %v1512 = vrsqrt.pop %v1509
        %v1513 = vmul.f32 %v1489, %v1510
        %v1514 = vmul.f32 %v1490, %v1511
        %v1515 = vmul.f32 %v1491, %v1512
        %v1517 = vlaneseq
        %v1518 = vshrl.u32 %v1517, 7
        %v1519 = vsub.s32 0, %v1518
        %v1520 = vrot.slane %v1474, %v1519
        %v1522 = vmul.f32 %v1513, %v1520
        %v1523 = vmul.f32 %v1514, %v1520
        %v1524 = vmul.f32 %v1515, %v1520
        %v1526 = vlaneseq
        %v1527 = vshrl.u32 %v1526, 7
        %v1528 = vsub.s32 0, %v1527
        %v1529 = vrot.slane %v1476, %v1528
        %v1531 = vadd.f32 %v1522, %v1529
        %v1532 = vadd.f32 %v1523, %v1529
        %v1533 = vadd.f32 %v1524, %v1529
        %s1534 = scalar_lea.vmem %s5, 32
        %v1535 = vld [vmem:[%s1534] sm:$0xff]
        %v1536 = vld [vmem:[%s1534 + $0x8] sm:$0xff]
        %v1537 = vld [vmem:[%s1534 + $0x10] sm:$0xff]
        %v1538 = vld [vmem:[%s1534 + $0x18] sm:$0xff]
        %v1539 = vpack.c.bf16 %v1532, %v1531
        %v1540 = vpack.c.bf16 %v1533, %v1533
        %v1541 = vpack.c.bf16 %v1536, %v1535
        %v1542 = vpack.c.bf16 %v1538, %v1537
        %s1543 = scalar_lea.vmem %s6, 1
        %v1544 = vld [vmem:[%s1543] sm:$0x1]
        %v1546 = vlaneseq
        %v1547 = vshrl.u32 %v1546, 7
        %v1548 = vsub.s32 0, %v1547
        %v1549 = vrot.slane %v1544, %v1548
        %v1552 = vsel %vm675, %v1539, 0
        %v1555 = vsel %vm675, %v1540, 0
        %1557 = vmatprep.subr.bf16.mxu0 0
        %1558 = vmatpush1.bf16.msra.mxu0 %v1541
        %1559 = vmatprep.subr.bf16.mxu0 0
        %1560 = vmatpush1.bf16.msra.mxu0 %v1542
        %1561 = vmatprep.subr.bf16.mxu0 0
        %1562 = vmatpush1.bf16.msra.mxu0 0
        %1563 = vmatprep.subr.bf16.mxu0 0
        %1564 = vmatpush1.bf16.msra.mxu0 0
        %1565 = vmatprep.subr.bf16.mxu0 0
        %1566 = vmatpush1.bf16.msra.mxu0 0
        %1567 = vmatprep.subr.bf16.mxu0 0
        %1568 = vmatpush1.bf16.msra.mxu0 0
        %1569 = vmatprep.subr.bf16.mxu0 0
        %1570 = vmatpush1.bf16.msra.mxu0 0
        %1571 = vmatprep.subr.bf16.mxu0 0
        %1572 = vmatpush1.bf16.msra.mxu0 0
        %1573 = vmatprep.subr.bf16.mxu0 0
        %1574 = vmatpush1.bf16.msra.mxu0 0
        %1575 = vmatprep.subr.bf16.mxu0 0
        %1576 = vmatpush1.bf16.msra.mxu0 0
        %1577 = vmatprep.subr.bf16.mxu0 0
        %1578 = vmatpush1.bf16.msra.mxu0 0
        %1579 = vmatprep.subr.bf16.mxu0 0
        %1580 = vmatpush1.bf16.msra.mxu0 0
        %1581 = vmatprep.subr.bf16.mxu0 0
        %1582 = vmatpush1.bf16.msra.mxu0 0
        %1583 = vmatprep.subr.bf16.mxu0 0
        %1584 = vmatpush1.bf16.msra.mxu0 0
        %1585 = vmatprep.subr.bf16.mxu0 0
        %1586 = vmatpush1.bf16.msra.mxu0 0
        %1587 = vmatprep.subr.bf16.mxu0 0
        %1588 = vmatpush1.bf16.msra.mxu0 0
        %1589 = vmatprep.mubr.bf16.mxu0 0
        %1590 = vmatmul.mubr.bf16.gmra.mrb[0].mxu0 %v1552
        %v1591 = vpop.f32.mrb[0].mxu0
        %v1592 = vadd.f32 %v1549, %v1591
        %v1593 = vpop.f32.mrb[0].mxu0
        %v1594 = vpop.f32.mrb[0].mxu0
        %v1595 = vadd.f32 %v1549, %v1594
        %v1596 = vpop.f32.mrb[0].mxu0
        %1597 = vmatprep.mubr.bf16.mxu0 0
        %1598 = vmatmul.mubr.bf16.gmra.mrb[0].mxu0 %v1555
        %v1599 = vpop.f32.mrb[0].mxu0
        %v1600 = vadd.f32 %v1549, %v1599
        %v1601 = vpop.f32.mrb[0].mxu0
        %v1602 = vpop.f32.mrb[0].mxu0
        %v1603 = vpop.f32.mrb[0].mxu0
        %1604 = vdwg.mxu0
        %v1605 = vpack.c.bf16 %v1595, %v1592
        %v1606 = vpack.c.bf16 %v1600, %v1600
        %1609 = vrot.lane.b32.xlu0 %v1605, 96
        %v1610 = vpop.permute.xlu0 %1609
        %1611 = vrot.lane.b32.xlu0 %v1606, 96
        %v1612 = vpop.permute.xlu0 %1611
        %v1614 = vsel %vm812, %v1605, 0
        %v1617 = vsel %vm812, %v1606, 0
        %v1620 = vsel %vm812, %v1610, 0
        %v1623 = vsel %vm812, %v1612, 0
        %1625 = vmatprep.subr.bf16.mxu0 0
        %1626 = vmatpush1.bf16.xpose.msra.mxu0 %v1620
        %1627 = vmatprep.subr.bf16.mxu0 0
        %1628 = vmatpush1.bf16.xpose.msra.mxu0 %v1623
        %1629 = vmatprep.subr.bf16.mxu0 0
        %1630 = vmatpush1.bf16.xpose.msra.mxu0 0
        %1631 = vmatprep.subr.bf16.mxu0 0
        %1632 = vmatpush1.bf16.xpose.msra.mxu0 0
        %1633 = vmatprep.subr.bf16.mxu0 0
        %1634 = vmatpush1.bf16.xpose.msra.mxu0 0
        %1635 = vmatprep.subr.bf16.mxu0 0
        %1636 = vmatpush1.bf16.xpose.msra.mxu0 0
        %1637 = vmatprep.subr.bf16.mxu0 0
        %1638 = vmatpush1.bf16.xpose.msra.mxu0 0
        %1639 = vmatprep.subr.bf16.mxu0 0
        %1640 = vmatpush1.bf16.xpose.msra.mxu0 0
        %1641 = vmatprep.subr.bf16.mxu0 0
        %1642 = vmatpush1.bf16.xpose.msra.mxu0 0
        %1643 = vmatprep.subr.bf16.mxu0 0
        %1644 = vmatpush1.bf16.xpose.msra.mxu0 0
        %1645 = vmatprep.subr.bf16.mxu0 0
        %1646 = vmatpush1.bf16.xpose.msra.mxu0 0
        %1647 = vmatprep.subr.bf16.mxu0 0
        %1648 = vmatpush1.bf16.xpose.msra.mxu0 0
        %1649 = vmatprep.subr.bf16.mxu0 0
        %1650 = vmatpush1.bf16.xpose.msra.mxu0 0
        %1651 = vmatprep.subr.bf16.mxu0 0
        %1652 = vmatpush1.bf16.xpose.msra.mxu0 0
        %1653 = vmatprep.subr.bf16.mxu0 0
        %1654 = vmatpush1.bf16.xpose.msra.mxu0 0
        %1655 = vmatprep.subr.bf16.mxu0 0
        %1656 = vmatpush1.bf16.xpose.msra.mxu0 0
        %1657 = vmatprep.mubr.bf16.mxu0 0
        %1658 = vmatmul.mubr.bf16.gmra.mrb[0].mxu0 %v1614
        %v1659 = vpop.f32.mrb[0].mxu0
        %v1660 = vadd.f32 0.0, %v1659
        %v1661 = vpop.f32.mrb[0].mxu0
        %v1662 = vpop.f32.mrb[0].mxu0
        %v1663 = vadd.f32 0.0, %v1662
        %v1664 = vpop.f32.mrb[0].mxu0
        %1665 = vmatprep.mubr.bf16.mxu0 0
        %1666 = vmatmul.mubr.bf16.gmra.mrb[0].mxu0 %v1617
        %v1667 = vpop.f32.mrb[0].mxu0
        %v1668 = vadd.f32 0.0, %v1667
        %v1669 = vpop.f32.mrb[0].mxu0
        %v1670 = vpop.f32.mrb[0].mxu0
        %v1671 = vpop.f32.mrb[0].mxu0
        %1672 = vdwg.mxu0
        %v1673 = vmul.f32 %v1660, 0.25
        %v1674 = vmul.f32 %v1663, 0.25
        %v1675 = vmul.f32 %v1668, 0.25
        %v1676 = vsel %vm876, %v1673, -inf
        %1677 = vmax.xlane.f32.xlu0 %v1676
        %v1678 = vpop.xlane.xlu0 %1677
        %v1679 = vsel %vm876, %v1674, -inf
        %1680 = vmax.xlane.f32.xlu0 %v1679
        %v1681 = vpop.xlane.xlu0 %1680
        %v1682 = vsel %vm883, %v1675, -inf
        %1683 = vmax.xlane.f32.xlu0 %v1682
        %v1684 = vpop.xlane.xlu0 %1683
        %v1685 = vsub.f32 %v1673, %v1678
        %v1686 = vsub.f32 %v1674, %v1681
        %v1687 = vsub.f32 %v1675, %v1684
        %v1688 = vmul.f32 %v1685, 1.442695
        %v1689 = vpow.pop %v1688
        %v1690 = vmul.f32 %v1686, 1.442695
        %v1691 = vpow.pop %v1690
        %v1692 = vmul.f32 %v1687, 1.442695
        %v1693 = vpow.pop %v1692
        %v1694 = vsel %vm876, %v1689, 0.0
        %1695 = vadd.xlane.f32.xlu0 %v1694
        %v1696 = vpop.xlane.xlu0 %1695
        %v1697 = vsel %vm876, %v1691, 0.0
        %1698 = vadd.xlane.f32.xlu0 %v1697
        %v1699 = vpop.xlane.xlu0 %1698
        %v1700 = vsel %vm883, %v1693, 0.0
        %1701 = vadd.xlane.f32.xlu0 %v1700
        %v1702 = vpop.xlane.xlu0 %1701
        %v1703 = vrcp.pop %v1696
        %v1704 = vrcp.pop %v1699
        %v1705 = vrcp.pop %v1702
        %v1706 = vmul.f32 %v1689, %v1703
        %v1707 = vmul.f32 %v1691, %v1704
        %v1708 = vmul.f32 %v1693, %v1705
        %v1709 = vpack.c.bf16 %v1707, %v1706
        %v1710 = vpack.c.bf16 %v1708, %v1708
        %1711 = vrot.lane.b32.xlu0 %v1605, 64
        %v1712 = vpop.permute.xlu0 %1711
        %1713 = vrot.lane.b32.xlu0 %v1606, 64
        %v1714 = vpop.permute.xlu0 %1713
        %v1717 = vsel %vm876, %v1709, 0
        %v1720 = vsel %vm876, %v1710, 0
        %v1723 = vand.u32 %v1714, %v926
        %1725 = vmatprep.subr.bf16.mxu0 0
        %1726 = vmatpush1.bf16.msra.mxu0 %v1712
        %1727 = vmatprep.subr.bf16.mxu0 0
        %1728 = vmatpush1.bf16.msra.mxu0 %v1723
        %1729 = vmatprep.subr.bf16.mxu0 0
        %1730 = vmatpush1.bf16.msra.mxu0 0
        %1731 = vmatprep.subr.bf16.mxu0 0
        %1732 = vmatpush1.bf16.msra.mxu0 0
        %1733 = vmatprep.subr.bf16.mxu0 0
        %1734 = vmatpush1.bf16.msra.mxu0 0
        %1735 = vmatprep.subr.bf16.mxu0 0
        %1736 = vmatpush1.bf16.msra.mxu0 0
        %1737 = vmatprep.subr.bf16.mxu0 0
        %1738 = vmatpush1.bf16.msra.mxu0 0
        %1739 = vmatprep.subr.bf16.mxu0 0
        %1740 = vmatpush1.bf16.msra.mxu0 0
        %1741 = vmatprep.subr.bf16.mxu0 0
        %1742 = vmatpush1.bf16.msra.mxu0 0
        %1743 = vmatprep.subr.bf16.mxu0 0
        %1744 = vmatpush1.bf16.msra.mxu0 0
        %1745 = vmatprep.subr.bf16.mxu0 0
        %1746 = vmatpush1.bf16.msra.mxu0 0
        %1747 = vmatprep.subr.bf16.mxu0 0
        %1748 = vmatpush1.bf16.msra.mxu0 0
        %1749 = vmatprep.subr.bf16.mxu0 0
        %1750 = vmatpush1.bf16.msra.mxu0 0
        %1751 = vmatprep.subr.bf16.mxu0 0
        %1752 = vmatpush1.bf16.msra.mxu0 0
        %1753 = vmatprep.subr.bf16.mxu0 0
        %1754 = vmatpush1.bf16.msra.mxu0 0
        %1755 = vmatprep.subr.bf16.mxu0 0
        %1756 = vmatpush1.bf16.msra.mxu0 0
        %1757 = vmatprep.mubr.bf16.mxu0 0
        %1758 = vmatmul.mubr.bf16.gmra.mrb[0].mxu0 %v1717
        %v1759 = vpop.f32.mrb[0].mxu0
        %v1760 = vadd.f32 0.0, %v1759
        %v1761 = vpop.f32.mrb[0].mxu0
        %v1762 = vpop.f32.mrb[0].mxu0
        %v1763 = vadd.f32 0.0, %v1762
        %v1764 = vpop.f32.mrb[0].mxu0
        %1765 = vmatprep.mubr.bf16.mxu0 0
        %1766 = vmatmul.mubr.bf16.gmra.mrb[0].mxu0 %v1720
        %v1767 = vpop.f32.mrb[0].mxu0
        %v1768 = vadd.f32 0.0, %v1767
        %v1769 = vpop.f32.mrb[0].mxu0
        %v1770 = vpop.f32.mrb[0].mxu0
        %v1771 = vpop.f32.mrb[0].mxu0
        %1772 = vdwg.mxu0
        %1773 = vrot.lane.b32.xlu0 %v1605, 112
        %v1774 = vpop.permute.xlu0 %1773
        %1775 = vrot.lane.b32.xlu0 %v1606, 112
        %v1776 = vpop.permute.xlu0 %1775
        %1777 = vrot.lane.b32.xlu0 %v1605, 80
        %v1778 = vpop.permute.xlu0 %1777
        %1779 = vrot.lane.b32.xlu0 %v1606, 80
        %v1780 = vpop.permute.xlu0 %1779
        %v1782 = vsel %vm812, %v1774, 0
        %v1785 = vsel %vm812, %v1776, 0
        %v1788 = vsel %vm812, %v1778, 0
        %v1791 = vsel %vm812, %v1780, 0
        %1793 = vmatprep.subr.bf16.mxu0 0
        %1794 = vmatpush1.bf16.xpose.msra.mxu0 %v1788
        %1795 = vmatprep.subr.bf16.mxu0 0
        %1796 = vmatpush1.bf16.xpose.msra.mxu0 %v1791
        %1797 = vmatprep.subr.bf16.mxu0 0
        %1798 = vmatpush1.bf16.xpose.msra.mxu0 0
        %1799 = vmatprep.subr.bf16.mxu0 0
        %1800 = vmatpush1.bf16.xpose.msra.mxu0 0
        %1801 = vmatprep.subr.bf16.mxu0 0
        %1802 = vmatpush1.bf16.xpose.msra.mxu0 0
        %1803 = vmatprep.subr.bf16.mxu0 0
        %1804 = vmatpush1.bf16.xpose.msra.mxu0 0
        %1805 = vmatprep.subr.bf16.mxu0 0
        %1806 = vmatpush1.bf16.xpose.msra.mxu0 0
        %1807 = vmatprep.subr.bf16.mxu0 0
        %1808 = vmatpush1.bf16.xpose.msra.mxu0 0
        %1809 = vmatprep.subr.bf16.mxu0 0
        %1810 = vmatpush1.bf16.xpose.msra.mxu0 0
        %1811 = vmatprep.subr.bf16.mxu0 0
        %1812 = vmatpush1.bf16.xpose.msra.mxu0 0
        %1813 = vmatprep.subr.bf16.mxu0 0
        %1814 = vmatpush1.bf16.xpose.msra.mxu0 0
        %1815 = vmatprep.subr.bf16.mxu0 0
        %1816 = vmatpush1.bf16.xpose.msra.mxu0 0
        %1817 = vmatprep.subr.bf16.mxu0 0
        %1818 = vmatpush1.bf16.xpose.msra.mxu0 0
        %1819 = vmatprep.subr.bf16.mxu0 0
        %1820 = vmatpush1.bf16.xpose.msra.mxu0 0
        %1821 = vmatprep.subr.bf16.mxu0 0
        %1822 = vmatpush1.bf16.xpose.msra.mxu0 0
        %1823 = vmatprep.subr.bf16.mxu0 0
        %1824 = vmatpush1.bf16.xpose.msra.mxu0 0
        %1825 = vmatprep.mubr.bf16.mxu0 0
        %1826 = vmatmul.mubr.bf16.gmra.mrb[0].mxu0 %v1782
        %v1827 = vpop.f32.mrb[0].mxu0
        %v1828 = vadd.f32 0.0, %v1827
        %v1829 = vpop.f32.mrb[0].mxu0
        %v1830 = vpop.f32.mrb[0].mxu0
        %v1831 = vadd.f32 0.0, %v1830
        %v1832 = vpop.f32.mrb[0].mxu0
        %1833 = vmatprep.mubr.bf16.mxu0 0
        %1834 = vmatmul.mubr.bf16.gmra.mrb[0].mxu0 %v1785
        %v1835 = vpop.f32.mrb[0].mxu0
        %v1836 = vadd.f32 0.0, %v1835
        %v1837 = vpop.f32.mrb[0].mxu0
        %v1838 = vpop.f32.mrb[0].mxu0
        %v1839 = vpop.f32.mrb[0].mxu0
        %1840 = vdwg.mxu0
        %v1841 = vmul.f32 %v1828, 0.25
        %v1842 = vmul.f32 %v1831, 0.25
        %v1843 = vmul.f32 %v1836, 0.25
        %v1844 = vsel %vm876, %v1841, -inf
        %1845 = vmax.xlane.f32.xlu0 %v1844
        %v1846 = vpop.xlane.xlu0 %1845
        %v1847 = vsel %vm876, %v1842, -inf
        %1848 = vmax.xlane.f32.xlu0 %v1847
        %v1849 = vpop.xlane.xlu0 %1848
        %v1850 = vsel %vm883, %v1843, -inf
        %1851 = vmax.xlane.f32.xlu0 %v1850
        %v1852 = vpop.xlane.xlu0 %1851
        %v1853 = vsub.f32 %v1841, %v1846
        %v1854 = vsub.f32 %v1842, %v1849
        %v1855 = vsub.f32 %v1843, %v1852
        %v1856 = vmul.f32 %v1853, 1.442695
        %v1857 = vpow.pop %v1856
        %v1858 = vmul.f32 %v1854, 1.442695
        %v1859 = vpow.pop %v1858
        %v1860 = vmul.f32 %v1855, 1.442695
        %v1861 = vpow.pop %v1860
        %v1862 = vsel %vm876, %v1857, 0.0
        %1863 = vadd.xlane.f32.xlu0 %v1862
        %v1864 = vpop.xlane.xlu0 %1863
        %v1865 = vsel %vm876, %v1859, 0.0
        %1866 = vadd.xlane.f32.xlu0 %v1865
        %v1867 = vpop.xlane.xlu0 %1866
        %v1868 = vsel %vm883, %v1861, 0.0
        %1869 = vadd.xlane.f32.xlu0 %v1868
        %v1870 = vpop.xlane.xlu0 %1869
        %v1871 = vrcp.pop %v1864
        %v1872 = vrcp.pop %v1867
        %v1873 = vrcp.pop %v1870
        %v1874 = vmul.f32 %v1857, %v1871
        %v1875 = vmul.f32 %v1859, %v1872
        %v1876 = vmul.f32 %v1861, %v1873
        %v1877 = vpack.c.bf16 %v1875, %v1874
        %v1878 = vpack.c.bf16 %v1876, %v1876
        %1879 = vrot.lane.b32.xlu0 %v1605, 48
        %v1880 = vpop.permute.xlu0 %1879
        %1881 = vrot.lane.b32.xlu0 %v1606, 48
        %v1882 = vpop.permute.xlu0 %1881
        %v1885 = vsel %vm876, %v1877, 0
        %v1888 = vsel %vm876, %v1878, 0
        %v1891 = vand.u32 %v1882, %v926
        %1893 = vmatprep.subr.bf16.mxu0 0
        %1894 = vmatpush1.bf16.msra.mxu0 %v1880
        %1895 = vmatprep.subr.bf16.mxu0 0
        %1896 = vmatpush1.bf16.msra.mxu0 %v1891
        %1897 = vmatprep.subr.bf16.mxu0 0
        %1898 = vmatpush1.bf16.msra.mxu0 0
        %1899 = vmatprep.subr.bf16.mxu0 0
        %1900 = vmatpush1.bf16.msra.mxu0 0
        %1901 = vmatprep.subr.bf16.mxu0 0
        %1902 = vmatpush1.bf16.msra.mxu0 0
        %1903 = vmatprep.subr.bf16.mxu0 0
        %1904 = vmatpush1.bf16.msra.mxu0 0
        %1905 = vmatprep.subr.bf16.mxu0 0
        %1906 = vmatpush1.bf16.msra.mxu0 0
        %1907 = vmatprep.subr.bf16.mxu0 0
        %1908 = vmatpush1.bf16.msra.mxu0 0
        %1909 = vmatprep.subr.bf16.mxu0 0
        %1910 = vmatpush1.bf16.msra.mxu0 0
        %1911 = vmatprep.subr.bf16.mxu0 0
        %1912 = vmatpush1.bf16.msra.mxu0 0
        %1913 = vmatprep.subr.bf16.mxu0 0
        %1914 = vmatpush1.bf16.msra.mxu0 0
        %1915 = vmatprep.subr.bf16.mxu0 0
        %1916 = vmatpush1.bf16.msra.mxu0 0
        %1917 = vmatprep.subr.bf16.mxu0 0
        %1918 = vmatpush1.bf16.msra.mxu0 0
        %1919 = vmatprep.subr.bf16.mxu0 0
        %1920 = vmatpush1.bf16.msra.mxu0 0
        %1921 = vmatprep.subr.bf16.mxu0 0
        %1922 = vmatpush1.bf16.msra.mxu0 0
        %1923 = vmatprep.subr.bf16.mxu0 0
        %1924 = vmatpush1.bf16.msra.mxu0 0
        %1925 = vmatprep.mubr.bf16.mxu0 0
        %1926 = vmatmul.mubr.bf16.gmra.mrb[0].mxu0 %v1885
        %v1927 = vpop.f32.mrb[0].mxu0
        %v1928 = vadd.f32 0.0, %v1927
        %v1929 = vpop.f32.mrb[0].mxu0
        %v1930 = vpop.f32.mrb[0].mxu0
        %v1931 = vadd.f32 0.0, %v1930
        %v1932 = vpop.f32.mrb[0].mxu0
        %1933 = vmatprep.mubr.bf16.mxu0 0
        %1934 = vmatmul.mubr.bf16.gmra.mrb[0].mxu0 %v1888
        %v1935 = vpop.f32.mrb[0].mxu0
        %v1936 = vadd.f32 0.0, %v1935
        %v1937 = vpop.f32.mrb[0].mxu0
        %v1938 = vpop.f32.mrb[0].mxu0
        %v1939 = vpop.f32.mrb[0].mxu0
        %1940 = vdwg.mxu0
        %1944 = vrot.lane.b32.xlu0 %v1928, 16
        %v1945 = vpop.permute.xlu0 %1944
        %1946 = vrot.lane.b32.xlu0 %v1931, 16
        %v1947 = vpop.permute.xlu0 %1946
        %1948 = vrot.lane.b32.xlu0 %v1936, 16
        %v1949 = vpop.permute.xlu0 %1948
        %v1953 = vsel %vm812, %v1760, %v1945
        %v1954 = vsel %vm812, %v1763, %v1947
        %v1955 = vsel %vm812, %v1768, %v1949
        %s1956 = scalar_lea.vmem %s7, 32
        %v1957 = vld [vmem:[%s1956] sm:$0xff]
        %v1958 = vld [vmem:[%s1956 + $0x8] sm:$0xff]
        %v1959 = vld [vmem:[%s1956 + $0x10] sm:$0xff]
        %v1960 = vld [vmem:[%s1956 + $0x18] sm:$0xff]
        %v1961 = vpack.c.bf16 %v1954, %v1953
        %v1962 = vpack.c.bf16 %v1955, %v1955
        %v1963 = vpack.c.bf16 %v1958, %v1957
        %v1964 = vpack.c.bf16 %v1960, %v1959
        %v1966 = vsel %vm675, %v1961, 0
        %v1969 = vsel %vm675, %v1962, 0
        %1971 = vmatprep.subr.bf16.mxu0 0
        %1972 = vmatpush1.bf16.msra.mxu0 %v1963
        %1973 = vmatprep.subr.bf16.mxu0 0
        %1974 = vmatpush1.bf16.msra.mxu0 %v1964
        %1975 = vmatprep.subr.bf16.mxu0 0
        %1976 = vmatpush1.bf16.msra.mxu0 0
        %1977 = vmatprep.subr.bf16.mxu0 0
        %1978 = vmatpush1.bf16.msra.mxu0 0
        %1979 = vmatprep.subr.bf16.mxu0 0
        %1980 = vmatpush1.bf16.msra.mxu0 0
        %1981 = vmatprep.subr.bf16.mxu0 0
        %1982 = vmatpush1.bf16.msra.mxu0 0
        %1983 = vmatprep.subr.bf16.mxu0 0
        %1984 = vmatpush1.bf16.msra.mxu0 0
        %1985 = vmatprep.subr.bf16.mxu0 0
        %1986 = vmatpush1.bf16.msra.mxu0 0
        %1987 = vmatprep.subr.bf16.mxu0 0
        %1988 = vmatpush1.bf16.msra.mxu0 0
        %1989 = vmatprep.subr.bf16.mxu0 0
        %1990 = vmatpush1.bf16.msra.mxu0 0
        %1991 = vmatprep.subr.bf16.mxu0 0
        %1992 = vmatpush1.bf16.msra.mxu0 0
        %1993 = vmatprep.subr.bf16.mxu0 0
        %1994 = vmatpush1.bf16.msra.mxu0 0
        %1995 = vmatprep.subr.bf16.mxu0 0
        %1996 = vmatpush1.bf16.msra.mxu0 0
        %1997 = vmatprep.subr.bf16.mxu0 0
        %1998 = vmatpush1.bf16.msra.mxu0 0
        %1999 = vmatprep.subr.bf16.mxu0 0
        %2000 = vmatpush1.bf16.msra.mxu0 0
        %2001 = vmatprep.subr.bf16.mxu0 0
        %2002 = vmatpush1.bf16.msra.mxu0 0
        %2003 = vmatprep.mubr.bf16.mxu0 0
        %2004 = vmatmul.mubr.bf16.gmra.mrb[0].mxu0 %v1966
        %v2005 = vpop.f32.mrb[0].mxu0
        %v2006 = vadd.f32 0.0, %v2005
        %v2007 = vpop.f32.mrb[0].mxu0
        %v2008 = vpop.f32.mrb[0].mxu0
        %v2009 = vadd.f32 0.0, %v2008
        %v2010 = vpop.f32.mrb[0].mxu0
        %2011 = vmatprep.mubr.bf16.mxu0 0
        %2012 = vmatmul.mubr.bf16.gmra.mrb[0].mxu0 %v1969
        %v2013 = vpop.f32.mrb[0].mxu0
        %v2014 = vadd.f32 0.0, %v2013
        %v2015 = vpop.f32.mrb[0].mxu0
        %v2016 = vpop.f32.mrb[0].mxu0
        %v2017 = vpop.f32.mrb[0].mxu0
        %2018 = vdwg.mxu0
        %v2019 = vadd.f32 %v1470, %v2006
        %v2020 = vadd.f32 %v1471, %v2009
        %v2021 = vadd.f32 %v1472, %v2014
        %s2022 = scalar_lea.vmem %s8, 1
        %v2023 = vld [vmem:[%s2022] sm:$0x1]
        %v2025 = vlaneseq
        %v2026 = vshrl.u32 %v2025, 7
        %v2027 = vsub.s32 0, %v2026
        %v2028 = vrot.slane %v2023, %v2027
        %v2030 = vadd.f32 %v2019, %v2028
        %v2031 = vadd.f32 %v2020, %v2028
        %v2032 = vadd.f32 %v2021, %v2028
        %s2033 = scalar_lea.vmem %s9, 1
        %v2034 = vld [vmem:[%s2033] sm:$0x1]
        %s2035 = scalar_lea.vmem %s10, 1
        %v2036 = vld [vmem:[%s2035] sm:$0x1]
        %v2037 = vsel %vm675, %v2030, 0.0
        %2038 = vadd.xlane.f32.xlu0 %v2037
        %v2039 = vpop.xlane.xlu0 %2038
        %v2040 = vsel %vm675, %v2031, 0.0
        %2041 = vadd.xlane.f32.xlu0 %v2040
        %v2042 = vpop.xlane.xlu0 %2041
        %v2043 = vsel %vm682, %v2032, 0.0
        %2044 = vadd.xlane.f32.xlu0 %v2043
        %v2045 = vpop.xlane.xlu0 %2044
        %v2046 = vmul.f32 %v2039, %v686
        %v2047 = vmul.f32 %v2042, %v686
        %v2048 = vmul.f32 %v2045, %v686
        %v2049 = vsub.f32 %v2030, %v2046
        %v2050 = vsub.f32 %v2031, %v2047
        %v2051 = vsub.f32 %v2032, %v2048
        %v2052 = vmul.f32 %v2049, %v2049
        %v2053 = vmul.f32 %v2050, %v2050
        %v2054 = vmul.f32 %v2051, %v2051
        %v2055 = vsel %vm675, %v2052, 0.0
        %2056 = vadd.xlane.f32.xlu0 %v2055
        %v2057 = vpop.xlane.xlu0 %2056
        %v2058 = vsel %vm675, %v2053, 0.0
        %2059 = vadd.xlane.f32.xlu0 %v2058
        %v2060 = vpop.xlane.xlu0 %2059
        %v2061 = vsel %vm682, %v2054, 0.0
        %2062 = vadd.xlane.f32.xlu0 %v2061
        %v2063 = vpop.xlane.xlu0 %2062
        %v2064 = vmul.f32 %v2057, %v686
        %v2065 = vmul.f32 %v2060, %v686
        %v2066 = vmul.f32 %v2063, %v686
        %v2067 = vadd.f32 %v2064, 1e-12
        %v2068 = vadd.f32 %v2065, 1e-12
        %v2069 = vadd.f32 %v2066, 1e-12
        %v2070 = vrsqrt.pop %v2067
        %v2071 = vrsqrt.pop %v2068
        %v2072 = vrsqrt.pop %v2069
        %v2073 = vmul.f32 %v2049, %v2070
        %v2074 = vmul.f32 %v2050, %v2071
        %v2075 = vmul.f32 %v2051, %v2072
        %v2077 = vlaneseq
        %v2078 = vshrl.u32 %v2077, 7
        %v2079 = vsub.s32 0, %v2078
        %v2080 = vrot.slane %v2034, %v2079
        %v2082 = vmul.f32 %v2073, %v2080
        %v2083 = vmul.f32 %v2074, %v2080
        %v2084 = vmul.f32 %v2075, %v2080
        %v2086 = vlaneseq
        %v2087 = vshrl.u32 %v2086, 7
        %v2088 = vsub.s32 0, %v2087
        %v2089 = vrot.slane %v2036, %v2088
        %v2091 = vadd.f32 %v2082, %v2089
        %v2092 = vadd.f32 %v2083, %v2089
        %v2093 = vadd.f32 %v2084, %v2089
        %s2094 = scalar_lea.vmem %s11, 32
        %v2095 = vld [vmem:[%s2094] sm:$0xff]
        %v2096 = vld [vmem:[%s2094 + $0x8] sm:$0xff]
        %v2097 = vld [vmem:[%s2094 + $0x10] sm:$0xff]
        %v2098 = vld [vmem:[%s2094 + $0x18] sm:$0xff]
        %v2099 = vpack.c.bf16 %v2092, %v2091
        %v2100 = vpack.c.bf16 %v2093, %v2093
        %v2101 = vpack.c.bf16 %v2096, %v2095
        %v2102 = vpack.c.bf16 %v2098, %v2097
        %s2103 = scalar_lea.vmem %s12, 1
        %v2104 = vld [vmem:[%s2103] sm:$0x1]
        %v2106 = vlaneseq
        %v2107 = vshrl.u32 %v2106, 7
        %v2108 = vsub.s32 0, %v2107
        %v2109 = vrot.slane %v2104, %v2108
        %v2112 = vsel %vm675, %v2099, 0
        %v2115 = vsel %vm675, %v2100, 0
        %2117 = vmatprep.subr.bf16.mxu0 0
        %2118 = vmatpush1.bf16.msra.mxu0 %v2101
        %2119 = vmatprep.subr.bf16.mxu0 0
        %2120 = vmatpush1.bf16.msra.mxu0 %v2102
        %2121 = vmatprep.subr.bf16.mxu0 0
        %2122 = vmatpush1.bf16.msra.mxu0 0
        %2123 = vmatprep.subr.bf16.mxu0 0
        %2124 = vmatpush1.bf16.msra.mxu0 0
        %2125 = vmatprep.subr.bf16.mxu0 0
        %2126 = vmatpush1.bf16.msra.mxu0 0
        %2127 = vmatprep.subr.bf16.mxu0 0
        %2128 = vmatpush1.bf16.msra.mxu0 0
        %2129 = vmatprep.subr.bf16.mxu0 0
        %2130 = vmatpush1.bf16.msra.mxu0 0
        %2131 = vmatprep.subr.bf16.mxu0 0
        %2132 = vmatpush1.bf16.msra.mxu0 0
        %2133 = vmatprep.subr.bf16.mxu0 0
        %2134 = vmatpush1.bf16.msra.mxu0 0
        %2135 = vmatprep.subr.bf16.mxu0 0
        %2136 = vmatpush1.bf16.msra.mxu0 0
        %2137 = vmatprep.subr.bf16.mxu0 0
        %2138 = vmatpush1.bf16.msra.mxu0 0
        %2139 = vmatprep.subr.bf16.mxu0 0
        %2140 = vmatpush1.bf16.msra.mxu0 0
        %2141 = vmatprep.subr.bf16.mxu0 0
        %2142 = vmatpush1.bf16.msra.mxu0 0
        %2143 = vmatprep.subr.bf16.mxu0 0
        %2144 = vmatpush1.bf16.msra.mxu0 0
        %2145 = vmatprep.subr.bf16.mxu0 0
        %2146 = vmatpush1.bf16.msra.mxu0 0
        %2147 = vmatprep.subr.bf16.mxu0 0
        %2148 = vmatpush1.bf16.msra.mxu0 0
        %2149 = vmatprep.mubr.bf16.mxu0 0
        %2150 = vmatmul.mubr.bf16.gmra.mrb[0].mxu0 %v2112
        %v2151 = vpop.f32.mrb[0].mxu0
        %v2152 = vadd.f32 %v2109, %v2151
        %v2153 = vpop.f32.mrb[0].mxu0
        %v2154 = vpop.f32.mrb[0].mxu0
        %v2155 = vadd.f32 %v2109, %v2154
        %v2156 = vpop.f32.mrb[0].mxu0
        %2157 = vmatprep.mubr.bf16.mxu0 0
        %2158 = vmatmul.mubr.bf16.gmra.mrb[0].mxu0 %v2115
        %v2159 = vpop.f32.mrb[0].mxu0
        %v2160 = vadd.f32 %v2109, %v2159
        %v2161 = vpop.f32.mrb[0].mxu0
        %v2162 = vpop.f32.mrb[0].mxu0
        %v2163 = vpop.f32.mrb[0].mxu0
        %2164 = vdwg.mxu0
        %v2165 = vmul.f32 %v2152, %v2152
        %v2166 = vmul.f32 %v2155, %v2155
        %v2167 = vmul.f32 %v2160, %v2160
        %v2168 = vmul.f32 %v2152, %v2165
        %v2169 = vmul.f32 %v2155, %v2166
        %v2170 = vmul.f32 %v2160, %v2167
        %v2171 = vmul.f32 %v2168, 0.044715
        %v2172 = vmul.f32 %v2169, 0.044715
        %v2173 = vmul.f32 %v2170, 0.044715
        %v2174 = vadd.f32 %v2152, %v2171
        %v2175 = vadd.f32 %v2155, %v2172
        %v2176 = vadd.f32 %v2160, %v2173
        %v2177 = vmul.f32 %v2174, 0.7978846
        %v2178 = vmul.f32 %v2175, 0.7978846
        %v2179 = vmul.f32 %v2176, 0.7978846
        %v2180 = vtanh.pop %v2177
        %v2181 = vtanh.pop %v2178
        %v2182 = vtanh.pop %v2179
        %v2183 = vadd.f32 %v2180, 1.0
        %v2184 = vadd.f32 %v2181, 1.0
        %v2185 = vadd.f32 %v2182, 1.0
        %v2186 = vmul.f32 %v2183, 0.5
        %v2187 = vmul.f32 %v2184, 0.5
        %v2188 = vmul.f32 %v2185, 0.5
        %v2189 = vmul.f32 %v2152, %v2186
        %v2190 = vmul.f32 %v2155, %v2187
        %v2191 = vmul.f32 %v2160, %v2188
        %s2192 = scalar_lea.vmem %s13, 64
        %v2193 = vld [vmem:[%s2192] sm:$0xff]
        %v2194 = vld [vmem:[%s2192 + $0x8] sm:$0xff]
        %v2195 = vld [vmem:[%s2192 + $0x10] sm:$0xff]
        %v2196 = vld [vmem:[%s2192 + $0x18] sm:$0xff]
        %v2197 = vld [vmem:[%s2192 + $0x20] sm:$0xff]
        %v2198 = vld [vmem:[%s2192 + $0x28] sm:$0xff]
        %v2199 = vld [vmem:[%s2192 + $0x30] sm:$0xff]
        %v2200 = vld [vmem:[%s2192 + $0x38] sm:$0xff]
        %v2201 = vpack.c.bf16 %v2190, %v2189
        %v2202 = vpack.c.bf16 %v2191, %v2191
        %v2203 = vpack.c.bf16 %v2194, %v2193
        %v2204 = vpack.c.bf16 %v2196, %v2195
        %v2205 = vpack.c.bf16 %v2198, %v2197
        %v2206 = vpack.c.bf16 %v2200, %v2199
        %v2208 = vsel %vm1405, %v2201, 0
        %v2211 = vsel %vm1405, %v2202, 0
        %2213 = vmatprep.subr.bf16.mxu0 0
        %2214 = vmatpush1.bf16.msra.mxu0 %v2203
        %2215 = vmatprep.subr.bf16.mxu0 0
        %2216 = vmatpush1.bf16.msra.mxu0 %v2204
        %2217 = vmatprep.subr.bf16.mxu0 0
        %2218 = vmatpush1.bf16.msra.mxu0 %v2205
        %2219 = vmatprep.subr.bf16.mxu0 0
        %2220 = vmatpush1.bf16.msra.mxu0 %v2206
        %2221 = vmatprep.subr.bf16.mxu0 0
        %2222 = vmatpush1.bf16.msra.mxu0 0
        %2223 = vmatprep.subr.bf16.mxu0 0
        %2224 = vmatpush1.bf16.msra.mxu0 0
        %2225 = vmatprep.subr.bf16.mxu0 0
        %2226 = vmatpush1.bf16.msra.mxu0 0
        %2227 = vmatprep.subr.bf16.mxu0 0
        %2228 = vmatpush1.bf16.msra.mxu0 0
        %2229 = vmatprep.subr.bf16.mxu0 0
        %2230 = vmatpush1.bf16.msra.mxu0 0
        %2231 = vmatprep.subr.bf16.mxu0 0
        %2232 = vmatpush1.bf16.msra.mxu0 0
        %2233 = vmatprep.subr.bf16.mxu0 0
        %2234 = vmatpush1.bf16.msra.mxu0 0
        %2235 = vmatprep.subr.bf16.mxu0 0
        %2236 = vmatpush1.bf16.msra.mxu0 0
        %2237 = vmatprep.subr.bf16.mxu0 0
        %2238 = vmatpush1.bf16.msra.mxu0 0
        %2239 = vmatprep.subr.bf16.mxu0 0
        %2240 = vmatpush1.bf16.msra.mxu0 0
        %2241 = vmatprep.subr.bf16.mxu0 0
        %2242 = vmatpush1.bf16.msra.mxu0 0
        %2243 = vmatprep.subr.bf16.mxu0 0
        %2244 = vmatpush1.bf16.msra.mxu0 0
        %2245 = vmatprep.mubr.bf16.mxu0 0
        %2246 = vmatmul.mubr.bf16.gmra.mrb[0].mxu0 %v2208
        %v2247 = vpop.f32.mrb[0].mxu0
        %v2248 = vadd.f32 0.0, %v2247
        %v2249 = vpop.f32.mrb[0].mxu0
        %v2250 = vpop.f32.mrb[0].mxu0
        %v2251 = vpop.f32.mrb[0].mxu0
        %2252 = vmatprep.mubr.bf16.mxu0 0
        %2253 = vmatmul.mubr.bf16.gmra.mrb[0].mxu0 %v2211
        %v2254 = vpop.f32.mrb[0].mxu0
        %v2255 = vpop.f32.mrb[0].mxu0
        %v2256 = vpop.f32.mrb[0].mxu0
        %v2257 = vpop.f32.mrb[0].mxu0
        %2258 = vdwg.mxu0
        %v2259 = vadd.f32 %v2030, %v2248
        %s2260 = scalar_lea.vmem %s14, 1
        %v2261 = vld [vmem:[%s2260] sm:$0x1]
        %v2263 = vlaneseq
        %v2264 = vshrl.u32 %v2263, 7
        %v2265 = vsub.s32 0, %v2264
        %v2266 = vrot.slane %v2261, %v2265
        %v2268 = vadd.f32 %v2259, %v2266
        %v2269 = vld [vmem:[%s15] sm:$0x1]
        %v2270 = vld [vmem:[%s16] sm:$0x1]
        %v2271 = vsel %vm682, %v2268, 0.0
        %2272 = vadd.xlane.f32.xlu0 %v2271
        %v2273 = vpop.xlane.xlu0 %2272
        %v2274 = vmul.f32 %v2273, %v686
        %v2275 = vsub.f32 %v2268, %v2274
        %v2276 = vmul.f32 %v2275, %v2275
        %v2277 = vsel %vm682, %v2276, 0.0
        %2278 = vadd.xlane.f32.xlu0 %v2277
        %v2279 = vpop.xlane.xlu0 %2278
        %v2280 = vmul.f32 %v2279, %v686
        %v2281 = vadd.f32 %v2280, 1e-12
        %v2282 = vrsqrt.pop %v2281
        %v2283 = vmul.f32 %v2275, %v2282
        %v2284 = vmul.f32 %v2283, %v2269
        %v2285 = vadd.f32 %v2284, %v2270
        %v2286 = vld [vmem:[%s17] sm:$0xff]
        %v2287 = vld [vmem:[%s17 + $0x8] sm:$0xff]
        %v2288 = vld [vmem:[%s17 + $0x10] sm:$0xff]
        %v2289 = vld [vmem:[%s17 + $0x18] sm:$0xff]
        %v2290 = vpack.c.bf16 %v2285, %v2285
        %v2291 = vpack.c.bf16 %v2287, %v2286
        %v2292 = vpack.c.bf16 %v2289, %v2288
        %v2293 = vld [vmem:[%s18] sm:$0x1]
        %v2295 = vsel %vm675, %v2290, 0
        %2297 = vmatprep.subr.bf16.mxu0 0
        %2298 = vmatpush1.bf16.msra.mxu0 %v2291
        %2299 = vmatprep.subr.bf16.mxu0 0
        %2300 = vmatpush1.bf16.msra.mxu0 %v2292
        %2301 = vmatprep.subr.bf16.mxu0 0
        %2302 = vmatpush1.bf16.msra.mxu0 0
        %2303 = vmatprep.subr.bf16.mxu0 0
        %2304 = vmatpush1.bf16.msra.mxu0 0
        %2305 = vmatprep.subr.bf16.mxu0 0
        %2306 = vmatpush1.bf16.msra.mxu0 0
        %2307 = vmatprep.subr.bf16.mxu0 0
        %2308 = vmatpush1.bf16.msra.mxu0 0
        %2309 = vmatprep.subr.bf16.mxu0 0
        %2310 = vmatpush1.bf16.msra.mxu0 0
        %2311 = vmatprep.subr.bf16.mxu0 0
        %2312 = vmatpush1.bf16.msra.mxu0 0
        %2313 = vmatprep.subr.bf16.mxu0 0
        %2314 = vmatpush1.bf16.msra.mxu0 0
        %2315 = vmatprep.subr.bf16.mxu0 0
        %2316 = vmatpush1.bf16.msra.mxu0 0
        %2317 = vmatprep.subr.bf16.mxu0 0
        %2318 = vmatpush1.bf16.msra.mxu0 0
        %2319 = vmatprep.subr.bf16.mxu0 0
        %2320 = vmatpush1.bf16.msra.mxu0 0
        %2321 = vmatprep.subr.bf16.mxu0 0
        %2322 = vmatpush1.bf16.msra.mxu0 0
        %2323 = vmatprep.subr.bf16.mxu0 0
        %2324 = vmatpush1.bf16.msra.mxu0 0
        %2325 = vmatprep.subr.bf16.mxu0 0
        %2326 = vmatpush1.bf16.msra.mxu0 0
        %2327 = vmatprep.subr.bf16.mxu0 0
        %2328 = vmatpush1.bf16.msra.mxu0 0
        %2329 = vmatprep.mubr.bf16.mxu0 0
        %2330 = vmatmul.mubr.bf16.gmra.mrb[0].mxu0 %v2295
        %v2331 = vpop.f32.mrb[0].mxu0
        %v2332 = vadd.f32 %v2293, %v2331
        %v2333 = vpop.f32.mrb[0].mxu0
        %v2334 = vpop.f32.mrb[0].mxu0
        %v2335 = vpop.f32.mrb[0].mxu0
        %2336 = vdwg.mxu0
        %vm2337 = vcmask 24576
        %2338 = vst.msk [vmem:[%s594] sm:$0x1] %vm2337, %v2332
        %s2339 = sand.u32 %s445, 1
        %s2340 = scalar_lea.sflag [#allocation3], %s2339
        %s2341 = sand.u32 %s445, 1
        %s2342 = scalar_lea.vmem [#allocation2], %s2341
        // Predicated region
        $region97: #{vit_forward.1} parent=95 // pred_check
          %p2343 = pneg %p455
        $region98: #{vit_forward.1} parent=95 // pred_check_branch
          %2345 = sbr.rel (%p2343) target = $region100
        $region99: #{vit_forward.1} parent=95 // pred_region
          %s2347 = ssub.s32 16, 16
          %2348 = vsyncadd %s2340, %s2347
          %s2349 = smul.addr %s33, 16
          %s2350 = scalar_lea.hbm %s19, %s2349
          %s2352 = sshll.u32 %s2342, 4
          %s2353 = int_to_ptr.vmem [resolvable:$true] %s2352
          %2355 = dma.vmem_to_hbm [thread:$0]  %s2353, 16, %s2350, %s2340
        $region100: #{vit_forward.1} parent=95 // pred_fallthru
          _
      $region96: #{vit_forward.1} parent=5 // pred_fallthru
        _
      %p2356 = scmp.le.s32.totalorder 2, %s28
      // Predicated region
      $region101: #{vit_forward.1} parent=5 // pred_check
        %p2357 = pneg %p2356
      $region102: #{vit_forward.1} parent=5 // pred_check_branch
        %2359 = sbr.rel (%p2357) target = $region104
      $region103: #{vit_forward.1} parent=5 // pred_region
        %s2360 = ssub.s32 %s28, 2
        // Predicated region
        $region105: #{vit_forward.1} parent=103 // pred_check
          %p2361 = pneg %p461
        $region106: #{vit_forward.1} parent=103 // pred_check_branch
          %2363 = sbr.rel (%p2361) target = $region108
        $region107: #{vit_forward.1} parent=103 // pred_region
          %s2364 = sand.u32 %s446, 1
          %s2365 = scalar_lea.sflag [#allocation3], %s2364
          %s2366 = sand.u32 %s446, 1
          %s2367 = scalar_lea.vmem [#allocation2], %s2366
          %2368 = dma.done %s2365, 16
        $region108: #{vit_forward.1} parent=103 // pred_fallthru
          _
      $region104: #{vit_forward.1} parent=5 // pred_fallthru
        _
    $region6: #{vit_forward.1} parent=1 // loop_footer
      %s32 = sadd.s32 1, %s28
    $region7: #{vit_forward.1} parent=1 // loop_footer_branch
      %27 = sbr.rel target = $region3
    $region8: #{vit_forward.1} parent=1 // loop_exit
      _
    %2369 = vsyncpa [#allocation3], 1
    %s2370 = scalar_lea.sflag [#allocation3], 1
    %2371 = vsyncpa %s2370, 1

</llo_original>
